<compile_context>
chip_gen: v6e
topology: v6e:2x2x1
jax: 0.10.0
libtpu: 0.0.40
codegen_flags: <defaults>
</compile_context>

<pallas_src>
import functools

import jax
import jax.numpy as jnp
from jax import lax
from jax.experimental import pallas as pl
from jax.experimental.pallas import tpu as pltpu

EPS = 1e-5
_N_CORES = 2          # leading "parallel" grid axis of pass B (2 TCs on v7x)


def _round_up(x, m):
    return (x + m - 1) // m * m


def _pick_tile_and_vmem():
    """Chip-aware tile size / VMEM budget (v5e/v6e: 128 MiB, v7x: 64 MiB)."""
    try:
        vmem = pltpu.get_tpu_info().vmem_capacity_bytes
    except Exception:                       # unknown chip -> conservative
        vmem = 64 * 1024 * 1024
    if vmem >= 100 * 1024 * 1024:           # v5e / v6e (128 MiB physical)
        return 4096, 96 * 1024 * 1024
    return 2048, 48 * 1024 * 1024           # v7x (64 MiB) or unknown


# ---------------------------------------------------------------- pass B ----
def _layer12_kernel(x_ref, w1s_ref, shift1_ref, w2t_ref,
                    h2_ref, sum2_ref, sq2_ref):
    """Fused layer1 + BN1/ReLU + layer2 (channels-major), plus BN2 statistics.

    x_ref:      (Cin, tile_m)  bf16
    w1s_ref:    (512, Cin)     bf16   = (W1 * scale1)^T
    shift1_ref: (512, 1)       f32    = -mean1 * scale1
    w2t_ref:    (256, 512)     bf16   = W2^T
    h2_ref:     (256, tile_m)  bf16   pre-BN2 activations (lane-dense)
    sum2/sq2:   (256, 1)       f32    per-core grid-resident accumulators
    """
    @pl.when(pl.program_id(1) == 0)
    def _init():
        sum2_ref[...] = jnp.zeros_like(sum2_ref)
        sq2_ref[...] = jnp.zeros_like(sq2_ref)

    h1 = jnp.dot(w1s_ref[...], x_ref[...],
                 preferred_element_type=jnp.float32)          # (512, tile_m)
    h1n = jnp.maximum(h1 + shift1_ref[...], 0.0)              # BN1+ReLU folded
    h2 = jnp.dot(w2t_ref[...], h1n.astype(jnp.bfloat16),
                 preferred_element_type=jnp.float32)          # (256, tile_m)
    h2_ref[...] = h2.astype(jnp.bfloat16)

    # Statistics straight from the f32 result (no bf16 round-trip, no row
    # mask): padded (all-zero x) columns contribute a constant column that
    # the wrapper subtracts analytically.
    sum2_ref[...] += jnp.sum(h2, axis=1, keepdims=True)
    sq2_ref[...] += jnp.sum(h2 * h2, axis=1, keepdims=True)


# ---------------------------------------------------------------- pass C ----
def _layer3_kernel(h2_ref, negmean2_ref, w3s_ref, b3_ref, out_ref):
    """BN2 + ReLU + final 1x1 conv, lane-dense (1, tile_m) output.

    relu((h2-mean2)*scale2) . w3  ==  relu(h2-mean2) . (w3*scale2)   (scale2>0)
    """
    h2 = h2_ref[...].astype(jnp.float32)                      # (256, tile_m)
    a = jnp.maximum(h2 + negmean2_ref[...], 0.0)
    out_ref[...] = (jnp.sum(a * w3s_ref[...], axis=0, keepdims=True)
                    + b3_ref[0])


# --------------------------------------------------------------- wrapper ----
def sdf_decoder_forward(x_nchw, params, *, tile_m=None):
    """x_nchw: (N, C, H, W) float32. Returns (N, 1, H, W) float32."""
    n, c, h, w = x_nchw.shape
    m_true = n * h * w
    w1, w2, w3, b3 = params
    c1 = w1.shape[1]          # 512
    c2 = w2.shape[1]          # 256

    picked_tile, vmem_limit = _pick_tile_and_vmem()
    if tile_m is None:
        tile_m = picked_tile
    # Keep the two cores' column ranges roughly balanced for small M.
    tile_m = max(128, min(tile_m, _round_up(pl.cdiv(m_true, _N_CORES), 128)))
    m_pad = _round_up(m_true, _N_CORES * tile_m)
    n_tiles = m_pad // tile_m
    n_half = n_tiles // _N_CORES

    # NCHW -> channels-major (C, M).
    x_t = jnp.transpose(x_nchw, (1, 0, 2, 3)).reshape(c, m_true)

    # ---- analytic BN1 statistics (replaces the old stats-only pass A) ------
    #   mean1_c    = (colsum x) @ W1 / M
    #   E[h1^2]_c  = w1_c^T (X X^T) w1_c / M
    colsum = jnp.sum(x_t, axis=1)                                     # (Cin,)
    gram = jnp.dot(x_t, x_t.T, precision=lax.Precision.HIGHEST)       # (Cin,Cin)
    mean1 = jnp.dot(colsum, w1, precision=lax.Precision.HIGHEST) / m_true
    ex2_1 = jnp.sum(w1 * jnp.dot(gram, w1,
                                 precision=lax.Precision.HIGHEST),
                    axis=0) / m_true
    var1 = jnp.maximum(ex2_1 - mean1 * mean1, 0.0)
    scale1 = lax.rsqrt(var1 + EPS)
    shift1 = -mean1 * scale1                                          # (512,)

    # Fold scale1 into W1; pre-transpose weights for the channels-major layout.
    w1s_t = (w1 * scale1[None, :]).T.astype(jnp.bfloat16)             # (512,Cin)
    shift1_col = shift1.reshape(c1, 1).astype(jnp.float32)
    w2t_b = w2.T.astype(jnp.bfloat16)                                 # (256,512)

    # Pad the pixel (lane) axis and cast activations to bf16.
    if m_pad != m_true:
        x_t = jnp.pad(x_t, ((0, 0), (0, m_pad - m_true)))
    x_tb = x_t.astype(jnp.bfloat16)

    # ---------------- Pass B: layers 1+2 and BN2 statistics -----------------
    h2, sum2_raw, sq2_raw = pl.pallas_call(
        _layer12_kernel,
        out_shape=(jax.ShapeDtypeStruct((c2, m_pad), jnp.bfloat16),
                   jax.ShapeDtypeStruct((_N_CORES * c2, 1), jnp.float32),
                   jax.ShapeDtypeStruct((_N_CORES * c2, 1), jnp.float32)),
        grid=(_N_CORES, n_half),
        in_specs=[
            pl.BlockSpec((c, tile_m), lambda core, i: (0, core * n_half + i)),
            pl.BlockSpec((c1, c), lambda core, i: (0, 0)),
            pl.BlockSpec((c1, 1), lambda core, i: (0, 0)),
            pl.BlockSpec((c2, c1), lambda core, i: (0, 0)),
        ],
        out_specs=(
            pl.BlockSpec((c2, tile_m), lambda core, i: (0, core * n_half + i)),
            pl.BlockSpec((c2, 1), lambda core, i: (core, 0)),
            pl.BlockSpec((c2, 1), lambda core, i: (core, 0)),
        ),
        compiler_params=pltpu.CompilerParams(
            dimension_semantics=("parallel", "arbitrary"),
            vmem_limit_bytes=vmem_limit),
    )(x_tb, w1s_t, shift1_col, w2t_b)

    # Combine the per-core partial sums; remove the padded columns' constant
    # contribution (each zero x column yields h2 column = W2^T relu(shift1)).
    sum2 = jnp.sum(sum2_raw.reshape(_N_CORES, c2, 1), axis=0)
    sq2 = jnp.sum(sq2_raw.reshape(_N_CORES, c2, 1), axis=0)
    n_padrows = m_pad - m_true
    if n_padrows:
        pad_h1n = jnp.maximum(shift1, 0.0).reshape(c1, 1).astype(jnp.bfloat16)
        c2_col = jnp.dot(w2t_b, pad_h1n, preferred_element_type=jnp.float32)
        sum2 = sum2 - n_padrows * c2_col
        sq2 = sq2 - n_padrows * (c2_col * c2_col)

    mean2 = sum2 / m_true                                             # (256,1)
    var2 = jnp.maximum(sq2 / m_true - mean2 * mean2, 0.0)
    scale2 = lax.rsqrt(var2 + EPS)
    negmean2 = (-mean2).astype(jnp.float32)
    w3s = (w3.reshape(c2, 1) * scale2).astype(jnp.float32)            # fold scale2
    b3v = b3.reshape(1).astype(jnp.float32)

    # ---------------- Pass C: BN2 + ReLU + layer 3 ---------------------------
    out_row = pl.pallas_call(
        _layer3_kernel,
        out_shape=jax.ShapeDtypeStruct((1, m_pad), jnp.float32),
        grid=(n_tiles,),
        in_specs=[
            pl.BlockSpec((c2, tile_m), lambda i: (0, i)),
            pl.BlockSpec((c2, 1), lambda i: (0, 0)),
            pl.BlockSpec((c2, 1), lambda i: (0, 0)),
            pl.BlockSpec(memory_space=pltpu.MemorySpace.SMEM),
        ],
        out_specs=pl.BlockSpec((1, tile_m), lambda i: (0, i)),
        compiler_params=pltpu.CompilerParams(
            dimension_semantics=("parallel",),
            vmem_limit_bytes=vmem_limit),
    )(h2, negmean2, w3s, b3v)

    out = out_row[:, :m_true].reshape(1, n, h, w)
    return jnp.transpose(out, (1, 0, 2, 3))


def init_params(key, feat_channel):
    """Deterministic xavier_normal conv weights, zero biases.

    Conv weight (out, in, 1, 1): std = sqrt(2 / (fan_in + fan_out)); stored
    transposed as (in, out) so the math is x @ W.  The biases of conv1/conv2
    are omitted: a per-channel constant added right before a training-mode
    BatchNorm is cancelled exactly by the mean subtraction.  Only the final
    conv bias b3 is kept (zero-initialized, as in PyTorch).
    """
    def xavier(k, cin, cout):
        std = (2.0 / (cin + cout)) ** 0.5
        return jax.random.normal(k, (cin, cout), dtype=jnp.float32) * std

    k1, k2, k3 = jax.random.split(key, 3)
    w1 = xavier(k1, feat_channel, 512)
    w2 = xavier(k2, 512, 256)
    w3 = xavier(k3, 256, 1).reshape(256)
    b3 = jnp.zeros((1,), jnp.float32)
    return (w1, w2, w3, b3)


def _reference(x_nchw, params):
    """Pure-JAX f32 reference of the same math."""
    n, c, h, w = x_nchw.shape
    x = jnp.transpose(x_nchw, (0, 2, 3, 1)).reshape(n * h * w, c)
    w1, w2, w3, b3 = params

    def bn_relu(hh):
        mean = jnp.mean(hh, axis=0, keepdims=True)
        var = jnp.mean((hh - mean) ** 2, axis=0, keepdims=True)
        return jnp.maximum((hh - mean) * lax.rsqrt(var + EPS), 0.0)

    h1 = bn_relu(jnp.dot(x, w1, precision=lax.Precision.HIGHEST))
    h2 = bn_relu(jnp.dot(h1, w2, precision=lax.Precision.HIGHEST))
    sdf = jnp.dot(h2, w3.reshape(-1, 1), precision=lax.Precision.HIGHEST) + b3
    return jnp.transpose(sdf.reshape(n, h, w, 1), (0, 3, 1, 2))


if __name__ == "__main__":
    key = jax.random.PRNGKey(0)
    k_x, k_p = jax.random.split(key)

    # Small shapes: batch=2, feat_channel=16, spatial=12x12 -> M = 288 pixels.
    # With tile_m=128 the grid is (2 cores x 2 tiles) and 224 columns are
    # padding, exercising the per-core BN2 accumulators and the analytic
    # padded-column correction.
    N, FEAT, H, W = 2, 16, 12, 12
    x = jax.random.normal(k_x, (N, FEAT, H, W), dtype=jnp.float32)
    params = init_params(k_p, FEAT)

    fwd = jax.jit(functools.partial(sdf_decoder_forward, tile_m=128))
    out = jax.block_until_ready(fwd(x, params))
    assert out.shape == (N, 1, H, W), out.shape

    ref = _reference(x, params)
    # bf16 MXU matmuls (f32 accumulation) -> slightly looser tolerance than
    # an all-f32 kernel.
    assert jnp.allclose(out, ref, rtol=5e-2, atol=5e-2), \
        float(jnp.max(jnp.abs(out - ref)))

    print("KERNEL_OK")
</pallas_src>

<mosaic_0001>
module attributes {stable_mosaic.version = 11 : i64} {
  func.func @_layer12_kernel(%arg0: i32, %arg1: i32, %arg2: memref<16x128xbf16, #tpu.memory_space<vmem>>, %arg3: memref<512x16xbf16, #tpu.memory_space<vmem>>, %arg4: memref<512x1xf32, #tpu.memory_space<vmem>>, %arg5: memref<256x512xbf16, #tpu.memory_space<vmem>>, %arg6: memref<256x128xbf16, #tpu.memory_space<vmem>>, %arg7: memref<256x1xf32, #tpu.memory_space<vmem>>, %arg8: memref<256x1xf32, #tpu.memory_space<vmem>>) attributes {dimension_semantics = [#tpu.dimension_semantics<parallel>, #tpu.dimension_semantics<arbitrary>], iteration_bounds = array<i64: 2, 2>, scalar_prefetch = 0 : i64, scratch_operands = 0 : i64, tpu.core_type = #tpu.core_type<tc>, window_params = [{transform_indices = @transform_0, window_bounds = array<i64: 16, 128>}, {pipeline_mode = #tpu.pipeline_mode<synchronous>, transform_indices = @transform_1, window_bounds = array<i64: 512, 16>}, {pipeline_mode = #tpu.pipeline_mode<synchronous>, transform_indices = @transform_2, window_bounds = array<i64: 512, 1>}, {pipeline_mode = #tpu.pipeline_mode<synchronous>, transform_indices = @transform_3, window_bounds = array<i64: 256, 512>}, {transform_indices = @transform_4, window_bounds = array<i64: 256, 128>}, {transform_indices = @transform_5, window_bounds = array<i64: 256, 1>}, {transform_indices = @transform_6, window_bounds = array<i64: 256, 1>}]} {
    %c0_i32 = arith.constant 0 : i32
    %0 = arith.cmpi eq, %arg1, %c0_i32 : i32
    %1 = arith.extui %0 : i1 to i32
    %c0_i32_0 = arith.constant 0 : i32
    %2 = arith.cmpi ne, %1, %c0_i32_0 : i32
    scf.if %2 {
      %cst_22 = arith.constant 0.000000e+00 : f32
      %27 = vector.broadcast %cst_22 : f32 to vector<256x1xf32>
      %c0_23 = arith.constant 0 : index
      %c0_24 = arith.constant 0 : index
      %28 = vector.load %arg7[%c0_23, %c0_24] : memref<256x1xf32, #tpu.memory_space<vmem>>, vector<256x1xf32>
      tpu.vector_store %arg7[%c0_23, %c0_24], %27 {strides = array<i32>} : memref<256x1xf32, #tpu.memory_space<vmem>>, vector<256x1xf32>,
      %cst_25 = arith.constant 0.000000e+00 : f32
      %29 = vector.broadcast %cst_25 : f32 to vector<256x1xf32>
      %c0_26 = arith.constant 0 : index
      %c0_27 = arith.constant 0 : index
      %30 = vector.load %arg8[%c0_26, %c0_27] : memref<256x1xf32, #tpu.memory_space<vmem>>, vector<256x1xf32>
      tpu.vector_store %arg8[%c0_26, %c0_27], %29 {strides = array<i32>} : memref<256x1xf32, #tpu.memory_space<vmem>>, vector<256x1xf32>,
    } else {
    }
    %c0 = arith.constant 0 : index
    %c0_1 = arith.constant 0 : index
    %3 = vector.load %arg3[%c0, %c0_1] : memref<512x16xbf16, #tpu.memory_space<vmem>>, vector<512x16xbf16>
    %c0_2 = arith.constant 0 : index
    %c0_3 = arith.constant 0 : index
    %4 = vector.load %arg2[%c0_2, %c0_3] : memref<16x128xbf16, #tpu.memory_space<vmem>>, vector<16x128xbf16>
    %cst = arith.constant dense<0.000000e+00> : vector<512x128xf32>
    %5 = tpu.matmul %3, %4, %cst {dimension_numbers = #tpu.dot_dimension_numbers<[1], [0], [0], [1], [0, 0, 1, 1], [], []>} : vector<512x16xbf16>, vector<16x128xbf16>, vector<512x128xf32> -> vector<512x128xf32>
    %c0_4 = arith.constant 0 : index
    %c0_5 = arith.constant 0 : index
    %6 = vector.load %arg4[%c0_4, %c0_5] : memref<512x1xf32, #tpu.memory_space<vmem>>, vector<512x1xf32>
    %7 = vector.broadcast %6 : vector<512x1xf32> to vector<512x128xf32>
    %8 = arith.addf %5, %7 : vector<512x128xf32>
    %cst_6 = arith.constant 0.000000e+00 : f32
    %9 = vector.broadcast %cst_6 : f32 to vector<512x128xf32>
    %10 = arith.maximumf %8, %9 : vector<512x128xf32>
    %c0_7 = arith.constant 0 : index
    %c0_8 = arith.constant 0 : index
    %11 = vector.load %arg5[%c0_7, %c0_8] : memref<256x512xbf16, #tpu.memory_space<vmem>>, vector<256x512xbf16>
    %12 = arith.truncf %10 : vector<512x128xf32> to vector<512x128xbf16>
    %cst_9 = arith.constant dense<0.000000e+00> : vector<256x128xf32>
    %13 = tpu.matmul %11, %12, %cst_9 {dimension_numbers = #tpu.dot_dimension_numbers<[1], [0], [0], [1], [0, 0, 1, 1], [], []>} : vector<256x512xbf16>, vector<512x128xbf16>, vector<256x128xf32> -> vector<256x128xf32>
    %14 = arith.truncf %13 : vector<256x128xf32> to vector<256x128xbf16>
    %c0_10 = arith.constant 0 : index
    %c0_11 = arith.constant 0 : index
    %15 = vector.load %arg6[%c0_10, %c0_11] : memref<256x128xbf16, #tpu.memory_space<vmem>>, vector<256x128xbf16>
    tpu.vector_store %arg6[%c0_10, %c0_11], %14 {strides = array<i32>} : memref<256x128xbf16, #tpu.memory_space<vmem>>, vector<256x128xbf16>,
    %c0_12 = arith.constant 0 : index
    %c0_13 = arith.constant 0 : index
    %16 = vector.load %arg7[%c0_12, %c0_13] : memref<256x1xf32, #tpu.memory_space<vmem>>, vector<256x1xf32>
    %cst_14 = arith.constant dense<0.000000e+00> : vector<256xf32>
    %17 = vector.multi_reduction <add>, %13, %cst_14 [1] : vector<256x128xf32> to vector<256xf32>
    %18 = vector.shape_cast %17 : vector<256xf32> to vector<256x1xf32>
    %19 = arith.addf %16, %18 : vector<256x1xf32>
    %c0_15 = arith.constant 0 : index
    %c0_16 = arith.constant 0 : index
    %20 = vector.load %arg7[%c0_15, %c0_16] : memref<256x1xf32, #tpu.memory_space<vmem>>, vector<256x1xf32>
    tpu.vector_store %arg7[%c0_15, %c0_16], %19 {strides = array<i32>} : memref<256x1xf32, #tpu.memory_space<vmem>>, vector<256x1xf32>,
    %c0_17 = arith.constant 0 : index
    %c0_18 = arith.constant 0 : index
    %21 = vector.load %arg8[%c0_17, %c0_18] : memref<256x1xf32, #tpu.memory_space<vmem>>, vector<256x1xf32>
    %22 = arith.mulf %13, %13 : vector<256x128xf32>
    %cst_19 = arith.constant dense<0.000000e+00> : vector<256xf32>
    %23 = vector.multi_reduction <add>, %22, %cst_19 [1] : vector<256x128xf32> to vector<256xf32>
    %24 = vector.shape_cast %23 : vector<256xf32> to vector<256x1xf32>
    %25 = arith.addf %21, %24 : vector<256x1xf32>
    %c0_20 = arith.constant 0 : index
    %c0_21 = arith.constant 0 : index
    %26 = vector.load %arg8[%c0_20, %c0_21] : memref<256x1xf32, #tpu.memory_space<vmem>>, vector<256x1xf32>
    tpu.vector_store %arg8[%c0_20, %c0_21], %25 {strides = array<i32>} : memref<256x1xf32, #tpu.memory_space<vmem>>, vector<256x1xf32>,
    return
  }
  func.func @transform_0(%arg0: i32, %arg1: i32) -> (i32, i32) {
    %c2_i32 = arith.constant 2 : i32
    %0 = arith.muli %arg0, %c2_i32 : i32
    %1 = arith.addi %0, %arg1 : i32
    %c0_i32 = arith.constant 0 : i32
    %c0_i32_0 = arith.constant 0 : i32
    return %c0_i32, %1 : i32, i32
  }
  func.func @transform_1(%arg0: i32, %arg1: i32) -> (i32, i32) {
    %c0_i32 = arith.constant 0 : i32
    %c0_i32_0 = arith.constant 0 : i32
    %c0_i32_1 = arith.constant 0 : i32
    return %c0_i32, %c0_i32_0 : i32, i32
  }
  func.func @transform_2(%arg0: i32, %arg1: i32) -> (i32, i32) {
    %c0_i32 = arith.constant 0 : i32
    %c0_i32_0 = arith.constant 0 : i32
    %c0_i32_1 = arith.constant 0 : i32
    return %c0_i32, %c0_i32_0 : i32, i32
  }
  func.func @transform_3(%arg0: i32, %arg1: i32) -> (i32, i32) {
    %c0_i32 = arith.constant 0 : i32
    %c0_i32_0 = arith.constant 0 : i32
    %c0_i32_1 = arith.constant 0 : i32
    return %c0_i32, %c0_i32_0 : i32, i32
  }
  func.func @transform_4(%arg0: i32, %arg1: i32) -> (i32, i32) {
    %c2_i32 = arith.constant 2 : i32
    %0 = arith.muli %arg0, %c2_i32 : i32
    %1 = arith.addi %0, %arg1 : i32
    %c0_i32 = arith.constant 0 : i32
    %c0_i32_0 = arith.constant 0 : i32
    return %c0_i32, %1 : i32, i32
  }
  func.func @transform_5(%arg0: i32, %arg1: i32) -> (i32, i32) {
    %c0_i32 = arith.constant 0 : i32
    %c0_i32_0 = arith.constant 0 : i32
    return %arg0, %c0_i32 : i32, i32
  }
  func.func @transform_6(%arg0: i32, %arg1: i32) -> (i32, i32) {
    %c0_i32 = arith.constant 0 : i32
    %c0_i32_0 = arith.constant 0 : i32
    return %arg0, %c0_i32 : i32, i32
  }
}

module attributes {stable_mosaic.version = 11 : i64} {
  func.func @_layer3_kernel(%arg0: i32, %arg1: memref<256x128xbf16, #tpu.memory_space<vmem>>, %arg2: memref<256x1xf32, #tpu.memory_space<vmem>>, %arg3: memref<256x1xf32, #tpu.memory_space<vmem>>, %arg4: memref<1xf32, #tpu.memory_space<smem>>, %arg5: memref<1x128xf32, #tpu.memory_space<vmem>>) attributes {dimension_semantics = [#tpu.dimension_semantics<parallel>], iteration_bounds = array<i64: 4>, scalar_prefetch = 0 : i64, scratch_operands = 0 : i64, tpu.core_type = #tpu.core_type<tc>, window_params = [{transform_indices = @transform_0, window_bounds = array<i64: 256, 128>}, {pipeline_mode = #tpu.pipeline_mode<synchronous>, transform_indices = @transform_1, window_bounds = array<i64: 256, 1>}, {pipeline_mode = #tpu.pipeline_mode<synchronous>, transform_indices = @transform_2, window_bounds = array<i64: 256, 1>}, {transform_indices = @transform_3, window_bounds = array<i64: 1>}, {transform_indices = @transform_4, window_bounds = array<i64: 1, 128>}]} {
    %c0 = arith.constant 0 : index
    %c0_0 = arith.constant 0 : index
    %0 = vector.load %arg1[%c0, %c0_0] : memref<256x128xbf16, #tpu.memory_space<vmem>>, vector<256x128xbf16>
    %1 = arith.extf %0 : vector<256x128xbf16> to vector<256x128xf32>
    %c0_1 = arith.constant 0 : index
    %c0_2 = arith.constant 0 : index
    %2 = vector.load %arg2[%c0_1, %c0_2] : memref<256x1xf32, #tpu.memory_space<vmem>>, vector<256x1xf32>
    %3 = vector.broadcast %2 : vector<256x1xf32> to vector<256x128xf32>
    %4 = arith.addf %1, %3 : vector<256x128xf32>
    %cst = arith.constant 0.000000e+00 : f32
    %5 = vector.broadcast %cst : f32 to vector<256x128xf32>
    %6 = arith.maximumf %4, %5 : vector<256x128xf32>
    %c0_3 = arith.constant 0 : index
    %c0_4 = arith.constant 0 : index
    %7 = vector.load %arg3[%c0_3, %c0_4] : memref<256x1xf32, #tpu.memory_space<vmem>>, vector<256x1xf32>
    %8 = vector.broadcast %7 : vector<256x1xf32> to vector<256x128xf32>
    %9 = arith.mulf %6, %8 : vector<256x128xf32>
    %cst_5 = arith.constant dense<0.000000e+00> : vector<128xf32>
    %10 = vector.multi_reduction <add>, %9, %cst_5 [0] : vector<256x128xf32> to vector<128xf32>
    %11 = vector.shape_cast %10 : vector<128xf32> to vector<1x128xf32>
    %c0_6 = arith.constant 0 : index
    %12 = memref.load %arg4[%c0_6] : memref<1xf32, #tpu.memory_space<smem>>
    %13 = vector.broadcast %12 : f32 to vector<1x128xf32>
    %14 = arith.addf %11, %13 : vector<1x128xf32>
    %c0_7 = arith.constant 0 : index
    %c0_8 = arith.constant 0 : index
    %15 = vector.load %arg5[%c0_7, %c0_8] : memref<1x128xf32, #tpu.memory_space<vmem>>, vector<1x128xf32>
    tpu.vector_store %arg5[%c0_7, %c0_8], %14 {strides = array<i32>} : memref<1x128xf32, #tpu.memory_space<vmem>>, vector<1x128xf32>,
    return
  }
  func.func @transform_0(%arg0: i32) -> (i32, i32) {
    %c0_i32 = arith.constant 0 : i32
    %c0_i32_0 = arith.constant 0 : i32
    return %c0_i32, %arg0 : i32, i32
  }
  func.func @transform_1(%arg0: i32) -> (i32, i32) {
    %c0_i32 = arith.constant 0 : i32
    %c0_i32_0 = arith.constant 0 : i32
    %c0_i32_1 = arith.constant 0 : i32
    return %c0_i32, %c0_i32_0 : i32, i32
  }
  func.func @transform_2(%arg0: i32) -> (i32, i32) {
    %c0_i32 = arith.constant 0 : i32
    %c0_i32_0 = arith.constant 0 : i32
    %c0_i32_1 = arith.constant 0 : i32
    return %c0_i32, %c0_i32_0 : i32, i32
  }
  func.func @transform_3(%arg0: i32) -> i32 {
    %c0_i32 = arith.constant 0 : i32
    %c0_i32_0 = arith.constant 0 : i32
    return %c0_i32 : i32
  }
  func.func @transform_4(%arg0: i32) -> (i32, i32) {
    %c0_i32 = arith.constant 0 : i32
    %c0_i32_0 = arith.constant 0 : i32
    return %c0_i32, %arg0 : i32, i32
  }
}

</mosaic_0001>

<llo_original>
// kernel: sdf_decoder_forward.3
$region0: #{sdf_decoder_forward.3}
  #allocation0 [shape = 'u32[]', space=smem, size = 0x4, offset = 0x4, fixed_abs, tag = 'smem constant byte address 0x4 - core index']
  #allocation1 [shape = 'u32[144,128]{1,0:T(1,128)}', space=vmem, size = 0x12000, scoped, tag = 'internal scratch']
  #allocation2 [shape = 'f32[1]{0:T(128)S(6)}', space=smem, size = 0x200, scoped, tag = 'scoped memory for sdf_decoder_forward.3']
  %s0 = inlined_call_operand.vmem [shape: bf16[256,512], index: 0, kind: input, shape index: {}]
  %s1 = inlined_call_operand.vmem [shape: f32[256,1], index: 1, kind: input, shape index: {}]
  %s2 = inlined_call_operand.vmem [shape: f32[256,1], index: 2, kind: input, shape index: {}]
  %s3 = inlined_call_operand.<no memory space> [shape: f32[1], index: 3, kind: input, shape index: {}]
  %s4 = inlined_call_operand.vmem [shape: f32[1,512], index: 4, kind: output, shape index: {}]
  %s5 = sld [smem:[#allocation0]]
  $region90: #{sdf_decoder_forward.3} parent=0
    _
  %s7 = ssub.s32 1, %s5
  %s8 = scalar_select 0, %s7, %s5
  %9 = sst [smem:[#allocation2]] %s3
  $region1: #{sdf_decoder_forward.3} parent=0
    #allocation3 [shape = 'u8[131072]{0}', space=vmem, size = 0x20000, scoped, tag = 'input window, operand 0']
    loop: start=0, step=1, limit=6
    $region2: #{sdf_decoder_forward.3} parent=1 // loop_pre_header
      _
    $region3: #{sdf_decoder_forward.3} parent=1 // loop_header
      %s11 = sphi 0, %s15
      %p12 = scmp.ge.s32.totalorder %s11, 6
      %s21 = sphi 0, %s23
      %s24 = sphi 0, %s21
      %s25 = sphi 0, %s24
      %s41 = sphi 0, %s25
      %s45 = sphi 0, %s45
      %s47 = sphi 0, %s45
      %s48 = sphi 0, %s47
      %s62 = sphi 0, %s48
      %s66 = sphi 0, %s66
      %s68 = sphi 0, %s66
      %s69 = sphi 0, %s68
      %s83 = sphi 0, %s69
      %s87 = sphi 0, %s87
      %s89 = sphi 0, %s87
      %s90 = sphi 0, %s89
      %s104 = sphi 0, %s90
      %s110 = sphi 0, %s112
      %s113 = sphi 0, %s110
      %s114 = sphi 0, %s113
      %s130 = sphi 0, %s114
    $region4: #{sdf_decoder_forward.3} parent=1 // loop_header_branch
      %14 = sbr.rel (%p12) target = $region8
    $region5: #{sdf_decoder_forward.3} parent=1 // loop_body
      %s16 = ssub.s32 %s11, 1
      %s17 = ssub.s32 %s11, 2
      %s18 = sadd.s32 %s11, 1
      %s19 = ssub.s32 %s11, %s18
      %p20 = scmp.eq.s32.totalorder %s19, 0
      %s22 = sadd.s32 %s21, 1
      %s23 = scalar_select %p20, %s21, %s22
      %p26 = pneg %p20
      %p27 = scmp.eq.s32.totalorder %s11, 3
      %p28 = por %p26, %p27
      %p29 = scmp.ne.s32.totalorder %s21, %s24
      %p30 = scmp.eq.s32.totalorder %s11, 0
      %p31 = por %p29, %p30
      %p32 = scmp.ne.s32.totalorder %s21, %s24
      %p33 = scmp.eq.s32.totalorder %s16, 3
      %p34 = por %p32, %p33
      %p35 = scmp.ne.s32.totalorder %s24, %s25
      %p36 = scmp.eq.s32.totalorder %s16, 0
      %p37 = por %p35, %p36
      %p38 = scmp.ne.s32.totalorder %s24, %s25
      %p39 = scmp.eq.s32.totalorder %s17, 3
      %p40 = por %p38, %p39
      %p42 = scmp.ne.s32.totalorder %s25, %s41
      %p43 = scmp.eq.s32.totalorder %s17, 0
      %p44 = por %p42, %p43
      %s46 = sadd.s32 %s45, 1
      %p49 = scmp.eq.s32.totalorder %s11, 3
      %p50 = scmp.ne.s32.totalorder %s45, %s47
      %p51 = scmp.eq.s32.totalorder %s11, 0
      %p52 = por %p50, %p51
      %p53 = scmp.ne.s32.totalorder %s45, %s47
      %p54 = scmp.eq.s32.totalorder %s16, 3
      %p55 = por %p53, %p54
      %p56 = scmp.ne.s32.totalorder %s47, %s48
      %p57 = scmp.eq.s32.totalorder %s16, 0
      %p58 = por %p56, %p57
      %p59 = scmp.ne.s32.totalorder %s47, %s48
      %p60 = scmp.eq.s32.totalorder %s17, 3
      %p61 = por %p59, %p60
      %p63 = scmp.ne.s32.totalorder %s48, %s62
      %p64 = scmp.eq.s32.totalorder %s17, 0
      %p65 = por %p63, %p64
      %s67 = sadd.s32 %s66, 1
      %p70 = scmp.eq.s32.totalorder %s11, 3
      %p71 = scmp.ne.s32.totalorder %s66, %s68
      %p72 = scmp.eq.s32.totalorder %s11, 0
      %p73 = por %p71, %p72
      %p74 = scmp.ne.s32.totalorder %s66, %s68
      %p75 = scmp.eq.s32.totalorder %s16, 3
      %p76 = por %p74, %p75
      %p77 = scmp.ne.s32.totalorder %s68, %s69
      %p78 = scmp.eq.s32.totalorder %s16, 0
      %p79 = por %p77, %p78
      %p80 = scmp.ne.s32.totalorder %s68, %s69
      %p81 = scmp.eq.s32.totalorder %s17, 3
      %p82 = por %p80, %p81
      %p84 = scmp.ne.s32.totalorder %s69, %s83
      %p85 = scmp.eq.s32.totalorder %s17, 0
      %p86 = por %p84, %p85
      %s88 = sadd.s32 %s87, 1
      %p91 = scmp.eq.s32.totalorder %s11, 3
      %p92 = scmp.ne.s32.totalorder %s87, %s89
      %p93 = scmp.eq.s32.totalorder %s11, 0
      %p94 = por %p92, %p93
      %p95 = scmp.ne.s32.totalorder %s87, %s89
      %p96 = scmp.eq.s32.totalorder %s16, 3
      %p97 = por %p95, %p96
      %p98 = scmp.ne.s32.totalorder %s89, %s90
      %p99 = scmp.eq.s32.totalorder %s16, 0
      %p100 = por %p98, %p99
      %p101 = scmp.ne.s32.totalorder %s89, %s90
      %p102 = scmp.eq.s32.totalorder %s17, 3
      %p103 = por %p101, %p102
      %p105 = scmp.ne.s32.totalorder %s90, %s104
      %p106 = scmp.eq.s32.totalorder %s17, 0
      %p107 = por %p105, %p106
      %s108 = ssub.s32 %s11, %s18
      %p109 = scmp.eq.s32.totalorder %s108, 0
      %s111 = sadd.s32 %s110, 1
      %s112 = scalar_select %p109, %s110, %s111
      %p115 = pneg %p109
      %p116 = scmp.eq.s32.totalorder %s11, 3
      %p117 = por %p115, %p116
      %p118 = scmp.ne.s32.totalorder %s110, %s113
      %p119 = scmp.eq.s32.totalorder %s11, 0
      %p120 = por %p118, %p119
      %p121 = scmp.ne.s32.totalorder %s110, %s113
      %p122 = scmp.eq.s32.totalorder %s16, 3
      %p123 = por %p121, %p122
      %p124 = scmp.ne.s32.totalorder %s113, %s114
      %p125 = scmp.eq.s32.totalorder %s16, 0
      %p126 = por %p124, %p125
      %p127 = scmp.ne.s32.totalorder %s113, %s114
      %p128 = scmp.eq.s32.totalorder %s17, 3
      %p129 = por %p127, %p128
      %p131 = scmp.ne.s32.totalorder %s114, %s130
      %p132 = scmp.eq.s32.totalorder %s17, 0
      %p133 = por %p131, %p132
      %p134 = scmp.le.s32.totalorder 1, %s11
      %p135 = scmp.lt.s32.totalorder %s11, 5
      %p136 = pnand %p134, %p135
      %p137 = pneg %p136
      // Predicated region
      $region9: #{sdf_decoder_forward.3} parent=5 // pred_check
        _
      $region10: #{sdf_decoder_forward.3} parent=5 // pred_check_branch
        %139 = sbr.rel (%p136) target = $region12
      $region11: #{sdf_decoder_forward.3} parent=5 // pred_region
        %s140 = ssub.s32 %s11, 1
        // Predicated region
        $region13: #{sdf_decoder_forward.3} parent=11 // pred_check
          %p141 = pneg %p58
        $region14: #{sdf_decoder_forward.3} parent=11 // pred_check_branch
          %143 = sbr.rel (%p141) target = $region16
        $region15: #{sdf_decoder_forward.3} parent=11 // pred_region
          _
        $region16: #{sdf_decoder_forward.3} parent=11 // pred_fallthru
          _
        // Predicated region
        $region17: #{sdf_decoder_forward.3} parent=11 // pred_check
          %p144 = pneg %p79
        $region18: #{sdf_decoder_forward.3} parent=11 // pred_check_branch
          %146 = sbr.rel (%p144) target = $region20
        $region19: #{sdf_decoder_forward.3} parent=11 // pred_region
          _
        $region20: #{sdf_decoder_forward.3} parent=11 // pred_fallthru
          _
        // Predicated region
        $region21: #{sdf_decoder_forward.3} parent=11 // pred_check
          %p147 = pneg %p100
        $region22: #{sdf_decoder_forward.3} parent=11 // pred_check_branch
          %149 = sbr.rel (%p147) target = $region24
        $region23: #{sdf_decoder_forward.3} parent=11 // pred_region
          _
        $region24: #{sdf_decoder_forward.3} parent=11 // pred_fallthru
          _
      $region12: #{sdf_decoder_forward.3} parent=5 // pred_fallthru
        _
      %p150 = scmp.lt.s32.totalorder %s11, 4
      // Predicated region
      $region25: #{sdf_decoder_forward.3} parent=5 // pred_check
        %p151 = pneg %p150
      $region26: #{sdf_decoder_forward.3} parent=5 // pred_check_branch
        %153 = sbr.rel (%p151) target = $region28
      $region27: #{sdf_decoder_forward.3} parent=5 // pred_region
        // Predicated region
        $region29: #{sdf_decoder_forward.3} parent=27 // pred_check
          %p154 = pneg %p31
        $region30: #{sdf_decoder_forward.3} parent=27 // pred_check_branch
          %156 = sbr.rel (%p154) target = $region32
        $region31: #{sdf_decoder_forward.3} parent=27 // pred_region
          %s157 = sand.u32 %s21, 1
          %s158 = sand.u32 %s21, 1
          %s159 = smul.addr %s158, 128
          %s160 = scalar_lea.vmem [#allocation3], %s159
          %s161 = smul.addr %s11, 4
          %s162 = scalar_lea.vmem %s0, %s161
          // Predicated region
          $region33: #{sdf_decoder_forward.3} parent=31 // pred_check
            _
          $region34: #{sdf_decoder_forward.3} parent=31 // pred_check_branch
            %164 = sbr.rel (0) target = $region36
          $region35: #{sdf_decoder_forward.3} parent=31 // pred_region
            // Predicated region
            $region37: #{sdf_decoder_forward.3} parent=35 // pred_check
              _
            $region38: #{sdf_decoder_forward.3} parent=35 // pred_check_branch
              %166 = sbr.rel target = $region40
            $region39: #{sdf_decoder_forward.3} parent=35 // pred_region
              // Predicated region
              $region52: #{sdf_decoder_forward.3} parent=39 // pred_check
                _
              $region53: #{sdf_decoder_forward.3} parent=39 // pred_check_branch
                %244 = sbr.rel (0) target = $region55
              $region54: #{sdf_decoder_forward.3} parent=39 // pred_region
                loop: start=0, step=1, limit=1
                $region56: #{sdf_decoder_forward.3} parent=54 // loop_pre_header
                  _
                $region57: #{sdf_decoder_forward.3} parent=54 // loop_header
                  %s246 = sphi 0, %s250
                  %p247 = scmp.ge.s32.totalorder %s246, 1
                  %s251 = sphi %s162, %s162
                  %s252 = sphi %s160, %s160
                $region58: #{sdf_decoder_forward.3} parent=54 // loop_header_branch
                  %249 = sbr.rel (%p247) target = $region62
                $region59: #{sdf_decoder_forward.3} parent=54 // loop_body
                  _
                $region60: #{sdf_decoder_forward.3} parent=54 // loop_footer
                  %s250 = sadd.s32 1, %s246
                $region61: #{sdf_decoder_forward.3} parent=54 // loop_footer_branch
                  %245 = sbr.rel target = $region57
                $region62: #{sdf_decoder_forward.3} parent=54 // loop_exit
                  _
                %s254 = ssub.s32 16, 1
                loop: start=0, step=1, limit=1
                $region63: #{sdf_decoder_forward.3} parent=54 // loop_pre_header
                  _
                $region64: #{sdf_decoder_forward.3} parent=54 // loop_header
                  %s256 = sphi 0, %s260
                  %p257 = scmp.ge.s32.totalorder %s256, 1
                  %s261 = sphi %s162, %s162
                  %s262 = sphi %s160, %s160
                $region65: #{sdf_decoder_forward.3} parent=54 // loop_header_branch
                  %259 = sbr.rel (%p257) target = $region69
                $region66: #{sdf_decoder_forward.3} parent=54 // loop_body
                  %v263 = vld [vmem:[%s261] sm:%s254]
                  %264 = vst [vmem:[%s262] sm:%s254] %v263
                  %v265 = vld [vmem:[%s261 + $0x10] sm:%s254]
                  %266 = vst [vmem:[%s262 + $0x4] sm:%s254] %v265
                  %v267 = vld [vmem:[%s261 + $0x20] sm:%s254]
                  %268 = vst [vmem:[%s262 + $0x8] sm:%s254] %v267
                  %v269 = vld [vmem:[%s261 + $0x30] sm:%s254]
                  %270 = vst [vmem:[%s262 + $0xc] sm:%s254] %v269
                  %v271 = vld [vmem:[%s261 + $0x40] sm:%s254]
                  %272 = vst [vmem:[%s262 + $0x10] sm:%s254] %v271
                  %v273 = vld [vmem:[%s261 + $0x50] sm:%s254]
                  %274 = vst [vmem:[%s262 + $0x14] sm:%s254] %v273
                  %v275 = vld [vmem:[%s261 + $0x60] sm:%s254]
                  %276 = vst [vmem:[%s262 + $0x18] sm:%s254] %v275
                  %v277 = vld [vmem:[%s261 + $0x70] sm:%s254]
                  %278 = vst [vmem:[%s262 + $0x1c] sm:%s254] %v277
                  %v279 = vld [vmem:[%s261 + $0x80] sm:%s254]
                  %280 = vst [vmem:[%s262 + $0x20] sm:%s254] %v279
                  %v281 = vld [vmem:[%s261 + $0x90] sm:%s254]
                  %282 = vst [vmem:[%s262 + $0x24] sm:%s254] %v281
                  %v283 = vld [vmem:[%s261 + $0xa0] sm:%s254]
                  %284 = vst [vmem:[%s262 + $0x28] sm:%s254] %v283
                  %v285 = vld [vmem:[%s261 + $0xb0] sm:%s254]
                  %286 = vst [vmem:[%s262 + $0x2c] sm:%s254] %v285
                  %v287 = vld [vmem:[%s261 + $0xc0] sm:%s254]
                  %288 = vst [vmem:[%s262 + $0x30] sm:%s254] %v287
                  %v289 = vld [vmem:[%s261 + $0xd0] sm:%s254]
                  %290 = vst [vmem:[%s262 + $0x34] sm:%s254] %v289
                  %v291 = vld [vmem:[%s261 + $0xe0] sm:%s254]
                  %292 = vst [vmem:[%s262 + $0x38] sm:%s254] %v291
                  %v293 = vld [vmem:[%s261 + $0xf0] sm:%s254]
                  %294 = vst [vmem:[%s262 + $0x3c] sm:%s254] %v293
                  %v295 = vld [vmem:[%s261 + $0x100] sm:%s254]
                  %296 = vst [vmem:[%s262 + $0x40] sm:%s254] %v295
                  %v297 = vld [vmem:[%s261 + $0x110] sm:%s254]
                  %298 = vst [vmem:[%s262 + $0x44] sm:%s254] %v297
                  %v299 = vld [vmem:[%s261 + $0x120] sm:%s254]
                  %300 = vst [vmem:[%s262 + $0x48] sm:%s254] %v299
                  %v301 = vld [vmem:[%s261 + $0x130] sm:%s254]
                  %302 = vst [vmem:[%s262 + $0x4c] sm:%s254] %v301
                  %v303 = vld [vmem:[%s261 + $0x140] sm:%s254]
                  %304 = vst [vmem:[%s262 + $0x50] sm:%s254] %v303
                  %v305 = vld [vmem:[%s261 + $0x150] sm:%s254]
                  %306 = vst [vmem:[%s262 + $0x54] sm:%s254] %v305
                  %v307 = vld [vmem:[%s261 + $0x160] sm:%s254]
                  %308 = vst [vmem:[%s262 + $0x58] sm:%s254] %v307
                  %v309 = vld [vmem:[%s261 + $0x170] sm:%s254]
                  %310 = vst [vmem:[%s262 + $0x5c] sm:%s254] %v309
                  %v311 = vld [vmem:[%s261 + $0x180] sm:%s254]
                  %312 = vst [vmem:[%s262 + $0x60] sm:%s254] %v311
                  %v313 = vld [vmem:[%s261 + $0x190] sm:%s254]
                  %314 = vst [vmem:[%s262 + $0x64] sm:%s254] %v313
                  %v315 = vld [vmem:[%s261 + $0x1a0] sm:%s254]
                  %316 = vst [vmem:[%s262 + $0x68] sm:%s254] %v315
                  %v317 = vld [vmem:[%s261 + $0x1b0] sm:%s254]
                  %318 = vst [vmem:[%s262 + $0x6c] sm:%s254] %v317
                  %v319 = vld [vmem:[%s261 + $0x1c0] sm:%s254]
                  %320 = vst [vmem:[%s262 + $0x70] sm:%s254] %v319
                  %v321 = vld [vmem:[%s261 + $0x1d0] sm:%s254]
                  %322 = vst [vmem:[%s262 + $0x74] sm:%s254] %v321
                  %v323 = vld [vmem:[%s261 + $0x1e0] sm:%s254]
                  %324 = vst [vmem:[%s262 + $0x78] sm:%s254] %v323
                  %v325 = vld [vmem:[%s261 + $0x1f0] sm:%s254]
                  %326 = vst [vmem:[%s262 + $0x7c] sm:%s254] %v325
                $region67: #{sdf_decoder_forward.3} parent=54 // loop_footer
                  %s260 = sadd.s32 1, %s256
                $region68: #{sdf_decoder_forward.3} parent=54 // loop_footer_branch
                  %255 = sbr.rel target = $region64
                $region69: #{sdf_decoder_forward.3} parent=54 // loop_exit
                  _
              $region55: #{sdf_decoder_forward.3} parent=39 // pred_fallthru
                _
            $region40: #{sdf_decoder_forward.3} parent=35 // pred_fallthru
              _
            // Predicated region
            $region41: #{sdf_decoder_forward.3} parent=35 // pred_check
              _
            $region42: #{sdf_decoder_forward.3} parent=35 // pred_check_branch
              %168 = sbr.rel (0) target = $region44
            $region43: #{sdf_decoder_forward.3} parent=35 // pred_region
              %s170 = ssub.s32 16, 1
              loop: start=0, step=1, limit=1
              $region45: #{sdf_decoder_forward.3} parent=43 // loop_pre_header
                _
              $region46: #{sdf_decoder_forward.3} parent=43 // loop_header
                %s172 = sphi 0, %s176
                %p173 = scmp.ge.s32.totalorder %s172, 1
                %s177 = sphi %s162, %s162
                %s178 = sphi %s160, %s160
              $region47: #{sdf_decoder_forward.3} parent=43 // loop_header_branch
                %175 = sbr.rel (%p173) target = $region51
              $region48: #{sdf_decoder_forward.3} parent=43 // loop_body
                %v179 = vld [vmem:[%s177] sm:%s170]
                %180 = vst [vmem:[%s178] sm:%s170] %v179
                %v181 = vld [vmem:[%s177 + $0x10] sm:%s170]
                %182 = vst [vmem:[%s178 + $0x4] sm:%s170] %v181
                %v183 = vld [vmem:[%s177 + $0x20] sm:%s170]
                %184 = vst [vmem:[%s178 + $0x8] sm:%s170] %v183
                %v185 = vld [vmem:[%s177 + $0x30] sm:%s170]
                %186 = vst [vmem:[%s178 + $0xc] sm:%s170] %v185
                %v187 = vld [vmem:[%s177 + $0x40] sm:%s170]
                %188 = vst [vmem:[%s178 + $0x10] sm:%s170] %v187
                %v189 = vld [vmem:[%s177 + $0x50] sm:%s170]
                %190 = vst [vmem:[%s178 + $0x14] sm:%s170] %v189
                %v191 = vld [vmem:[%s177 + $0x60] sm:%s170]
                %192 = vst [vmem:[%s178 + $0x18] sm:%s170] %v191
                %v193 = vld [vmem:[%s177 + $0x70] sm:%s170]
                %194 = vst [vmem:[%s178 + $0x1c] sm:%s170] %v193
                %v195 = vld [vmem:[%s177 + $0x80] sm:%s170]
                %196 = vst [vmem:[%s178 + $0x20] sm:%s170] %v195
                %v197 = vld [vmem:[%s177 + $0x90] sm:%s170]
                %198 = vst [vmem:[%s178 + $0x24] sm:%s170] %v197
                %v199 = vld [vmem:[%s177 + $0xa0] sm:%s170]
                %200 = vst [vmem:[%s178 + $0x28] sm:%s170] %v199
                %v201 = vld [vmem:[%s177 + $0xb0] sm:%s170]
                %202 = vst [vmem:[%s178 + $0x2c] sm:%s170] %v201
                %v203 = vld [vmem:[%s177 + $0xc0] sm:%s170]
                %204 = vst [vmem:[%s178 + $0x30] sm:%s170] %v203
                %v205 = vld [vmem:[%s177 + $0xd0] sm:%s170]
                %206 = vst [vmem:[%s178 + $0x34] sm:%s170] %v205
                %v207 = vld [vmem:[%s177 + $0xe0] sm:%s170]
                %208 = vst [vmem:[%s178 + $0x38] sm:%s170] %v207
                %v209 = vld [vmem:[%s177 + $0xf0] sm:%s170]
                %210 = vst [vmem:[%s178 + $0x3c] sm:%s170] %v209
                %v211 = vld [vmem:[%s177 + $0x100] sm:%s170]
                %212 = vst [vmem:[%s178 + $0x40] sm:%s170] %v211
                %v213 = vld [vmem:[%s177 + $0x110] sm:%s170]
                %214 = vst [vmem:[%s178 + $0x44] sm:%s170] %v213
                %v215 = vld [vmem:[%s177 + $0x120] sm:%s170]
                %216 = vst [vmem:[%s178 + $0x48] sm:%s170] %v215
                %v217 = vld [vmem:[%s177 + $0x130] sm:%s170]
                %218 = vst [vmem:[%s178 + $0x4c] sm:%s170] %v217
                %v219 = vld [vmem:[%s177 + $0x140] sm:%s170]
                %220 = vst [vmem:[%s178 + $0x50] sm:%s170] %v219
                %v221 = vld [vmem:[%s177 + $0x150] sm:%s170]
                %222 = vst [vmem:[%s178 + $0x54] sm:%s170] %v221
                %v223 = vld [vmem:[%s177 + $0x160] sm:%s170]
                %224 = vst [vmem:[%s178 + $0x58] sm:%s170] %v223
                %v225 = vld [vmem:[%s177 + $0x170] sm:%s170]
                %226 = vst [vmem:[%s178 + $0x5c] sm:%s170] %v225
                %v227 = vld [vmem:[%s177 + $0x180] sm:%s170]
                %228 = vst [vmem:[%s178 + $0x60] sm:%s170] %v227
                %v229 = vld [vmem:[%s177 + $0x190] sm:%s170]
                %230 = vst [vmem:[%s178 + $0x64] sm:%s170] %v229
                %v231 = vld [vmem:[%s177 + $0x1a0] sm:%s170]
                %232 = vst [vmem:[%s178 + $0x68] sm:%s170] %v231
                %v233 = vld [vmem:[%s177 + $0x1b0] sm:%s170]
                %234 = vst [vmem:[%s178 + $0x6c] sm:%s170] %v233
                %v235 = vld [vmem:[%s177 + $0x1c0] sm:%s170]
                %236 = vst [vmem:[%s178 + $0x70] sm:%s170] %v235
                %v237 = vld [vmem:[%s177 + $0x1d0] sm:%s170]
                %238 = vst [vmem:[%s178 + $0x74] sm:%s170] %v237
                %v239 = vld [vmem:[%s177 + $0x1e0] sm:%s170]
                %240 = vst [vmem:[%s178 + $0x78] sm:%s170] %v239
                %v241 = vld [vmem:[%s177 + $0x1f0] sm:%s170]
                %242 = vst [vmem:[%s178 + $0x7c] sm:%s170] %v241
              $region49: #{sdf_decoder_forward.3} parent=43 // loop_footer
                %s176 = sadd.s32 1, %s172
              $region50: #{sdf_decoder_forward.3} parent=43 // loop_footer_branch
                %171 = sbr.rel target = $region46
              $region51: #{sdf_decoder_forward.3} parent=43 // loop_exit
                _
            $region44: #{sdf_decoder_forward.3} parent=35 // pred_fallthru
              _
          $region36: #{sdf_decoder_forward.3} parent=31 // pred_fallthru
            _
          %327 = vnop
        $region32: #{sdf_decoder_forward.3} parent=27 // pred_fallthru
          _
      $region28: #{sdf_decoder_forward.3} parent=5 // pred_fallthru
        _
      %p328 = scmp.le.s32.totalorder 1, %s11
      %p329 = scmp.lt.s32.totalorder %s11, 5
      %p330 = pnand %p328, %p329
      %p331 = pneg %p330
      // Predicated region
      $region70: #{sdf_decoder_forward.3} parent=5 // pred_check
        _
      $region71: #{sdf_decoder_forward.3} parent=5 // pred_check_branch
        %333 = sbr.rel (%p330) target = $region73
      $region72: #{sdf_decoder_forward.3} parent=5 // pred_region
        %s334 = ssub.s32 %s11, 1
        %s335 = sand.u32 %s24, 1
        %s336 = sand.u32 %s24, 1
        %s337 = smul.addr %s336, 128
        %s338 = scalar_lea.vmem [#allocation3], %s337
        // Predicated region
        $region74: #{sdf_decoder_forward.3} parent=72 // pred_check
          %p339 = pneg %p37
        $region75: #{sdf_decoder_forward.3} parent=72 // pred_check_branch
          %341 = sbr.rel (%p339) target = $region77
        $region76: #{sdf_decoder_forward.3} parent=72 // pred_region
          _
        $region77: #{sdf_decoder_forward.3} parent=72 // pred_fallthru
          _
        %s342 = sand.u32 %s24, 1
        %s343 = sand.u32 %s24, 1
        %s344 = smul.addr %s343, 128
        %s345 = scalar_lea.vmem [#allocation3], %s344
        %p346 = pneg %p37
        %p347 = pneg %p34
        %p348 = pneg %p58
        %p349 = pneg %p55
        %p350 = pneg %p79
        %p351 = pneg %p76
        %p352 = pneg %p100
        %p353 = pneg %p97
        %p354 = pneg %p126
        %p355 = pneg %p123
        %p356 = scmp.lt.s32.totalorder %s16, 3
        %s357 = scalar_select %p356, %s16, 3
        %s358 = scalar_lea.vmem %s4, %s357
        %p359 = scmp.lt.s32.totalorder %s16, 3
        %s360 = scalar_select %p359, %s16, 3
        %s361 = scalar_lea.vmem %s4, %s360
        %v362 = vld [vmem:[%s338] sm:$0xf]
        %v363 = vld [vmem:[%s338 + $0x4] sm:$0xf]
        %v364 = vld [vmem:[%s338 + $0x8] sm:$0xf]
        %v365 = vld [vmem:[%s338 + $0xc] sm:$0xf]
        %v366 = vld [vmem:[%s338 + $0x10] sm:$0xf]
        %v367 = vld [vmem:[%s338 + $0x14] sm:$0xf]
        %v368 = vld [vmem:[%s338 + $0x18] sm:$0xf]
        %v369 = vld [vmem:[%s338 + $0x1c] sm:$0xf]
        %v370 = vld [vmem:[%s338 + $0x20] sm:$0xf]
        %v371 = vld [vmem:[%s338 + $0x24] sm:$0xf]
        %v372 = vld [vmem:[%s338 + $0x28] sm:$0xf]
        %v373 = vld [vmem:[%s338 + $0x2c] sm:$0xf]
        %v374 = vld [vmem:[%s338 + $0x30] sm:$0xf]
        %v375 = vld [vmem:[%s338 + $0x34] sm:$0xf]
        %v376 = vld [vmem:[%s338 + $0x38] sm:$0xf]
        %v377 = vld [vmem:[%s338 + $0x3c] sm:$0xf]
        %v378 = vld [vmem:[%s338 + $0x40] sm:$0xf]
        %v379 = vld [vmem:[%s338 + $0x44] sm:$0xf]
        %v380 = vld [vmem:[%s338 + $0x48] sm:$0xf]
        %v381 = vld [vmem:[%s338 + $0x4c] sm:$0xf]
        %v382 = vld [vmem:[%s338 + $0x50] sm:$0xf]
        %v383 = vld [vmem:[%s338 + $0x54] sm:$0xf]
        %v384 = vld [vmem:[%s338 + $0x58] sm:$0xf]
        %v385 = vld [vmem:[%s338 + $0x5c] sm:$0xf]
        %v386 = vld [vmem:[%s338 + $0x60] sm:$0xf]
        %v387 = vld [vmem:[%s338 + $0x64] sm:$0xf]
        %v388 = vld [vmem:[%s338 + $0x68] sm:$0xf]
        %v389 = vld [vmem:[%s338 + $0x6c] sm:$0xf]
        %v390 = vld [vmem:[%s338 + $0x70] sm:$0xf]
        %v391 = vld [vmem:[%s338 + $0x74] sm:$0xf]
        %v392 = vld [vmem:[%s338 + $0x78] sm:$0xf]
        %v393 = vld [vmem:[%s338 + $0x7c] sm:$0xf]
        %v394 = vunpack.c.l.bf16 %v362
        %v395 = vunpack.c.l.bf16 %v363
        %v396 = vunpack.c.l.bf16 %v364
        %v397 = vunpack.c.l.bf16 %v365
        %v398 = vunpack.c.l.bf16 %v366
        %v399 = vunpack.c.l.bf16 %v367
        %v400 = vunpack.c.l.bf16 %v368
        %v401 = vunpack.c.l.bf16 %v369
        %v402 = vunpack.c.l.bf16 %v370
        %v403 = vunpack.c.l.bf16 %v371
        %v404 = vunpack.c.l.bf16 %v372
        %v405 = vunpack.c.l.bf16 %v373
        %v406 = vunpack.c.l.bf16 %v374
        %v407 = vunpack.c.l.bf16 %v375
        %v408 = vunpack.c.l.bf16 %v376
        %v409 = vunpack.c.l.bf16 %v377
        %v410 = vunpack.c.l.bf16 %v378
        %v411 = vunpack.c.l.bf16 %v379
        %v412 = vunpack.c.l.bf16 %v380
        %v413 = vunpack.c.l.bf16 %v381
        %v414 = vunpack.c.l.bf16 %v382
        %v415 = vunpack.c.l.bf16 %v383
        %v416 = vunpack.c.l.bf16 %v384
        %v417 = vunpack.c.l.bf16 %v385
        %v418 = vunpack.c.l.bf16 %v386
        %v419 = vunpack.c.l.bf16 %v387
        %v420 = vunpack.c.l.bf16 %v388
        %v421 = vunpack.c.l.bf16 %v389
        %v422 = vunpack.c.l.bf16 %v390
        %v423 = vunpack.c.l.bf16 %v391
        %v424 = vunpack.c.l.bf16 %v392
        %v425 = vunpack.c.l.bf16 %v393
        %v426 = vld [vmem:[%s1] sm:$0xff]
        %v427 = vld [vmem:[%s1 + $0x8] sm:$0xff]
        %v428 = vld [vmem:[%s1 + $0x10] sm:$0xff]
        %v429 = vld [vmem:[%s1 + $0x18] sm:$0xff]
        %v430 = vld [vmem:[%s1 + $0x20] sm:$0xff]
        %v431 = vld [vmem:[%s1 + $0x28] sm:$0xff]
        %v432 = vld [vmem:[%s1 + $0x30] sm:$0xff]
        %v433 = vld [vmem:[%s1 + $0x38] sm:$0xff]
        %v434 = vld [vmem:[%s1 + $0x40] sm:$0xff]
        %v435 = vld [vmem:[%s1 + $0x48] sm:$0xff]
        %v436 = vld [vmem:[%s1 + $0x50] sm:$0xff]
        %v437 = vld [vmem:[%s1 + $0x58] sm:$0xff]
        %v438 = vld [vmem:[%s1 + $0x60] sm:$0xff]
        %v439 = vld [vmem:[%s1 + $0x68] sm:$0xff]
        %v440 = vld [vmem:[%s1 + $0x70] sm:$0xff]
        %v441 = vld [vmem:[%s1 + $0x78] sm:$0xff]
        %v442 = vld [vmem:[%s1 + $0x80] sm:$0xff]
        %v443 = vld [vmem:[%s1 + $0x88] sm:$0xff]
        %v444 = vld [vmem:[%s1 + $0x90] sm:$0xff]
        %v445 = vld [vmem:[%s1 + $0x98] sm:$0xff]
        %v446 = vld [vmem:[%s1 + $0xa0] sm:$0xff]
        %v447 = vld [vmem:[%s1 + $0xa8] sm:$0xff]
        %v448 = vld [vmem:[%s1 + $0xb0] sm:$0xff]
        %v449 = vld [vmem:[%s1 + $0xb8] sm:$0xff]
        %v450 = vld [vmem:[%s1 + $0xc0] sm:$0xff]
        %v451 = vld [vmem:[%s1 + $0xc8] sm:$0xff]
        %v452 = vld [vmem:[%s1 + $0xd0] sm:$0xff]
        %v453 = vld [vmem:[%s1 + $0xd8] sm:$0xff]
        %v454 = vld [vmem:[%s1 + $0xe0] sm:$0xff]
        %v455 = vld [vmem:[%s1 + $0xe8] sm:$0xff]
        %v456 = vld [vmem:[%s1 + $0xf0] sm:$0xff]
        %v457 = vld [vmem:[%s1 + $0xf8] sm:$0xff]
        %459 = vset.pattern.permute.xlu0 0
        %460 = vperm.xlu0 %459, %v426
        %v461 = vpop.permute.xlu0 %460
        %464 = vset.pattern.permute.xlu0 0
        %465 = vperm.xlu0 %464, %v427
        %v466 = vpop.permute.xlu0 %465
        %469 = vset.pattern.permute.xlu0 0
        %470 = vperm.xlu0 %469, %v428
        %v471 = vpop.permute.xlu0 %470
        %474 = vset.pattern.permute.xlu0 0
        %475 = vperm.xlu0 %474, %v429
        %v476 = vpop.permute.xlu0 %475
        %479 = vset.pattern.permute.xlu0 0
        %480 = vperm.xlu0 %479, %v430
        %v481 = vpop.permute.xlu0 %480
        %484 = vset.pattern.permute.xlu0 0
        %485 = vperm.xlu0 %484, %v431
        %v486 = vpop.permute.xlu0 %485
        %489 = vset.pattern.permute.xlu0 0
        %490 = vperm.xlu0 %489, %v432
        %v491 = vpop.permute.xlu0 %490
        %494 = vset.pattern.permute.xlu0 0
        %495 = vperm.xlu0 %494, %v433
        %v496 = vpop.permute.xlu0 %495
        %499 = vset.pattern.permute.xlu0 0
        %500 = vperm.xlu0 %499, %v434
        %v501 = vpop.permute.xlu0 %500
        %504 = vset.pattern.permute.xlu0 0
        %505 = vperm.xlu0 %504, %v435
        %v506 = vpop.permute.xlu0 %505
        %509 = vset.pattern.permute.xlu0 0
        %510 = vperm.xlu0 %509, %v436
        %v511 = vpop.permute.xlu0 %510
        %514 = vset.pattern.permute.xlu0 0
        %515 = vperm.xlu0 %514, %v437
        %v516 = vpop.permute.xlu0 %515
        %519 = vset.pattern.permute.xlu0 0
        %520 = vperm.xlu0 %519, %v438
        %v521 = vpop.permute.xlu0 %520
        %524 = vset.pattern.permute.xlu0 0
        %525 = vperm.xlu0 %524, %v439
        %v526 = vpop.permute.xlu0 %525
        %529 = vset.pattern.permute.xlu0 0
        %530 = vperm.xlu0 %529, %v440
        %v531 = vpop.permute.xlu0 %530
        %534 = vset.pattern.permute.xlu0 0
        %535 = vperm.xlu0 %534, %v441
        %v536 = vpop.permute.xlu0 %535
        %539 = vset.pattern.permute.xlu0 0
        %540 = vperm.xlu0 %539, %v442
        %v541 = vpop.permute.xlu0 %540
        %544 = vset.pattern.permute.xlu0 0
        %545 = vperm.xlu0 %544, %v443
        %v546 = vpop.permute.xlu0 %545
        %549 = vset.pattern.permute.xlu0 0
        %550 = vperm.xlu0 %549, %v444
        %v551 = vpop.permute.xlu0 %550
        %554 = vset.pattern.permute.xlu0 0
        %555 = vperm.xlu0 %554, %v445
        %v556 = vpop.permute.xlu0 %555
        %559 = vset.pattern.permute.xlu0 0
        %560 = vperm.xlu0 %559, %v446
        %v561 = vpop.permute.xlu0 %560
        %564 = vset.pattern.permute.xlu0 0
        %565 = vperm.xlu0 %564, %v447
        %v566 = vpop.permute.xlu0 %565
        %569 = vset.pattern.permute.xlu0 0
        %570 = vperm.xlu0 %569, %v448
        %v571 = vpop.permute.xlu0 %570
        %574 = vset.pattern.permute.xlu0 0
        %575 = vperm.xlu0 %574, %v449
        %v576 = vpop.permute.xlu0 %575
        %579 = vset.pattern.permute.xlu0 0
        %580 = vperm.xlu0 %579, %v450
        %v581 = vpop.permute.xlu0 %580
        %584 = vset.pattern.permute.xlu0 0
        %585 = vperm.xlu0 %584, %v451
        %v586 = vpop.permute.xlu0 %585
        %589 = vset.pattern.permute.xlu0 0
        %590 = vperm.xlu0 %589, %v452
        %v591 = vpop.permute.xlu0 %590
        %594 = vset.pattern.permute.xlu0 0
        %595 = vperm.xlu0 %594, %v453
        %v596 = vpop.permute.xlu0 %595
        %599 = vset.pattern.permute.xlu0 0
        %600 = vperm.xlu0 %599, %v454
        %v601 = vpop.permute.xlu0 %600
        %604 = vset.pattern.permute.xlu0 0
        %605 = vperm.xlu0 %604, %v455
        %v606 = vpop.permute.xlu0 %605
        %609 = vset.pattern.permute.xlu0 0
        %610 = vperm.xlu0 %609, %v456
        %v611 = vpop.permute.xlu0 %610
        %614 = vset.pattern.permute.xlu0 0
        %615 = vperm.xlu0 %614, %v457
        %v616 = vpop.permute.xlu0 %615
        %v618 = vadd.f32 %v394, %v461
        %v619 = vadd.f32 %v395, %v466
        %v620 = vadd.f32 %v396, %v471
        %v621 = vadd.f32 %v397, %v476
        %v622 = vadd.f32 %v398, %v481
        %v623 = vadd.f32 %v399, %v486
        %v624 = vadd.f32 %v400, %v491
        %v625 = vadd.f32 %v401, %v496
        %v626 = vadd.f32 %v402, %v501
        %v627 = vadd.f32 %v403, %v506
        %v628 = vadd.f32 %v404, %v511
        %v629 = vadd.f32 %v405, %v516
        %v630 = vadd.f32 %v406, %v521
        %v631 = vadd.f32 %v407, %v526
        %v632 = vadd.f32 %v408, %v531
        %v633 = vadd.f32 %v409, %v536
        %v634 = vadd.f32 %v410, %v541
        %v635 = vadd.f32 %v411, %v546
        %v636 = vadd.f32 %v412, %v551
        %v637 = vadd.f32 %v413, %v556
        %v638 = vadd.f32 %v414, %v561
        %v639 = vadd.f32 %v415, %v566
        %v640 = vadd.f32 %v416, %v571
        %v641 = vadd.f32 %v417, %v576
        %v642 = vadd.f32 %v418, %v581
        %v643 = vadd.f32 %v419, %v586
        %v644 = vadd.f32 %v420, %v591
        %v645 = vadd.f32 %v421, %v596
        %v646 = vadd.f32 %v422, %v601
        %v647 = vadd.f32 %v423, %v606
        %v648 = vadd.f32 %v424, %v611
        %v649 = vadd.f32 %v425, %v616
        %v650 = vmax.f32 %v618, 0.0
        %v651 = vmax.f32 %v619, 0.0
        %v652 = vmax.f32 %v620, 0.0
        %v653 = vmax.f32 %v621, 0.0
        %v654 = vmax.f32 %v622, 0.0
        %v655 = vmax.f32 %v623, 0.0
        %v656 = vmax.f32 %v624, 0.0
        %v657 = vmax.f32 %v625, 0.0
        %v658 = vmax.f32 %v626, 0.0
        %v659 = vmax.f32 %v627, 0.0
        %v660 = vmax.f32 %v628, 0.0
        %v661 = vmax.f32 %v629, 0.0
        %v662 = vmax.f32 %v630, 0.0
        %v663 = vmax.f32 %v631, 0.0
        %v664 = vmax.f32 %v632, 0.0
        %v665 = vmax.f32 %v633, 0.0
        %v666 = vmax.f32 %v634, 0.0
        %v667 = vmax.f32 %v635, 0.0
        %v668 = vmax.f32 %v636, 0.0
        %v669 = vmax.f32 %v637, 0.0
        %v670 = vmax.f32 %v638, 0.0
        %v671 = vmax.f32 %v639, 0.0
        %v672 = vmax.f32 %v640, 0.0
        %v673 = vmax.f32 %v641, 0.0
        %v674 = vmax.f32 %v642, 0.0
        %v675 = vmax.f32 %v643, 0.0
        %v676 = vmax.f32 %v644, 0.0
        %v677 = vmax.f32 %v645, 0.0
        %v678 = vmax.f32 %v646, 0.0
        %v679 = vmax.f32 %v647, 0.0
        %v680 = vmax.f32 %v648, 0.0
        %v681 = vmax.f32 %v649, 0.0
        %v682 = vld [vmem:[%s2] sm:$0xff]
        %v683 = vld [vmem:[%s2 + $0x8] sm:$0xff]
        %v684 = vld [vmem:[%s2 + $0x10] sm:$0xff]
        %v685 = vld [vmem:[%s2 + $0x18] sm:$0xff]
        %v686 = vld [vmem:[%s2 + $0x20] sm:$0xff]
        %v687 = vld [vmem:[%s2 + $0x28] sm:$0xff]
        %v688 = vld [vmem:[%s2 + $0x30] sm:$0xff]
        %v689 = vld [vmem:[%s2 + $0x38] sm:$0xff]
        %v690 = vld [vmem:[%s2 + $0x40] sm:$0xff]
        %v691 = vld [vmem:[%s2 + $0x48] sm:$0xff]
        %v692 = vld [vmem:[%s2 + $0x50] sm:$0xff]
        %v693 = vld [vmem:[%s2 + $0x58] sm:$0xff]
        %v694 = vld [vmem:[%s2 + $0x60] sm:$0xff]
        %v695 = vld [vmem:[%s2 + $0x68] sm:$0xff]
        %v696 = vld [vmem:[%s2 + $0x70] sm:$0xff]
        %v697 = vld [vmem:[%s2 + $0x78] sm:$0xff]
        %v698 = vld [vmem:[%s2 + $0x80] sm:$0xff]
        %v699 = vld [vmem:[%s2 + $0x88] sm:$0xff]
        %v700 = vld [vmem:[%s2 + $0x90] sm:$0xff]
        %v701 = vld [vmem:[%s2 + $0x98] sm:$0xff]
        %v702 = vld [vmem:[%s2 + $0xa0] sm:$0xff]
        %v703 = vld [vmem:[%s2 + $0xa8] sm:$0xff]
        %v704 = vld [vmem:[%s2 + $0xb0] sm:$0xff]
        %v705 = vld [vmem:[%s2 + $0xb8] sm:$0xff]
        %v706 = vld [vmem:[%s2 + $0xc0] sm:$0xff]
        %v707 = vld [vmem:[%s2 + $0xc8] sm:$0xff]
        %v708 = vld [vmem:[%s2 + $0xd0] sm:$0xff]
        %v709 = vld [vmem:[%s2 + $0xd8] sm:$0xff]
        %v710 = vld [vmem:[%s2 + $0xe0] sm:$0xff]
        %v711 = vld [vmem:[%s2 + $0xe8] sm:$0xff]
        %v712 = vld [vmem:[%s2 + $0xf0] sm:$0xff]
        %v713 = vld [vmem:[%s2 + $0xf8] sm:$0xff]
        %715 = vset.pattern.permute.xlu0 0
        %716 = vperm.xlu0 %715, %v682
        %v717 = vpop.permute.xlu0 %716
        %720 = vset.pattern.permute.xlu0 0
        %721 = vperm.xlu0 %720, %v683
        %v722 = vpop.permute.xlu0 %721
        %725 = vset.pattern.permute.xlu0 0
        %726 = vperm.xlu0 %725, %v684
        %v727 = vpop.permute.xlu0 %726
        %730 = vset.pattern.permute.xlu0 0
        %731 = vperm.xlu0 %730, %v685
        %v732 = vpop.permute.xlu0 %731
        %735 = vset.pattern.permute.xlu0 0
        %736 = vperm.xlu0 %735, %v686
        %v737 = vpop.permute.xlu0 %736
        %740 = vset.pattern.permute.xlu0 0
        %741 = vperm.xlu0 %740, %v687
        %v742 = vpop.permute.xlu0 %741
        %745 = vset.pattern.permute.xlu0 0
        %746 = vperm.xlu0 %745, %v688
        %v747 = vpop.permute.xlu0 %746
        %750 = vset.pattern.permute.xlu0 0
        %751 = vperm.xlu0 %750, %v689
        %v752 = vpop.permute.xlu0 %751
        %755 = vset.pattern.permute.xlu0 0
        %756 = vperm.xlu0 %755, %v690
        %v757 = vpop.permute.xlu0 %756
        %760 = vset.pattern.permute.xlu0 0
        %761 = vperm.xlu0 %760, %v691
        %v762 = vpop.permute.xlu0 %761
        %765 = vset.pattern.permute.xlu0 0
        %766 = vperm.xlu0 %765, %v692
        %v767 = vpop.permute.xlu0 %766
        %770 = vset.pattern.permute.xlu0 0
        %771 = vperm.xlu0 %770, %v693
        %v772 = vpop.permute.xlu0 %771
        %775 = vset.pattern.permute.xlu0 0
        %776 = vperm.xlu0 %775, %v694
        %v777 = vpop.permute.xlu0 %776
        %780 = vset.pattern.permute.xlu0 0
        %781 = vperm.xlu0 %780, %v695
        %v782 = vpop.permute.xlu0 %781
        %785 = vset.pattern.permute.xlu0 0
        %786 = vperm.xlu0 %785, %v696
        %v787 = vpop.permute.xlu0 %786
        %790 = vset.pattern.permute.xlu0 0
        %791 = vperm.xlu0 %790, %v697
        %v792 = vpop.permute.xlu0 %791
        %795 = vset.pattern.permute.xlu0 0
        %796 = vperm.xlu0 %795, %v698
        %v797 = vpop.permute.xlu0 %796
        %800 = vset.pattern.permute.xlu0 0
        %801 = vperm.xlu0 %800, %v699
        %v802 = vpop.permute.xlu0 %801
        %805 = vset.pattern.permute.xlu0 0
        %806 = vperm.xlu0 %805, %v700
        %v807 = vpop.permute.xlu0 %806
        %810 = vset.pattern.permute.xlu0 0
        %811 = vperm.xlu0 %810, %v701
        %v812 = vpop.permute.xlu0 %811
        %815 = vset.pattern.permute.xlu0 0
        %816 = vperm.xlu0 %815, %v702
        %v817 = vpop.permute.xlu0 %816
        %820 = vset.pattern.permute.xlu0 0
        %821 = vperm.xlu0 %820, %v703
        %v822 = vpop.permute.xlu0 %821
        %825 = vset.pattern.permute.xlu0 0
        %826 = vperm.xlu0 %825, %v704
        %v827 = vpop.permute.xlu0 %826
        %830 = vset.pattern.permute.xlu0 0
        %831 = vperm.xlu0 %830, %v705
        %v832 = vpop.permute.xlu0 %831
        %835 = vset.pattern.permute.xlu0 0
        %836 = vperm.xlu0 %835, %v706
        %v837 = vpop.permute.xlu0 %836
        %840 = vset.pattern.permute.xlu0 0
        %841 = vperm.xlu0 %840, %v707
        %v842 = vpop.permute.xlu0 %841
        %845 = vset.pattern.permute.xlu0 0
        %846 = vperm.xlu0 %845, %v708
        %v847 = vpop.permute.xlu0 %846
        %850 = vset.pattern.permute.xlu0 0
        %851 = vperm.xlu0 %850, %v709
        %v852 = vpop.permute.xlu0 %851
        %855 = vset.pattern.permute.xlu0 0
        %856 = vperm.xlu0 %855, %v710
        %v857 = vpop.permute.xlu0 %856
        %860 = vset.pattern.permute.xlu0 0
        %861 = vperm.xlu0 %860, %v711
        %v862 = vpop.permute.xlu0 %861
        %865 = vset.pattern.permute.xlu0 0
        %866 = vperm.xlu0 %865, %v712
        %v867 = vpop.permute.xlu0 %866
        %870 = vset.pattern.permute.xlu0 0
        %871 = vperm.xlu0 %870, %v713
        %v872 = vpop.permute.xlu0 %871
        %v874 = vmul.f32 %v650, %v717
        %v875 = vmul.f32 %v651, %v722
        %v876 = vmul.f32 %v652, %v727
        %v877 = vmul.f32 %v653, %v732
        %v878 = vmul.f32 %v654, %v737
        %v879 = vmul.f32 %v655, %v742
        %v880 = vmul.f32 %v656, %v747
        %v881 = vmul.f32 %v657, %v752
        %v882 = vmul.f32 %v658, %v757
        %v883 = vmul.f32 %v659, %v762
        %v884 = vmul.f32 %v660, %v767
        %v885 = vmul.f32 %v661, %v772
        %v886 = vmul.f32 %v662, %v777
        %v887 = vmul.f32 %v663, %v782
        %v888 = vmul.f32 %v664, %v787
        %v889 = vmul.f32 %v665, %v792
        %v890 = vmul.f32 %v666, %v797
        %v891 = vmul.f32 %v667, %v802
        %v892 = vmul.f32 %v668, %v807
        %v893 = vmul.f32 %v669, %v812
        %v894 = vmul.f32 %v670, %v817
        %v895 = vmul.f32 %v671, %v822
        %v896 = vmul.f32 %v672, %v827
        %v897 = vmul.f32 %v673, %v832
        %v898 = vmul.f32 %v674, %v837
        %v899 = vmul.f32 %v675, %v842
        %v900 = vmul.f32 %v676, %v847
        %v901 = vmul.f32 %v677, %v852
        %v902 = vmul.f32 %v678, %v857
        %v903 = vmul.f32 %v679, %v862
        %v904 = vmul.f32 %v680, %v867
        %v905 = vmul.f32 %v681, %v872
        %v906 = vadd.f32 %v874, %v875
        %v907 = vadd.f32 %v906, %v876
        %v908 = vadd.f32 %v907, %v877
        %v909 = vadd.f32 %v908, %v878
        %v910 = vadd.f32 %v909, %v879
        %v911 = vadd.f32 %v910, %v880
        %v912 = vadd.f32 %v911, %v881
        %v913 = vadd.f32 %v912, %v882
        %v914 = vadd.f32 %v913, %v883
        %v915 = vadd.f32 %v914, %v884
        %v916 = vadd.f32 %v915, %v885
        %v917 = vadd.f32 %v916, %v886
        %v918 = vadd.f32 %v917, %v887
        %v919 = vadd.f32 %v918, %v888
        %v920 = vadd.f32 %v919, %v889
        %v921 = vadd.f32 %v920, %v890
        %v922 = vadd.f32 %v921, %v891
        %v923 = vadd.f32 %v922, %v892
        %v924 = vadd.f32 %v923, %v893
        %v925 = vadd.f32 %v924, %v894
        %v926 = vadd.f32 %v925, %v895
        %v927 = vadd.f32 %v926, %v896
        %v928 = vadd.f32 %v927, %v897
        %v929 = vadd.f32 %v928, %v898
        %v930 = vadd.f32 %v929, %v899
        %v931 = vadd.f32 %v930, %v900
        %v932 = vadd.f32 %v931, %v901
        %v933 = vadd.f32 %v932, %v902
        %v934 = vadd.f32 %v933, %v903
        %v935 = vadd.f32 %v934, %v904
        %v936 = vadd.f32 %v935, %v905
        %v937 = vrot.slane %v936, 4
        %v938 = vadd.f32 %v936, %v937
        %v939 = vrot.slane %v938, 2
        %v940 = vadd.f32 %v938, %v939
        %v941 = vrot.slane %v940, 1
        %v942 = vadd.f32 %v940, %v941
        %s943 = sld [smem:[#allocation2]]
        %v944 = vstv %s943
        %v945 = vadd.f32 %v942, %v944
        %946 = vst [vmem:[%s361] sm:$0x1] %v945
        %p947 = scmp.lt.s32.totalorder %s16, 3
        %s948 = scalar_select %p947, %s16, 3
        %s949 = scalar_lea.vmem %s4, %s948
        // Predicated region
        $region78: #{sdf_decoder_forward.3} parent=72 // pred_check
          %p950 = pneg %p123
        $region79: #{sdf_decoder_forward.3} parent=72 // pred_check_branch
          %952 = sbr.rel (%p950) target = $region81
        $region80: #{sdf_decoder_forward.3} parent=72 // pred_region
          _
        $region81: #{sdf_decoder_forward.3} parent=72 // pred_fallthru
          _
      $region73: #{sdf_decoder_forward.3} parent=5 // pred_fallthru
        _
      %p953 = scmp.le.s32.totalorder 2, %s11
      // Predicated region
      $region82: #{sdf_decoder_forward.3} parent=5 // pred_check
        %p954 = pneg %p953
      $region83: #{sdf_decoder_forward.3} parent=5 // pred_check_branch
        %956 = sbr.rel (%p954) target = $region85
      $region84: #{sdf_decoder_forward.3} parent=5 // pred_region
        %s957 = ssub.s32 %s11, 2
        // Predicated region
        $region86: #{sdf_decoder_forward.3} parent=84 // pred_check
          %p958 = pneg %p129
        $region87: #{sdf_decoder_forward.3} parent=84 // pred_check_branch
          %960 = sbr.rel (%p958) target = $region89
        $region88: #{sdf_decoder_forward.3} parent=84 // pred_region
          %p961 = scmp.lt.s32.totalorder %s17, 3
          %s962 = scalar_select %p961, %s17, 3
          %s963 = scalar_lea.vmem %s4, %s962
        $region89: #{sdf_decoder_forward.3} parent=84 // pred_fallthru
          _
      $region85: #{sdf_decoder_forward.3} parent=5 // pred_fallthru
        _
    $region6: #{sdf_decoder_forward.3} parent=1 // loop_footer
      %s15 = sadd.s32 1, %s11
    $region7: #{sdf_decoder_forward.3} parent=1 // loop_footer_branch
      %10 = sbr.rel target = $region3
    $region8: #{sdf_decoder_forward.3} parent=1 // loop_exit
      _

// kernel: sdf_decoder_forward.2
$region0: #{sdf_decoder_forward.2}
  #allocation0 [shape = 'u32[]', space=smem, size = 0x4, offset = 0x4, fixed_abs, tag = 'smem constant byte address 0x4 - core index']
  #allocation1 [shape = 'u32[144,128]{1,0:T(1,128)}', space=vmem, size = 0x12000, scoped, tag = 'internal scratch']
  %s0 = inlined_call_operand.vmem [shape: bf16[16,512], index: 0, kind: input, shape index: {}]
  %s1 = inlined_call_operand.vmem [shape: bf16[512,16], index: 1, kind: input, shape index: {}]
  %s2 = inlined_call_operand.vmem [shape: f32[512,1], index: 2, kind: input, shape index: {}]
  %s3 = inlined_call_operand.vmem [shape: bf16[256,512], index: 3, kind: input, shape index: {}]
  %s4 = inlined_call_operand.vmem [shape: bf16[256,512], index: 4, kind: output, shape index: {0}]
  %s5 = inlined_call_operand.vmem [shape: f32[512,1], index: 5, kind: output, shape index: {1}]
  %s6 = inlined_call_operand.vmem [shape: f32[512,1], index: 6, kind: output, shape index: {2}]
  %7 = xla_tuple %s4, %s5, %s6
  %s8 = sld [smem:[#allocation0]]
  $region147: #{sdf_decoder_forward.2} parent=0
    _
  %s10 = ssub.s32 1, %s8
  %s11 = scalar_select 0, %s10, %s8
  $region1: #{sdf_decoder_forward.2} parent=0
    #allocation2 [shape = 'u8[8192]{0}', space=vmem, size = 0x2000, scoped, tag = 'input window, operand 0']
    #allocation3 [shape = 'u8[131072]{0}', space=vmem, size = 0x20000, scoped, tag = 'output window, operand 0']
    loop: start=0, step=1, limit=6
    $region2: #{sdf_decoder_forward.2} parent=1 // loop_pre_header
      _
    $region3: #{sdf_decoder_forward.2} parent=1 // loop_header
      %s13 = sphi 0, %s17
      %p14 = scmp.ge.s32.totalorder %s13, 6
      %s20 = sphi 0, %s32
      %s21 = sphi 0, %s28
      %s22 = sphi 0, %s20
      %s23 = sphi 0, %s21
      %s24 = sphi 0, %s22
      %s25 = sphi 0, %s23
      %s39 = sphi 0, %s41
      %s42 = sphi 0, %s39
      %s43 = sphi 0, %s42
      %s59 = sphi 0, %s43
      %s63 = sphi 0, %s63
      %s65 = sphi 0, %s63
      %s66 = sphi 0, %s65
      %s80 = sphi 0, %s66
      %s84 = sphi 0, %s84
      %s86 = sphi 0, %s84
      %s87 = sphi 0, %s86
      %s101 = sphi 0, %s87
      %s105 = sphi 0, %s105
      %s107 = sphi 0, %s105
      %s108 = sphi 0, %s107
      %s122 = sphi 0, %s108
      %s132 = sphi 0, %s134
      %s135 = sphi 0, %s132
      %s136 = sphi 0, %s135
      %s152 = sphi 0, %s136
      %s158 = sphi 0, %s160
      %s161 = sphi 0, %s158
      %s162 = sphi 0, %s161
      %s178 = sphi 0, %s162
      %s184 = sphi 0, %s186
      %s187 = sphi 0, %s184
      %s188 = sphi 0, %s187
      %s204 = sphi 0, %s188
    $region4: #{sdf_decoder_forward.2} parent=1 // loop_header_branch
      %16 = sbr.rel (%p14) target = $region8
    $region5: #{sdf_decoder_forward.2} parent=1 // loop_body
      %s18 = ssub.s32 %s13, 1
      %s19 = ssub.s32 %s13, 2
      %s26 = sadd.s32 1, %s21
      %p27 = scmp.ge.s32.totalorder %s26, 2
      %s28 = scalar_select %p27, 0, %s26
      %s29 = sadd.s32 1, %s20
      %s30 = scalar_select %p27, %s29, %s20
      %p31 = scmp.ge.s32.totalorder %s30, 2
      %s32 = scalar_select %p31, 0, %s30
      %s33 = smul.u32 %s20, 2
      %s34 = sadd.s32 %s33, %s21
      %s35 = smul.u32 %s32, 2
      %s36 = sadd.s32 %s35, %s28
      %s37 = ssub.s32 %s34, %s36
      %p38 = scmp.eq.s32.totalorder %s37, 0
      %s40 = sadd.s32 %s39, 1
      %s41 = scalar_select %p38, %s39, %s40
      %p44 = pneg %p38
      %p45 = scmp.eq.s32.totalorder %s13, 3
      %p46 = por %p44, %p45
      %p47 = scmp.ne.s32.totalorder %s39, %s42
      %p48 = scmp.eq.s32.totalorder %s13, 0
      %p49 = por %p47, %p48
      %p50 = scmp.ne.s32.totalorder %s39, %s42
      %p51 = scmp.eq.s32.totalorder %s18, 3
      %p52 = por %p50, %p51
      %p53 = scmp.ne.s32.totalorder %s42, %s43
      %p54 = scmp.eq.s32.totalorder %s18, 0
      %p55 = por %p53, %p54
      %p56 = scmp.ne.s32.totalorder %s42, %s43
      %p57 = scmp.eq.s32.totalorder %s19, 3
      %p58 = por %p56, %p57
      %p60 = scmp.ne.s32.totalorder %s43, %s59
      %p61 = scmp.eq.s32.totalorder %s19, 0
      %p62 = por %p60, %p61
      %s64 = sadd.s32 %s63, 1
      %p67 = scmp.eq.s32.totalorder %s13, 3
      %p68 = scmp.ne.s32.totalorder %s63, %s65
      %p69 = scmp.eq.s32.totalorder %s13, 0
      %p70 = por %p68, %p69
      %p71 = scmp.ne.s32.totalorder %s63, %s65
      %p72 = scmp.eq.s32.totalorder %s18, 3
      %p73 = por %p71, %p72
      %p74 = scmp.ne.s32.totalorder %s65, %s66
      %p75 = scmp.eq.s32.totalorder %s18, 0
      %p76 = por %p74, %p75
      %p77 = scmp.ne.s32.totalorder %s65, %s66
      %p78 = scmp.eq.s32.totalorder %s19, 3
      %p79 = por %p77, %p78
      %p81 = scmp.ne.s32.totalorder %s66, %s80
      %p82 = scmp.eq.s32.totalorder %s19, 0
      %p83 = por %p81, %p82
      %s85 = sadd.s32 %s84, 1
      %p88 = scmp.eq.s32.totalorder %s13, 3
      %p89 = scmp.ne.s32.totalorder %s84, %s86
      %p90 = scmp.eq.s32.totalorder %s13, 0
      %p91 = por %p89, %p90
      %p92 = scmp.ne.s32.totalorder %s84, %s86
      %p93 = scmp.eq.s32.totalorder %s18, 3
      %p94 = por %p92, %p93
      %p95 = scmp.ne.s32.totalorder %s86, %s87
      %p96 = scmp.eq.s32.totalorder %s18, 0
      %p97 = por %p95, %p96
      %p98 = scmp.ne.s32.totalorder %s86, %s87
      %p99 = scmp.eq.s32.totalorder %s19, 3
      %p100 = por %p98, %p99
      %p102 = scmp.ne.s32.totalorder %s87, %s101
      %p103 = scmp.eq.s32.totalorder %s19, 0
      %p104 = por %p102, %p103
      %s106 = sadd.s32 %s105, 1
      %p109 = scmp.eq.s32.totalorder %s13, 3
      %p110 = scmp.ne.s32.totalorder %s105, %s107
      %p111 = scmp.eq.s32.totalorder %s13, 0
      %p112 = por %p110, %p111
      %p113 = scmp.ne.s32.totalorder %s105, %s107
      %p114 = scmp.eq.s32.totalorder %s18, 3
      %p115 = por %p113, %p114
      %p116 = scmp.ne.s32.totalorder %s107, %s108
      %p117 = scmp.eq.s32.totalorder %s18, 0
      %p118 = por %p116, %p117
      %p119 = scmp.ne.s32.totalorder %s107, %s108
      %p120 = scmp.eq.s32.totalorder %s19, 3
      %p121 = por %p119, %p120
      %p123 = scmp.ne.s32.totalorder %s108, %s122
      %p124 = scmp.eq.s32.totalorder %s19, 0
      %p125 = por %p123, %p124
      %s126 = smul.u32 %s20, 2
      %s127 = sadd.s32 %s126, %s21
      %s128 = smul.u32 %s32, 2
      %s129 = sadd.s32 %s128, %s28
      %s130 = ssub.s32 %s127, %s129
      %p131 = scmp.eq.s32.totalorder %s130, 0
      %s133 = sadd.s32 %s132, 1
      %s134 = scalar_select %p131, %s132, %s133
      %p137 = pneg %p131
      %p138 = scmp.eq.s32.totalorder %s13, 3
      %p139 = por %p137, %p138
      %p140 = scmp.ne.s32.totalorder %s132, %s135
      %p141 = scmp.eq.s32.totalorder %s13, 0
      %p142 = por %p140, %p141
      %p143 = scmp.ne.s32.totalorder %s132, %s135
      %p144 = scmp.eq.s32.totalorder %s18, 3
      %p145 = por %p143, %p144
      %p146 = scmp.ne.s32.totalorder %s135, %s136
      %p147 = scmp.eq.s32.totalorder %s18, 0
      %p148 = por %p146, %p147
      %p149 = scmp.ne.s32.totalorder %s135, %s136
      %p150 = scmp.eq.s32.totalorder %s19, 3
      %p151 = por %p149, %p150
      %p153 = scmp.ne.s32.totalorder %s136, %s152
      %p154 = scmp.eq.s32.totalorder %s19, 0
      %p155 = por %p153, %p154
      %s156 = ssub.s32 %s20, %s32
      %p157 = scmp.eq.s32.totalorder %s156, 0
      %s159 = sadd.s32 %s158, 1
      %s160 = scalar_select %p157, %s158, %s159
      %p163 = pneg %p157
      %p164 = scmp.eq.s32.totalorder %s13, 3
      %p165 = por %p163, %p164
      %p166 = scmp.ne.s32.totalorder %s158, %s161
      %p167 = scmp.eq.s32.totalorder %s13, 0
      %p168 = por %p166, %p167
      %p169 = scmp.ne.s32.totalorder %s158, %s161
      %p170 = scmp.eq.s32.totalorder %s18, 3
      %p171 = por %p169, %p170
      %p172 = scmp.ne.s32.totalorder %s161, %s162
      %p173 = scmp.eq.s32.totalorder %s18, 0
      %p174 = por %p172, %p173
      %p175 = scmp.ne.s32.totalorder %s161, %s162
      %p176 = scmp.eq.s32.totalorder %s19, 3
      %p177 = por %p175, %p176
      %p179 = scmp.ne.s32.totalorder %s162, %s178
      %p180 = scmp.eq.s32.totalorder %s19, 0
      %p181 = por %p179, %p180
      %s182 = ssub.s32 %s20, %s32
      %p183 = scmp.eq.s32.totalorder %s182, 0
      %s185 = sadd.s32 %s184, 1
      %s186 = scalar_select %p183, %s184, %s185
      %p189 = pneg %p183
      %p190 = scmp.eq.s32.totalorder %s13, 3
      %p191 = por %p189, %p190
      %p192 = scmp.ne.s32.totalorder %s184, %s187
      %p193 = scmp.eq.s32.totalorder %s13, 0
      %p194 = por %p192, %p193
      %p195 = scmp.ne.s32.totalorder %s184, %s187
      %p196 = scmp.eq.s32.totalorder %s18, 3
      %p197 = por %p195, %p196
      %p198 = scmp.ne.s32.totalorder %s187, %s188
      %p199 = scmp.eq.s32.totalorder %s18, 0
      %p200 = por %p198, %p199
      %p201 = scmp.ne.s32.totalorder %s187, %s188
      %p202 = scmp.eq.s32.totalorder %s19, 3
      %p203 = por %p201, %p202
      %p205 = scmp.ne.s32.totalorder %s188, %s204
      %p206 = scmp.eq.s32.totalorder %s19, 0
      %p207 = por %p205, %p206
      %p208 = scmp.le.s32.totalorder 1, %s13
      %p209 = scmp.lt.s32.totalorder %s13, 5
      %p210 = pnand %p208, %p209
      %p211 = pneg %p210
      // Predicated region
      $region9: #{sdf_decoder_forward.2} parent=5 // pred_check
        _
      $region10: #{sdf_decoder_forward.2} parent=5 // pred_check_branch
        %213 = sbr.rel (%p210) target = $region12
      $region11: #{sdf_decoder_forward.2} parent=5 // pred_region
        %s214 = ssub.s32 %s13, 1
        // Predicated region
        $region13: #{sdf_decoder_forward.2} parent=11 // pred_check
          %p215 = pneg %p76
        $region14: #{sdf_decoder_forward.2} parent=11 // pred_check_branch
          %217 = sbr.rel (%p215) target = $region16
        $region15: #{sdf_decoder_forward.2} parent=11 // pred_region
          _
        $region16: #{sdf_decoder_forward.2} parent=11 // pred_fallthru
          _
        // Predicated region
        $region17: #{sdf_decoder_forward.2} parent=11 // pred_check
          %p218 = pneg %p97
        $region18: #{sdf_decoder_forward.2} parent=11 // pred_check_branch
          %220 = sbr.rel (%p218) target = $region20
        $region19: #{sdf_decoder_forward.2} parent=11 // pred_region
          _
        $region20: #{sdf_decoder_forward.2} parent=11 // pred_fallthru
          _
        // Predicated region
        $region21: #{sdf_decoder_forward.2} parent=11 // pred_check
          %p221 = pneg %p118
        $region22: #{sdf_decoder_forward.2} parent=11 // pred_check_branch
          %223 = sbr.rel (%p221) target = $region24
        $region23: #{sdf_decoder_forward.2} parent=11 // pred_region
          _
        $region24: #{sdf_decoder_forward.2} parent=11 // pred_fallthru
          _
      $region12: #{sdf_decoder_forward.2} parent=5 // pred_fallthru
        _
      %p224 = scmp.lt.s32.totalorder %s13, 4
      // Predicated region
      $region25: #{sdf_decoder_forward.2} parent=5 // pred_check
        %p225 = pneg %p224
      $region26: #{sdf_decoder_forward.2} parent=5 // pred_check_branch
        %227 = sbr.rel (%p225) target = $region28
      $region27: #{sdf_decoder_forward.2} parent=5 // pred_region
        // Predicated region
        $region29: #{sdf_decoder_forward.2} parent=27 // pred_check
          %p228 = pneg %p49
        $region30: #{sdf_decoder_forward.2} parent=27 // pred_check_branch
          %230 = sbr.rel (%p228) target = $region32
        $region31: #{sdf_decoder_forward.2} parent=27 // pred_region
          %s231 = sand.u32 %s39, 1
          %s232 = sand.u32 %s39, 1
          %s233 = smul.addr %s232, 8
          %s234 = scalar_lea.vmem [#allocation2], %s233
          %s235 = smul.u32 %s20, 2
          %s236 = sadd.s32 %s235, %s21
          %s237 = smul.addr %s236, 4
          %s238 = scalar_lea.vmem %s0, %s237
          // Predicated region
          $region33: #{sdf_decoder_forward.2} parent=31 // pred_check
            _
          $region34: #{sdf_decoder_forward.2} parent=31 // pred_check_branch
            %240 = sbr.rel (0) target = $region36
          $region35: #{sdf_decoder_forward.2} parent=31 // pred_region
            // Predicated region
            $region37: #{sdf_decoder_forward.2} parent=35 // pred_check
              _
            $region38: #{sdf_decoder_forward.2} parent=35 // pred_check_branch
              %242 = sbr.rel target = $region40
            $region39: #{sdf_decoder_forward.2} parent=35 // pred_region
              // Predicated region
              $region52: #{sdf_decoder_forward.2} parent=39 // pred_check
                _
              $region53: #{sdf_decoder_forward.2} parent=39 // pred_check_branch
                %260 = sbr.rel (0) target = $region55
              $region54: #{sdf_decoder_forward.2} parent=39 // pred_region
                loop: start=0, step=1, limit=1
                $region56: #{sdf_decoder_forward.2} parent=54 // loop_pre_header
                  _
                $region57: #{sdf_decoder_forward.2} parent=54 // loop_header
                  %s262 = sphi 0, %s266
                  %p263 = scmp.ge.s32.totalorder %s262, 1
                  %s267 = sphi %s238, %s238
                  %s268 = sphi %s234, %s234
                $region58: #{sdf_decoder_forward.2} parent=54 // loop_header_branch
                  %265 = sbr.rel (%p263) target = $region62
                $region59: #{sdf_decoder_forward.2} parent=54 // loop_body
                  _
                $region60: #{sdf_decoder_forward.2} parent=54 // loop_footer
                  %s266 = sadd.s32 1, %s262
                $region61: #{sdf_decoder_forward.2} parent=54 // loop_footer_branch
                  %261 = sbr.rel target = $region57
                $region62: #{sdf_decoder_forward.2} parent=54 // loop_exit
                  _
                %s270 = ssub.s32 16, 1
                loop: start=0, step=1, limit=1
                $region63: #{sdf_decoder_forward.2} parent=54 // loop_pre_header
                  _
                $region64: #{sdf_decoder_forward.2} parent=54 // loop_header
                  %s272 = sphi 0, %s276
                  %p273 = scmp.ge.s32.totalorder %s272, 1
                  %s277 = sphi %s238, %s238
                  %s278 = sphi %s234, %s234
                $region65: #{sdf_decoder_forward.2} parent=54 // loop_header_branch
                  %275 = sbr.rel (%p273) target = $region69
                $region66: #{sdf_decoder_forward.2} parent=54 // loop_body
                  %v279 = vld [vmem:[%s277] sm:%s270]
                  %280 = vst [vmem:[%s278] sm:%s270] %v279
                  %v281 = vld [vmem:[%s277 + $0x10] sm:%s270]
                  %282 = vst [vmem:[%s278 + $0x4] sm:%s270] %v281
                $region67: #{sdf_decoder_forward.2} parent=54 // loop_footer
                  %s276 = sadd.s32 1, %s272
                $region68: #{sdf_decoder_forward.2} parent=54 // loop_footer_branch
                  %271 = sbr.rel target = $region64
                $region69: #{sdf_decoder_forward.2} parent=54 // loop_exit
                  _
              $region55: #{sdf_decoder_forward.2} parent=39 // pred_fallthru
                _
            $region40: #{sdf_decoder_forward.2} parent=35 // pred_fallthru
              _
            // Predicated region
            $region41: #{sdf_decoder_forward.2} parent=35 // pred_check
              _
            $region42: #{sdf_decoder_forward.2} parent=35 // pred_check_branch
              %244 = sbr.rel (0) target = $region44
            $region43: #{sdf_decoder_forward.2} parent=35 // pred_region
              %s246 = ssub.s32 16, 1
              loop: start=0, step=1, limit=1
              $region45: #{sdf_decoder_forward.2} parent=43 // loop_pre_header
                _
              $region46: #{sdf_decoder_forward.2} parent=43 // loop_header
                %s248 = sphi 0, %s252
                %p249 = scmp.ge.s32.totalorder %s248, 1
                %s253 = sphi %s238, %s238
                %s254 = sphi %s234, %s234
              $region47: #{sdf_decoder_forward.2} parent=43 // loop_header_branch
                %251 = sbr.rel (%p249) target = $region51
              $region48: #{sdf_decoder_forward.2} parent=43 // loop_body
                %v255 = vld [vmem:[%s253] sm:%s246]
                %256 = vst [vmem:[%s254] sm:%s246] %v255
                %v257 = vld [vmem:[%s253 + $0x10] sm:%s246]
                %258 = vst [vmem:[%s254 + $0x4] sm:%s246] %v257
              $region49: #{sdf_decoder_forward.2} parent=43 // loop_footer
                %s252 = sadd.s32 1, %s248
              $region50: #{sdf_decoder_forward.2} parent=43 // loop_footer_branch
                %247 = sbr.rel target = $region46
              $region51: #{sdf_decoder_forward.2} parent=43 // loop_exit
                _
            $region44: #{sdf_decoder_forward.2} parent=35 // pred_fallthru
              _
          $region36: #{sdf_decoder_forward.2} parent=31 // pred_fallthru
            _
          %283 = vnop
        $region32: #{sdf_decoder_forward.2} parent=27 // pred_fallthru
          _
      $region28: #{sdf_decoder_forward.2} parent=5 // pred_fallthru
        _
      %p284 = scmp.le.s32.totalorder 1, %s13
      %p285 = scmp.lt.s32.totalorder %s13, 5
      %p286 = pnand %p284, %p285
      %p287 = pneg %p286
      // Predicated region
      $region70: #{sdf_decoder_forward.2} parent=5 // pred_check
        _
      $region71: #{sdf_decoder_forward.2} parent=5 // pred_check_branch
        %289 = sbr.rel (%p286) target = $region73
      $region72: #{sdf_decoder_forward.2} parent=5 // pred_region
        %s290 = ssub.s32 %s13, 1
        %s291 = sand.u32 %s42, 1
        %s292 = sand.u32 %s42, 1
        %s293 = smul.addr %s292, 8
        %s294 = scalar_lea.vmem [#allocation2], %s293
        // Predicated region
        $region74: #{sdf_decoder_forward.2} parent=72 // pred_check
          %p295 = pneg %p55
        $region75: #{sdf_decoder_forward.2} parent=72 // pred_check_branch
          %297 = sbr.rel (%p295) target = $region77
        $region76: #{sdf_decoder_forward.2} parent=72 // pred_region
          _
        $region77: #{sdf_decoder_forward.2} parent=72 // pred_fallthru
          _
        %s298 = sand.u32 %s42, 1
        %s299 = sand.u32 %s42, 1
        %s300 = smul.addr %s299, 8
        %s301 = scalar_lea.vmem [#allocation2], %s300
        %p302 = pneg %p55
        %p303 = pneg %p52
        %p304 = pneg %p76
        %p305 = pneg %p73
        %p306 = pneg %p97
        %p307 = pneg %p94
        %p308 = pneg %p118
        %p309 = pneg %p115
        %p310 = pneg %p148
        %p311 = pneg %p145
        %s312 = sand.u32 %s135, 1
        %s313 = sand.u32 %s135, 1
        %s314 = smul.addr %s313, 128
        %s315 = scalar_lea.vmem [#allocation3], %s314
        %p316 = pneg %p174
        %p317 = pneg %p171
        %s318 = smul.u32 32, %s22
        %p319 = scmp.lt.s32.totalorder %s318, 63
        %s320 = scalar_select %p319, %s318, 63
        %s321 = smul.addr %s320, 8
        %s322 = scalar_lea.vmem %s5, %s321
        %p323 = pneg %p200
        %p324 = pneg %p197
        %s325 = smul.u32 32, %s22
        %p326 = scmp.lt.s32.totalorder %s325, 63
        %s327 = scalar_select %p326, %s325, 63
        %s328 = smul.addr %s327, 8
        %s329 = scalar_lea.vmem %s6, %s328
        %s330 = smul.u32 %s22, 2
        %s331 = sadd.s32 %s330, %s23
        %s332 = smul.u32 %s22, 2
        %s333 = sadd.s32 %s332, %s23
        %s334 = smul.u32 32, %s22
        %p335 = scmp.lt.s32.totalorder %s334, 63
        %s336 = scalar_select %p335, %s334, 63
        %s337 = smul.addr %s336, 8
        %s338 = scalar_lea.vmem %s5, %s337
        %s339 = smul.u32 32, %s22
        %s340 = smul.u32 32, %s22
        %p341 = scmp.lt.s32.totalorder %s340, 63
        %s342 = scalar_select %p341, %s340, 63
        %s343 = smul.addr %s342, 8
        %s344 = scalar_lea.vmem %s6, %s343
        %s345 = smul.u32 32, %s22
        %p347 = scmp.eq.s32.totalorder %s23, 0
        // Predicated region
        $region78: #{sdf_decoder_forward.2} parent=72 // pred_check
          %p348 = pneg %p347
        $region79: #{sdf_decoder_forward.2} parent=72 // pred_check_branch
          %350 = sbr.rel (%p348) target = $region81
        $region80: #{sdf_decoder_forward.2} parent=72 // pred_region
          %vm351 = vcmask 7168
          %352 = vst.msk [vmem:[%s338] sm:$0xff] %vm351, 0.0
          %353 = vst.msk [vmem:[%s338 + $0x8] sm:$0xff] %vm351, 0.0
          %354 = vst.msk [vmem:[%s338 + $0x10] sm:$0xff] %vm351, 0.0
          %355 = vst.msk [vmem:[%s338 + $0x18] sm:$0xff] %vm351, 0.0
          %356 = vst.msk [vmem:[%s338 + $0x20] sm:$0xff] %vm351, 0.0
          %357 = vst.msk [vmem:[%s338 + $0x28] sm:$0xff] %vm351, 0.0
          %358 = vst.msk [vmem:[%s338 + $0x30] sm:$0xff] %vm351, 0.0
          %359 = vst.msk [vmem:[%s338 + $0x38] sm:$0xff] %vm351, 0.0
          %360 = vst.msk [vmem:[%s338 + $0x40] sm:$0xff] %vm351, 0.0
          %361 = vst.msk [vmem:[%s338 + $0x48] sm:$0xff] %vm351, 0.0
          %362 = vst.msk [vmem:[%s338 + $0x50] sm:$0xff] %vm351, 0.0
          %363 = vst.msk [vmem:[%s338 + $0x58] sm:$0xff] %vm351, 0.0
          %364 = vst.msk [vmem:[%s338 + $0x60] sm:$0xff] %vm351, 0.0
          %365 = vst.msk [vmem:[%s338 + $0x68] sm:$0xff] %vm351, 0.0
          %366 = vst.msk [vmem:[%s338 + $0x70] sm:$0xff] %vm351, 0.0
          %367 = vst.msk [vmem:[%s338 + $0x78] sm:$0xff] %vm351, 0.0
          %368 = vst.msk [vmem:[%s338 + $0x80] sm:$0xff] %vm351, 0.0
          %369 = vst.msk [vmem:[%s338 + $0x88] sm:$0xff] %vm351, 0.0
          %370 = vst.msk [vmem:[%s338 + $0x90] sm:$0xff] %vm351, 0.0
          %371 = vst.msk [vmem:[%s338 + $0x98] sm:$0xff] %vm351, 0.0
          %372 = vst.msk [vmem:[%s338 + $0xa0] sm:$0xff] %vm351, 0.0
          %373 = vst.msk [vmem:[%s338 + $0xa8] sm:$0xff] %vm351, 0.0
          %374 = vst.msk [vmem:[%s338 + $0xb0] sm:$0xff] %vm351, 0.0
          %375 = vst.msk [vmem:[%s338 + $0xb8] sm:$0xff] %vm351, 0.0
          %376 = vst.msk [vmem:[%s338 + $0xc0] sm:$0xff] %vm351, 0.0
          %377 = vst.msk [vmem:[%s338 + $0xc8] sm:$0xff] %vm351, 0.0
          %378 = vst.msk [vmem:[%s338 + $0xd0] sm:$0xff] %vm351, 0.0
          %379 = vst.msk [vmem:[%s338 + $0xd8] sm:$0xff] %vm351, 0.0
          %380 = vst.msk [vmem:[%s338 + $0xe0] sm:$0xff] %vm351, 0.0
          %381 = vst.msk [vmem:[%s338 + $0xe8] sm:$0xff] %vm351, 0.0
          %382 = vst.msk [vmem:[%s338 + $0xf0] sm:$0xff] %vm351, 0.0
          %383 = vst.msk [vmem:[%s338 + $0xf8] sm:$0xff] %vm351, 0.0
          %384 = vst.msk [vmem:[%s344] sm:$0xff] %vm351, 0.0
          %385 = vst.msk [vmem:[%s344 + $0x8] sm:$0xff] %vm351, 0.0
          %386 = vst.msk [vmem:[%s344 + $0x10] sm:$0xff] %vm351, 0.0
          %387 = vst.msk [vmem:[%s344 + $0x18] sm:$0xff] %vm351, 0.0
          %388 = vst.msk [vmem:[%s344 + $0x20] sm:$0xff] %vm351, 0.0
          %389 = vst.msk [vmem:[%s344 + $0x28] sm:$0xff] %vm351, 0.0
          %390 = vst.msk [vmem:[%s344 + $0x30] sm:$0xff] %vm351, 0.0
          %391 = vst.msk [vmem:[%s344 + $0x38] sm:$0xff] %vm351, 0.0
          %392 = vst.msk [vmem:[%s344 + $0x40] sm:$0xff] %vm351, 0.0
          %393 = vst.msk [vmem:[%s344 + $0x48] sm:$0xff] %vm351, 0.0
          %394 = vst.msk [vmem:[%s344 + $0x50] sm:$0xff] %vm351, 0.0
          %395 = vst.msk [vmem:[%s344 + $0x58] sm:$0xff] %vm351, 0.0
          %396 = vst.msk [vmem:[%s344 + $0x60] sm:$0xff] %vm351, 0.0
          %397 = vst.msk [vmem:[%s344 + $0x68] sm:$0xff] %vm351, 0.0
          %398 = vst.msk [vmem:[%s344 + $0x70] sm:$0xff] %vm351, 0.0
          %399 = vst.msk [vmem:[%s344 + $0x78] sm:$0xff] %vm351, 0.0
          %400 = vst.msk [vmem:[%s344 + $0x80] sm:$0xff] %vm351, 0.0
          %401 = vst.msk [vmem:[%s344 + $0x88] sm:$0xff] %vm351, 0.0
          %402 = vst.msk [vmem:[%s344 + $0x90] sm:$0xff] %vm351, 0.0
          %403 = vst.msk [vmem:[%s344 + $0x98] sm:$0xff] %vm351, 0.0
          %404 = vst.msk [vmem:[%s344 + $0xa0] sm:$0xff] %vm351, 0.0
          %405 = vst.msk [vmem:[%s344 + $0xa8] sm:$0xff] %vm351, 0.0
          %406 = vst.msk [vmem:[%s344 + $0xb0] sm:$0xff] %vm351, 0.0
          %407 = vst.msk [vmem:[%s344 + $0xb8] sm:$0xff] %vm351, 0.0
          %408 = vst.msk [vmem:[%s344 + $0xc0] sm:$0xff] %vm351, 0.0
          %409 = vst.msk [vmem:[%s344 + $0xc8] sm:$0xff] %vm351, 0.0
          %410 = vst.msk [vmem:[%s344 + $0xd0] sm:$0xff] %vm351, 0.0
          %411 = vst.msk [vmem:[%s344 + $0xd8] sm:$0xff] %vm351, 0.0
          %412 = vst.msk [vmem:[%s344 + $0xe0] sm:$0xff] %vm351, 0.0
          %413 = vst.msk [vmem:[%s344 + $0xe8] sm:$0xff] %vm351, 0.0
          %414 = vst.msk [vmem:[%s344 + $0xf0] sm:$0xff] %vm351, 0.0
          %415 = vst.msk [vmem:[%s344 + $0xf8] sm:$0xff] %vm351, 0.0
        $region81: #{sdf_decoder_forward.2} parent=72 // pred_fallthru
          _
        %v416 = vld [vmem:[%s1] sm:$0xf]
        %v417 = vld [vmem:[%s1 + $0x4] sm:$0xf]
        %v418 = vld [vmem:[%s1 + $0x8] sm:$0xf]
        %v419 = vld [vmem:[%s1 + $0xc] sm:$0xf]
        %v420 = vld [vmem:[%s1 + $0x10] sm:$0xf]
        %v421 = vld [vmem:[%s1 + $0x14] sm:$0xf]
        %v422 = vld [vmem:[%s1 + $0x18] sm:$0xf]
        %v423 = vld [vmem:[%s1 + $0x1c] sm:$0xf]
        %v424 = vld [vmem:[%s1 + $0x20] sm:$0xf]
        %v425 = vld [vmem:[%s1 + $0x24] sm:$0xf]
        %v426 = vld [vmem:[%s1 + $0x28] sm:$0xf]
        %v427 = vld [vmem:[%s1 + $0x2c] sm:$0xf]
        %v428 = vld [vmem:[%s1 + $0x30] sm:$0xf]
        %v429 = vld [vmem:[%s1 + $0x34] sm:$0xf]
        %v430 = vld [vmem:[%s1 + $0x38] sm:$0xf]
        %v431 = vld [vmem:[%s1 + $0x3c] sm:$0xf]
        %v432 = vld [vmem:[%s1 + $0x40] sm:$0xf]
        %v433 = vld [vmem:[%s1 + $0x44] sm:$0xf]
        %v434 = vld [vmem:[%s1 + $0x48] sm:$0xf]
        %v435 = vld [vmem:[%s1 + $0x4c] sm:$0xf]
        %v436 = vld [vmem:[%s1 + $0x50] sm:$0xf]
        %v437 = vld [vmem:[%s1 + $0x54] sm:$0xf]
        %v438 = vld [vmem:[%s1 + $0x58] sm:$0xf]
        %v439 = vld [vmem:[%s1 + $0x5c] sm:$0xf]
        %v440 = vld [vmem:[%s1 + $0x60] sm:$0xf]
        %v441 = vld [vmem:[%s1 + $0x64] sm:$0xf]
        %v442 = vld [vmem:[%s1 + $0x68] sm:$0xf]
        %v443 = vld [vmem:[%s1 + $0x6c] sm:$0xf]
        %v444 = vld [vmem:[%s1 + $0x70] sm:$0xf]
        %v445 = vld [vmem:[%s1 + $0x74] sm:$0xf]
        %v446 = vld [vmem:[%s1 + $0x78] sm:$0xf]
        %v447 = vld [vmem:[%s1 + $0x7c] sm:$0xf]
        %v448 = vld [vmem:[%s1 + $0x80] sm:$0xf]
        %v449 = vld [vmem:[%s1 + $0x84] sm:$0xf]
        %v450 = vld [vmem:[%s1 + $0x88] sm:$0xf]
        %v451 = vld [vmem:[%s1 + $0x8c] sm:$0xf]
        %v452 = vld [vmem:[%s1 + $0x90] sm:$0xf]
        %v453 = vld [vmem:[%s1 + $0x94] sm:$0xf]
        %v454 = vld [vmem:[%s1 + $0x98] sm:$0xf]
        %v455 = vld [vmem:[%s1 + $0x9c] sm:$0xf]
        %v456 = vld [vmem:[%s1 + $0xa0] sm:$0xf]
        %v457 = vld [vmem:[%s1 + $0xa4] sm:$0xf]
        %v458 = vld [vmem:[%s1 + $0xa8] sm:$0xf]
        %v459 = vld [vmem:[%s1 + $0xac] sm:$0xf]
        %v460 = vld [vmem:[%s1 + $0xb0] sm:$0xf]
        %v461 = vld [vmem:[%s1 + $0xb4] sm:$0xf]
        %v462 = vld [vmem:[%s1 + $0xb8] sm:$0xf]
        %v463 = vld [vmem:[%s1 + $0xbc] sm:$0xf]
        %v464 = vld [vmem:[%s1 + $0xc0] sm:$0xf]
        %v465 = vld [vmem:[%s1 + $0xc4] sm:$0xf]
        %v466 = vld [vmem:[%s1 + $0xc8] sm:$0xf]
        %v467 = vld [vmem:[%s1 + $0xcc] sm:$0xf]
        %v468 = vld [vmem:[%s1 + $0xd0] sm:$0xf]
        %v469 = vld [vmem:[%s1 + $0xd4] sm:$0xf]
        %v470 = vld [vmem:[%s1 + $0xd8] sm:$0xf]
        %v471 = vld [vmem:[%s1 + $0xdc] sm:$0xf]
        %v472 = vld [vmem:[%s1 + $0xe0] sm:$0xf]
        %v473 = vld [vmem:[%s1 + $0xe4] sm:$0xf]
        %v474 = vld [vmem:[%s1 + $0xe8] sm:$0xf]
        %v475 = vld [vmem:[%s1 + $0xec] sm:$0xf]
        %v476 = vld [vmem:[%s1 + $0xf0] sm:$0xf]
        %v477 = vld [vmem:[%s1 + $0xf4] sm:$0xf]
        %v478 = vld [vmem:[%s1 + $0xf8] sm:$0xf]
        %v479 = vld [vmem:[%s1 + $0xfc] sm:$0xf]
        %v480 = vld [vmem:[%s294] sm:$0xf]
        %v481 = vld [vmem:[%s294 + $0x4] sm:$0xf]
        %v482 = vld [vmem:[%s2] sm:$0xff]
        %v483 = vld [vmem:[%s2 + $0x8] sm:$0xff]
        %v484 = vld [vmem:[%s2 + $0x10] sm:$0xff]
        %v485 = vld [vmem:[%s2 + $0x18] sm:$0xff]
        %v486 = vld [vmem:[%s2 + $0x20] sm:$0xff]
        %v487 = vld [vmem:[%s2 + $0x28] sm:$0xff]
        %v488 = vld [vmem:[%s2 + $0x30] sm:$0xff]
        %v489 = vld [vmem:[%s2 + $0x38] sm:$0xff]
        %v490 = vld [vmem:[%s2 + $0x40] sm:$0xff]
        %v491 = vld [vmem:[%s2 + $0x48] sm:$0xff]
        %v492 = vld [vmem:[%s2 + $0x50] sm:$0xff]
        %v493 = vld [vmem:[%s2 + $0x58] sm:$0xff]
        %v494 = vld [vmem:[%s2 + $0x60] sm:$0xff]
        %v495 = vld [vmem:[%s2 + $0x68] sm:$0xff]
        %v496 = vld [vmem:[%s2 + $0x70] sm:$0xff]
        %v497 = vld [vmem:[%s2 + $0x78] sm:$0xff]
        %v498 = vld [vmem:[%s2 + $0x80] sm:$0xff]
        %v499 = vld [vmem:[%s2 + $0x88] sm:$0xff]
        %v500 = vld [vmem:[%s2 + $0x90] sm:$0xff]
        %v501 = vld [vmem:[%s2 + $0x98] sm:$0xff]
        %v502 = vld [vmem:[%s2 + $0xa0] sm:$0xff]
        %v503 = vld [vmem:[%s2 + $0xa8] sm:$0xff]
        %v504 = vld [vmem:[%s2 + $0xb0] sm:$0xff]
        %v505 = vld [vmem:[%s2 + $0xb8] sm:$0xff]
        %v506 = vld [vmem:[%s2 + $0xc0] sm:$0xff]
        %v507 = vld [vmem:[%s2 + $0xc8] sm:$0xff]
        %v508 = vld [vmem:[%s2 + $0xd0] sm:$0xff]
        %v509 = vld [vmem:[%s2 + $0xd8] sm:$0xff]
        %v510 = vld [vmem:[%s2 + $0xe0] sm:$0xff]
        %v511 = vld [vmem:[%s2 + $0xe8] sm:$0xff]
        %v512 = vld [vmem:[%s2 + $0xf0] sm:$0xff]
        %v513 = vld [vmem:[%s2 + $0xf8] sm:$0xff]
        %v514 = vld [vmem:[%s2 + $0x100] sm:$0xff]
        %v515 = vld [vmem:[%s2 + $0x108] sm:$0xff]
        %v516 = vld [vmem:[%s2 + $0x110] sm:$0xff]
        %v517 = vld [vmem:[%s2 + $0x118] sm:$0xff]
        %v518 = vld [vmem:[%s2 + $0x120] sm:$0xff]
        %v519 = vld [vmem:[%s2 + $0x128] sm:$0xff]
        %v520 = vld [vmem:[%s2 + $0x130] sm:$0xff]
        %v521 = vld [vmem:[%s2 + $0x138] sm:$0xff]
        %v522 = vld [vmem:[%s2 + $0x140] sm:$0xff]
        %v523 = vld [vmem:[%s2 + $0x148] sm:$0xff]
        %v524 = vld [vmem:[%s2 + $0x150] sm:$0xff]
        %v525 = vld [vmem:[%s2 + $0x158] sm:$0xff]
        %v526 = vld [vmem:[%s2 + $0x160] sm:$0xff]
        %v527 = vld [vmem:[%s2 + $0x168] sm:$0xff]
        %v528 = vld [vmem:[%s2 + $0x170] sm:$0xff]
        %v529 = vld [vmem:[%s2 + $0x178] sm:$0xff]
        %v530 = vld [vmem:[%s2 + $0x180] sm:$0xff]
        %v531 = vld [vmem:[%s2 + $0x188] sm:$0xff]
        %v532 = vld [vmem:[%s2 + $0x190] sm:$0xff]
        %v533 = vld [vmem:[%s2 + $0x198] sm:$0xff]
        %v534 = vld [vmem:[%s2 + $0x1a0] sm:$0xff]
        %v535 = vld [vmem:[%s2 + $0x1a8] sm:$0xff]
        %v536 = vld [vmem:[%s2 + $0x1b0] sm:$0xff]
        %v537 = vld [vmem:[%s2 + $0x1b8] sm:$0xff]
        %v538 = vld [vmem:[%s2 + $0x1c0] sm:$0xff]
        %v539 = vld [vmem:[%s2 + $0x1c8] sm:$0xff]
        %v540 = vld [vmem:[%s2 + $0x1d0] sm:$0xff]
        %v541 = vld [vmem:[%s2 + $0x1d8] sm:$0xff]
        %v542 = vld [vmem:[%s2 + $0x1e0] sm:$0xff]
        %v543 = vld [vmem:[%s2 + $0x1e8] sm:$0xff]
        %v544 = vld [vmem:[%s2 + $0x1f0] sm:$0xff]
        %v545 = vld [vmem:[%s2 + $0x1f8] sm:$0xff]
        %547 = vset.pattern.permute.xlu0 0
        %548 = vperm.xlu0 %547, %v482
        %v549 = vpop.permute.xlu0 %548
        %552 = vset.pattern.permute.xlu0 0
        %553 = vperm.xlu0 %552, %v483
        %v554 = vpop.permute.xlu0 %553
        %557 = vset.pattern.permute.xlu0 0
        %558 = vperm.xlu0 %557, %v484
        %v559 = vpop.permute.xlu0 %558
        %562 = vset.pattern.permute.xlu0 0
        %563 = vperm.xlu0 %562, %v485
        %v564 = vpop.permute.xlu0 %563
        %567 = vset.pattern.permute.xlu0 0
        %568 = vperm.xlu0 %567, %v486
        %v569 = vpop.permute.xlu0 %568
        %572 = vset.pattern.permute.xlu0 0
        %573 = vperm.xlu0 %572, %v487
        %v574 = vpop.permute.xlu0 %573
        %577 = vset.pattern.permute.xlu0 0
        %578 = vperm.xlu0 %577, %v488
        %v579 = vpop.permute.xlu0 %578
        %582 = vset.pattern.permute.xlu0 0
        %583 = vperm.xlu0 %582, %v489
        %v584 = vpop.permute.xlu0 %583
        %587 = vset.pattern.permute.xlu0 0
        %588 = vperm.xlu0 %587, %v490
        %v589 = vpop.permute.xlu0 %588
        %592 = vset.pattern.permute.xlu0 0
        %593 = vperm.xlu0 %592, %v491
        %v594 = vpop.permute.xlu0 %593
        %597 = vset.pattern.permute.xlu0 0
        %598 = vperm.xlu0 %597, %v492
        %v599 = vpop.permute.xlu0 %598
        %602 = vset.pattern.permute.xlu0 0
        %603 = vperm.xlu0 %602, %v493
        %v604 = vpop.permute.xlu0 %603
        %607 = vset.pattern.permute.xlu0 0
        %608 = vperm.xlu0 %607, %v494
        %v609 = vpop.permute.xlu0 %608
        %612 = vset.pattern.permute.xlu0 0
        %613 = vperm.xlu0 %612, %v495
        %v614 = vpop.permute.xlu0 %613
        %617 = vset.pattern.permute.xlu0 0
        %618 = vperm.xlu0 %617, %v496
        %v619 = vpop.permute.xlu0 %618
        %622 = vset.pattern.permute.xlu0 0
        %623 = vperm.xlu0 %622, %v497
        %v624 = vpop.permute.xlu0 %623
        %627 = vset.pattern.permute.xlu0 0
        %628 = vperm.xlu0 %627, %v498
        %v629 = vpop.permute.xlu0 %628
        %632 = vset.pattern.permute.xlu0 0
        %633 = vperm.xlu0 %632, %v499
        %v634 = vpop.permute.xlu0 %633
        %637 = vset.pattern.permute.xlu0 0
        %638 = vperm.xlu0 %637, %v500
        %v639 = vpop.permute.xlu0 %638
        %642 = vset.pattern.permute.xlu0 0
        %643 = vperm.xlu0 %642, %v501
        %v644 = vpop.permute.xlu0 %643
        %647 = vset.pattern.permute.xlu0 0
        %648 = vperm.xlu0 %647, %v502
        %v649 = vpop.permute.xlu0 %648
        %652 = vset.pattern.permute.xlu0 0
        %653 = vperm.xlu0 %652, %v503
        %v654 = vpop.permute.xlu0 %653
        %657 = vset.pattern.permute.xlu0 0
        %658 = vperm.xlu0 %657, %v504
        %v659 = vpop.permute.xlu0 %658
        %662 = vset.pattern.permute.xlu0 0
        %663 = vperm.xlu0 %662, %v505
        %v664 = vpop.permute.xlu0 %663
        %667 = vset.pattern.permute.xlu0 0
        %668 = vperm.xlu0 %667, %v506
        %v669 = vpop.permute.xlu0 %668
        %672 = vset.pattern.permute.xlu0 0
        %673 = vperm.xlu0 %672, %v507
        %v674 = vpop.permute.xlu0 %673
        %677 = vset.pattern.permute.xlu0 0
        %678 = vperm.xlu0 %677, %v508
        %v679 = vpop.permute.xlu0 %678
        %682 = vset.pattern.permute.xlu0 0
        %683 = vperm.xlu0 %682, %v509
        %v684 = vpop.permute.xlu0 %683
        %687 = vset.pattern.permute.xlu0 0
        %688 = vperm.xlu0 %687, %v510
        %v689 = vpop.permute.xlu0 %688
        %692 = vset.pattern.permute.xlu0 0
        %693 = vperm.xlu0 %692, %v511
        %v694 = vpop.permute.xlu0 %693
        %697 = vset.pattern.permute.xlu0 0
        %698 = vperm.xlu0 %697, %v512
        %v699 = vpop.permute.xlu0 %698
        %702 = vset.pattern.permute.xlu0 0
        %703 = vperm.xlu0 %702, %v513
        %v704 = vpop.permute.xlu0 %703
        %707 = vset.pattern.permute.xlu0 0
        %708 = vperm.xlu0 %707, %v514
        %v709 = vpop.permute.xlu0 %708
        %712 = vset.pattern.permute.xlu0 0
        %713 = vperm.xlu0 %712, %v515
        %v714 = vpop.permute.xlu0 %713
        %717 = vset.pattern.permute.xlu0 0
        %718 = vperm.xlu0 %717, %v516
        %v719 = vpop.permute.xlu0 %718
        %722 = vset.pattern.permute.xlu0 0
        %723 = vperm.xlu0 %722, %v517
        %v724 = vpop.permute.xlu0 %723
        %727 = vset.pattern.permute.xlu0 0
        %728 = vperm.xlu0 %727, %v518
        %v729 = vpop.permute.xlu0 %728
        %732 = vset.pattern.permute.xlu0 0
        %733 = vperm.xlu0 %732, %v519
        %v734 = vpop.permute.xlu0 %733
        %737 = vset.pattern.permute.xlu0 0
        %738 = vperm.xlu0 %737, %v520
        %v739 = vpop.permute.xlu0 %738
        %742 = vset.pattern.permute.xlu0 0
        %743 = vperm.xlu0 %742, %v521
        %v744 = vpop.permute.xlu0 %743
        %747 = vset.pattern.permute.xlu0 0
        %748 = vperm.xlu0 %747, %v522
        %v749 = vpop.permute.xlu0 %748
        %752 = vset.pattern.permute.xlu0 0
        %753 = vperm.xlu0 %752, %v523
        %v754 = vpop.permute.xlu0 %753
        %757 = vset.pattern.permute.xlu0 0
        %758 = vperm.xlu0 %757, %v524
        %v759 = vpop.permute.xlu0 %758
        %762 = vset.pattern.permute.xlu0 0
        %763 = vperm.xlu0 %762, %v525
        %v764 = vpop.permute.xlu0 %763
        %767 = vset.pattern.permute.xlu0 0
        %768 = vperm.xlu0 %767, %v526
        %v769 = vpop.permute.xlu0 %768
        %772 = vset.pattern.permute.xlu0 0
        %773 = vperm.xlu0 %772, %v527
        %v774 = vpop.permute.xlu0 %773
        %777 = vset.pattern.permute.xlu0 0
        %778 = vperm.xlu0 %777, %v528
        %v779 = vpop.permute.xlu0 %778
        %782 = vset.pattern.permute.xlu0 0
        %783 = vperm.xlu0 %782, %v529
        %v784 = vpop.permute.xlu0 %783
        %787 = vset.pattern.permute.xlu0 0
        %788 = vperm.xlu0 %787, %v530
        %v789 = vpop.permute.xlu0 %788
        %792 = vset.pattern.permute.xlu0 0
        %793 = vperm.xlu0 %792, %v531
        %v794 = vpop.permute.xlu0 %793
        %797 = vset.pattern.permute.xlu0 0
        %798 = vperm.xlu0 %797, %v532
        %v799 = vpop.permute.xlu0 %798
        %802 = vset.pattern.permute.xlu0 0
        %803 = vperm.xlu0 %802, %v533
        %v804 = vpop.permute.xlu0 %803
        %807 = vset.pattern.permute.xlu0 0
        %808 = vperm.xlu0 %807, %v534
        %v809 = vpop.permute.xlu0 %808
        %812 = vset.pattern.permute.xlu0 0
        %813 = vperm.xlu0 %812, %v535
        %v814 = vpop.permute.xlu0 %813
        %817 = vset.pattern.permute.xlu0 0
        %818 = vperm.xlu0 %817, %v536
        %v819 = vpop.permute.xlu0 %818
        %822 = vset.pattern.permute.xlu0 0
        %823 = vperm.xlu0 %822, %v537
        %v824 = vpop.permute.xlu0 %823
        %827 = vset.pattern.permute.xlu0 0
        %828 = vperm.xlu0 %827, %v538
        %v829 = vpop.permute.xlu0 %828
        %832 = vset.pattern.permute.xlu0 0
        %833 = vperm.xlu0 %832, %v539
        %v834 = vpop.permute.xlu0 %833
        %837 = vset.pattern.permute.xlu0 0
        %838 = vperm.xlu0 %837, %v540
        %v839 = vpop.permute.xlu0 %838
        %842 = vset.pattern.permute.xlu0 0
        %843 = vperm.xlu0 %842, %v541
        %v844 = vpop.permute.xlu0 %843
        %847 = vset.pattern.permute.xlu0 0
        %848 = vperm.xlu0 %847, %v542
        %v849 = vpop.permute.xlu0 %848
        %852 = vset.pattern.permute.xlu0 0
        %853 = vperm.xlu0 %852, %v543
        %v854 = vpop.permute.xlu0 %853
        %857 = vset.pattern.permute.xlu0 0
        %858 = vperm.xlu0 %857, %v544
        %v859 = vpop.permute.xlu0 %858
        %862 = vset.pattern.permute.xlu0 0
        %863 = vperm.xlu0 %862, %v545
        %v864 = vpop.permute.xlu0 %863
        %v930 = vunpack.c.l.b16 %v416
        %v931 = vunpack.c.l.b16 %v417
        %v932 = vunpack.c.l.b16 %v418
        %v933 = vunpack.c.l.b16 %v419
        %v934 = vunpack.c.l.b16 %v420
        %v935 = vunpack.c.l.b16 %v421
        %v936 = vunpack.c.l.b16 %v422
        %v937 = vunpack.c.l.b16 %v423
        %v938 = vunpack.c.l.b16 %v424
        %v939 = vunpack.c.l.b16 %v425
        %v940 = vunpack.c.l.b16 %v426
        %v941 = vunpack.c.l.b16 %v427
        %v942 = vunpack.c.l.b16 %v428
        %v943 = vunpack.c.l.b16 %v429
        %v944 = vunpack.c.l.b16 %v430
        %v945 = vunpack.c.l.b16 %v431
        %v946 = vunpack.c.l.b16 %v432
        %v947 = vunpack.c.l.b16 %v433
        %v948 = vunpack.c.l.b16 %v434
        %v949 = vunpack.c.l.b16 %v435
        %v950 = vunpack.c.l.b16 %v436
        %v951 = vunpack.c.l.b16 %v437
        %v952 = vunpack.c.l.b16 %v438
        %v953 = vunpack.c.l.b16 %v439
        %v954 = vunpack.c.l.b16 %v440
        %v955 = vunpack.c.l.b16 %v441
        %v956 = vunpack.c.l.b16 %v442
        %v957 = vunpack.c.l.b16 %v443
        %v958 = vunpack.c.l.b16 %v444
        %v959 = vunpack.c.l.b16 %v445
        %v960 = vunpack.c.l.b16 %v446
        %v961 = vunpack.c.l.b16 %v447
        %v962 = vunpack.c.l.b16 %v448
        %v963 = vunpack.c.l.b16 %v449
        %v964 = vunpack.c.l.b16 %v450
        %v965 = vunpack.c.l.b16 %v451
        %v966 = vunpack.c.l.b16 %v452
        %v967 = vunpack.c.l.b16 %v453
        %v968 = vunpack.c.l.b16 %v454
        %v969 = vunpack.c.l.b16 %v455
        %v970 = vunpack.c.l.b16 %v456
        %v971 = vunpack.c.l.b16 %v457
        %v972 = vunpack.c.l.b16 %v458
        %v973 = vunpack.c.l.b16 %v459
        %v974 = vunpack.c.l.b16 %v460
        %v975 = vunpack.c.l.b16 %v461
        %v976 = vunpack.c.l.b16 %v462
        %v977 = vunpack.c.l.b16 %v463
        %v978 = vunpack.c.l.b16 %v464
        %v979 = vunpack.c.l.b16 %v465
        %v980 = vunpack.c.l.b16 %v466
        %v981 = vunpack.c.l.b16 %v467
        %v982 = vunpack.c.l.b16 %v468
        %v983 = vunpack.c.l.b16 %v469
        %v984 = vunpack.c.l.b16 %v470
        %v985 = vunpack.c.l.b16 %v471
        %v986 = vunpack.c.l.b16 %v472
        %v987 = vunpack.c.l.b16 %v473
        %v988 = vunpack.c.l.b16 %v474
        %v989 = vunpack.c.l.b16 %v475
        %v990 = vunpack.c.l.b16 %v476
        %v991 = vunpack.c.l.b16 %v477
        %v992 = vunpack.c.l.b16 %v478
        %v993 = vunpack.c.l.b16 %v479
        %v994 = vpack.c.b16 %v931, %v930
        %v995 = vpack.c.b16 %v933, %v932
        %v996 = vpack.c.b16 %v935, %v934
        %v997 = vpack.c.b16 %v937, %v936
        %v998 = vpack.c.b16 %v939, %v938
        %v999 = vpack.c.b16 %v941, %v940
        %v1000 = vpack.c.b16 %v943, %v942
        %v1001 = vpack.c.b16 %v945, %v944
        %v1002 = vpack.c.b16 %v947, %v946
        %v1003 = vpack.c.b16 %v949, %v948
        %v1004 = vpack.c.b16 %v951, %v950
        %v1005 = vpack.c.b16 %v953, %v952
        %v1006 = vpack.c.b16 %v955, %v954
        %v1007 = vpack.c.b16 %v957, %v956
        %v1008 = vpack.c.b16 %v959, %v958
        %v1009 = vpack.c.b16 %v961, %v960
        %v1010 = vpack.c.b16 %v963, %v962
        %v1011 = vpack.c.b16 %v965, %v964
        %v1012 = vpack.c.b16 %v967, %v966
        %v1013 = vpack.c.b16 %v969, %v968
        %v1014 = vpack.c.b16 %v971, %v970
        %v1015 = vpack.c.b16 %v973, %v972
        %v1016 = vpack.c.b16 %v975, %v974
        %v1017 = vpack.c.b16 %v977, %v976
        %v1018 = vpack.c.b16 %v979, %v978
        %v1019 = vpack.c.b16 %v981, %v980
        %v1020 = vpack.c.b16 %v983, %v982
        %v1021 = vpack.c.b16 %v985, %v984
        %v1022 = vpack.c.b16 %v987, %v986
        %v1023 = vpack.c.b16 %v989, %v988
        %v1024 = vpack.c.b16 %v991, %v990
        %v1025 = vpack.c.b16 %v993, %v992
        %v1028 = vunpack.c.l.b16 %v480
        %v1029 = vunpack.c.l.b16 %v481
        %v1030 = vpack.c.b16 %v1029, %v1028
        %vm1032 = vcmask 130048
        %v1034 = vsel %vm1032, %v994, 0
        %v1037 = vsel %vm1032, %v995, 0
        %v1040 = vsel %vm1032, %v996, 0
        %v1043 = vsel %vm1032, %v997, 0
        %v1046 = vsel %vm1032, %v998, 0
        %v1049 = vsel %vm1032, %v999, 0
        %v1052 = vsel %vm1032, %v1000, 0
        %v1055 = vsel %vm1032, %v1001, 0
        %v1058 = vsel %vm1032, %v1002, 0
        %v1061 = vsel %vm1032, %v1003, 0
        %v1064 = vsel %vm1032, %v1004, 0
        %v1067 = vsel %vm1032, %v1005, 0
        %v1070 = vsel %vm1032, %v1006, 0
        %v1073 = vsel %vm1032, %v1007, 0
        %v1076 = vsel %vm1032, %v1008, 0
        %v1079 = vsel %vm1032, %v1009, 0
        %v1082 = vsel %vm1032, %v1010, 0
        %v1085 = vsel %vm1032, %v1011, 0
        %v1088 = vsel %vm1032, %v1012, 0
        %v1091 = vsel %vm1032, %v1013, 0
        %v1094 = vsel %vm1032, %v1014, 0
        %v1097 = vsel %vm1032, %v1015, 0
        %v1100 = vsel %vm1032, %v1016, 0
        %v1103 = vsel %vm1032, %v1017, 0
        %v1106 = vsel %vm1032, %v1018, 0
        %v1109 = vsel %vm1032, %v1019, 0
        %v1112 = vsel %vm1032, %v1020, 0
        %v1115 = vsel %vm1032, %v1021, 0
        %v1118 = vsel %vm1032, %v1022, 0
        %v1121 = vsel %vm1032, %v1023, 0
        %v1124 = vsel %vm1032, %v1024, 0
        %v1127 = vsel %vm1032, %v1025, 0
        %1129 = vmatprep.subr.bf16.mxu0 0
        %1130 = vmatpush1.bf16.msra.mxu0 0
        %1131 = vmatprep.subr.bf16.mxu0 0
        %1132 = vmatpush1.bf16.msra.mxu0 0
        %1133 = vmatprep.subr.bf16.mxu0 0
        %1134 = vmatpush1.bf16.msra.mxu0 0
        %1135 = vmatprep.subr.bf16.mxu0 0
        %1136 = vmatpush1.bf16.msra.mxu0 0
        %1137 = vmatprep.subr.bf16.mxu0 0
        %1138 = vmatpush1.bf16.msra.mxu0 0
        %1139 = vmatprep.subr.bf16.mxu0 0
        %1140 = vmatpush1.bf16.msra.mxu0 0
        %1141 = vmatprep.subr.bf16.mxu0 0
        %1142 = vmatpush1.bf16.msra.mxu0 0
        %1143 = vmatprep.subr.bf16.mxu0 0
        %1144 = vmatpush1.bf16.msra.mxu0 %v1030
        %1145 = vmatprep.subr.bf16.mxu0 0
        %1146 = vmatpush2.bf16.msra.mxu0 0
        %1147 = vmatprep.subr.bf16.mxu0 0
        %1148 = vmatpush2.bf16.msra.mxu0 0
        %1149 = vmatprep.subr.bf16.mxu0 0
        %1150 = vmatpush2.bf16.msra.mxu0 0
        %1151 = vmatprep.subr.bf16.mxu0 0
        %1152 = vmatpush2.bf16.msra.mxu0 0
        %1153 = vmatprep.subr.bf16.mxu0 0
        %1154 = vmatpush2.bf16.msra.mxu0 0
        %1155 = vmatprep.subr.bf16.mxu0 0
        %1156 = vmatpush2.bf16.msra.mxu0 0
        %1157 = vmatprep.subr.bf16.mxu0 0
        %1158 = vmatpush2.bf16.msra.mxu0 0
        %1159 = vmatprep.subr.bf16.mxu0 0
        %1160 = vmatpush2.bf16.msra.mxu0 0
        %1161 = vmatprep.mubr.bf16.mxu0 0
        %1162 = vmatmul.mubr.bf16.gmra.mxu0 %v1034
        %v1163 = vpop.f32.mrf.mxu0
        %v1164 = vadd.f32 %v549, %v1163
        %v1165 = vpop.f32.mrf.mxu0
        %v1166 = vpop.f32.mrf.mxu0
        %v1167 = vadd.f32 %v554, %v1166
        %v1168 = vpop.f32.mrf.mxu0
        %1169 = vmatprep.mubr.bf16.mxu0 0
        %1170 = vmatmul.mubr.bf16.gmra.mxu0 %v1037
        %v1171 = vpop.f32.mrf.mxu0
        %v1172 = vadd.f32 %v559, %v1171
        %v1173 = vpop.f32.mrf.mxu0
        %v1174 = vpop.f32.mrf.mxu0
        %v1175 = vadd.f32 %v564, %v1174
        %v1176 = vpop.f32.mrf.mxu0
        %1177 = vmatprep.mubr.bf16.mxu0 0
        %1178 = vmatmul.mubr.bf16.gmra.mxu0 %v1040
        %v1179 = vpop.f32.mrf.mxu0
        %v1180 = vadd.f32 %v569, %v1179
        %v1181 = vpop.f32.mrf.mxu0
        %v1182 = vpop.f32.mrf.mxu0
        %v1183 = vadd.f32 %v574, %v1182
        %v1184 = vpop.f32.mrf.mxu0
        %1185 = vmatprep.mubr.bf16.mxu0 0
        %1186 = vmatmul.mubr.bf16.gmra.mxu0 %v1043
        %v1187 = vpop.f32.mrf.mxu0
        %v1188 = vadd.f32 %v579, %v1187
        %v1189 = vpop.f32.mrf.mxu0
        %v1190 = vpop.f32.mrf.mxu0
        %v1191 = vadd.f32 %v584, %v1190
        %v1192 = vpop.f32.mrf.mxu0
        %1193 = vmatprep.mubr.bf16.mxu0 0
        %1194 = vmatmul.mubr.bf16.gmra.mxu0 %v1046
        %v1195 = vpop.f32.mrf.mxu0
        %v1196 = vadd.f32 %v589, %v1195
        %v1197 = vpop.f32.mrf.mxu0
        %v1198 = vpop.f32.mrf.mxu0
        %v1199 = vadd.f32 %v594, %v1198
        %v1200 = vpop.f32.mrf.mxu0
        %1201 = vmatprep.mubr.bf16.mxu0 0
        %1202 = vmatmul.mubr.bf16.gmra.mxu0 %v1049
        %v1203 = vpop.f32.mrf.mxu0
        %v1204 = vadd.f32 %v599, %v1203
        %v1205 = vpop.f32.mrf.mxu0
        %v1206 = vpop.f32.mrf.mxu0
        %v1207 = vadd.f32 %v604, %v1206
        %v1208 = vpop.f32.mrf.mxu0
        %1209 = vmatprep.mubr.bf16.mxu0 0
        %1210 = vmatmul.mubr.bf16.gmra.mxu0 %v1052
        %v1211 = vpop.f32.mrf.mxu0
        %v1212 = vadd.f32 %v609, %v1211
        %v1213 = vpop.f32.mrf.mxu0
        %v1214 = vpop.f32.mrf.mxu0
        %v1215 = vadd.f32 %v614, %v1214
        %v1216 = vpop.f32.mrf.mxu0
        %1217 = vmatprep.mubr.bf16.mxu0 0
        %1218 = vmatmul.mubr.bf16.gmra.mxu0 %v1055
        %v1219 = vpop.f32.mrf.mxu0
        %v1220 = vadd.f32 %v619, %v1219
        %v1221 = vpop.f32.mrf.mxu0
        %v1222 = vpop.f32.mrf.mxu0
        %v1223 = vadd.f32 %v624, %v1222
        %v1224 = vpop.f32.mrf.mxu0
        %1225 = vmatprep.mubr.bf16.mxu0 0
        %1226 = vmatmul.mubr.bf16.gmra.mxu0 %v1058
        %v1227 = vpop.f32.mrf.mxu0
        %v1228 = vadd.f32 %v629, %v1227
        %v1229 = vpop.f32.mrf.mxu0
        %v1230 = vpop.f32.mrf.mxu0
        %v1231 = vadd.f32 %v634, %v1230
        %v1232 = vpop.f32.mrf.mxu0
        %1233 = vmatprep.mubr.bf16.mxu0 0
        %1234 = vmatmul.mubr.bf16.gmra.mxu0 %v1061
        %v1235 = vpop.f32.mrf.mxu0
        %v1236 = vadd.f32 %v639, %v1235
        %v1237 = vpop.f32.mrf.mxu0
        %v1238 = vpop.f32.mrf.mxu0
        %v1239 = vadd.f32 %v644, %v1238
        %v1240 = vpop.f32.mrf.mxu0
        %1241 = vmatprep.mubr.bf16.mxu0 0
        %1242 = vmatmul.mubr.bf16.gmra.mxu0 %v1064
        %v1243 = vpop.f32.mrf.mxu0
        %v1244 = vadd.f32 %v649, %v1243
        %v1245 = vpop.f32.mrf.mxu0
        %v1246 = vpop.f32.mrf.mxu0
        %v1247 = vadd.f32 %v654, %v1246
        %v1248 = vpop.f32.mrf.mxu0
        %1249 = vmatprep.mubr.bf16.mxu0 0
        %1250 = vmatmul.mubr.bf16.gmra.mxu0 %v1067
        %v1251 = vpop.f32.mrf.mxu0
        %v1252 = vadd.f32 %v659, %v1251
        %v1253 = vpop.f32.mrf.mxu0
        %v1254 = vpop.f32.mrf.mxu0
        %v1255 = vadd.f32 %v664, %v1254
        %v1256 = vpop.f32.mrf.mxu0
        %1257 = vmatprep.mubr.bf16.mxu0 0
        %1258 = vmatmul.mubr.bf16.gmra.mxu0 %v1070
        %v1259 = vpop.f32.mrf.mxu0
        %v1260 = vadd.f32 %v669, %v1259
        %v1261 = vpop.f32.mrf.mxu0
        %v1262 = vpop.f32.mrf.mxu0
        %v1263 = vadd.f32 %v674, %v1262
        %v1264 = vpop.f32.mrf.mxu0
        %1265 = vmatprep.mubr.bf16.mxu0 0
        %1266 = vmatmul.mubr.bf16.gmra.mxu0 %v1073
        %v1267 = vpop.f32.mrf.mxu0
        %v1268 = vadd.f32 %v679, %v1267
        %v1269 = vpop.f32.mrf.mxu0
        %v1270 = vpop.f32.mrf.mxu0
        %v1271 = vadd.f32 %v684, %v1270
        %v1272 = vpop.f32.mrf.mxu0
        %1273 = vmatprep.mubr.bf16.mxu0 0
        %1274 = vmatmul.mubr.bf16.gmra.mxu0 %v1076
        %v1275 = vpop.f32.mrf.mxu0
        %v1276 = vadd.f32 %v689, %v1275
        %v1277 = vpop.f32.mrf.mxu0
        %v1278 = vpop.f32.mrf.mxu0
        %v1279 = vadd.f32 %v694, %v1278
        %v1280 = vpop.f32.mrf.mxu0
        %1281 = vmatprep.mubr.bf16.mxu0 0
        %1282 = vmatmul.mubr.bf16.gmra.mxu0 %v1079
        %v1283 = vpop.f32.mrf.mxu0
        %v1284 = vadd.f32 %v699, %v1283
        %v1285 = vpop.f32.mrf.mxu0
        %v1286 = vpop.f32.mrf.mxu0
        %v1287 = vadd.f32 %v704, %v1286
        %v1288 = vpop.f32.mrf.mxu0
        %1289 = vmatprep.mubr.bf16.mxu0 0
        %1290 = vmatmul.mubr.bf16.gmra.mxu0 %v1082
        %v1291 = vpop.f32.mrf.mxu0
        %v1292 = vadd.f32 %v709, %v1291
        %v1293 = vpop.f32.mrf.mxu0
        %v1294 = vpop.f32.mrf.mxu0
        %v1295 = vadd.f32 %v714, %v1294
        %v1296 = vpop.f32.mrf.mxu0
        %1297 = vmatprep.mubr.bf16.mxu0 0
        %1298 = vmatmul.mubr.bf16.gmra.mxu0 %v1085
        %v1299 = vpop.f32.mrf.mxu0
        %v1300 = vadd.f32 %v719, %v1299
        %v1301 = vpop.f32.mrf.mxu0
        %v1302 = vpop.f32.mrf.mxu0
        %v1303 = vadd.f32 %v724, %v1302
        %v1304 = vpop.f32.mrf.mxu0
        %1305 = vmatprep.mubr.bf16.mxu0 0
        %1306 = vmatmul.mubr.bf16.gmra.mxu0 %v1088
        %v1307 = vpop.f32.mrf.mxu0
        %v1308 = vadd.f32 %v729, %v1307
        %v1309 = vpop.f32.mrf.mxu0
        %v1310 = vpop.f32.mrf.mxu0
        %v1311 = vadd.f32 %v734, %v1310
        %v1312 = vpop.f32.mrf.mxu0
        %1313 = vmatprep.mubr.bf16.mxu0 0
        %1314 = vmatmul.mubr.bf16.gmra.mxu0 %v1091
        %v1315 = vpop.f32.mrf.mxu0
        %v1316 = vadd.f32 %v739, %v1315
        %v1317 = vpop.f32.mrf.mxu0
        %v1318 = vpop.f32.mrf.mxu0
        %v1319 = vadd.f32 %v744, %v1318
        %v1320 = vpop.f32.mrf.mxu0
        %1321 = vmatprep.mubr.bf16.mxu0 0
        %1322 = vmatmul.mubr.bf16.gmra.mxu0 %v1094
        %v1323 = vpop.f32.mrf.mxu0
        %v1324 = vadd.f32 %v749, %v1323
        %v1325 = vpop.f32.mrf.mxu0
        %v1326 = vpop.f32.mrf.mxu0
        %v1327 = vadd.f32 %v754, %v1326
        %v1328 = vpop.f32.mrf.mxu0
        %1329 = vmatprep.mubr.bf16.mxu0 0
        %1330 = vmatmul.mubr.bf16.gmra.mxu0 %v1097
        %v1331 = vpop.f32.mrf.mxu0
        %v1332 = vadd.f32 %v759, %v1331
        %v1333 = vpop.f32.mrf.mxu0
        %v1334 = vpop.f32.mrf.mxu0
        %v1335 = vadd.f32 %v764, %v1334
        %v1336 = vpop.f32.mrf.mxu0
        %1337 = vmatprep.mubr.bf16.mxu0 0
        %1338 = vmatmul.mubr.bf16.gmra.mxu0 %v1100
        %v1339 = vpop.f32.mrf.mxu0
        %v1340 = vadd.f32 %v769, %v1339
        %v1341 = vpop.f32.mrf.mxu0
        %v1342 = vpop.f32.mrf.mxu0
        %v1343 = vadd.f32 %v774, %v1342
        %v1344 = vpop.f32.mrf.mxu0
        %1345 = vmatprep.mubr.bf16.mxu0 0
        %1346 = vmatmul.mubr.bf16.gmra.mxu0 %v1103
        %v1347 = vpop.f32.mrf.mxu0
        %v1348 = vadd.f32 %v779, %v1347
        %v1349 = vpop.f32.mrf.mxu0
        %v1350 = vpop.f32.mrf.mxu0
        %v1351 = vadd.f32 %v784, %v1350
        %v1352 = vpop.f32.mrf.mxu0
        %1353 = vmatprep.mubr.bf16.mxu0 0
        %1354 = vmatmul.mubr.bf16.gmra.mxu0 %v1106
        %v1355 = vpop.f32.mrf.mxu0
        %v1356 = vadd.f32 %v789, %v1355
        %v1357 = vpop.f32.mrf.mxu0
        %v1358 = vpop.f32.mrf.mxu0
        %v1359 = vadd.f32 %v794, %v1358
        %v1360 = vpop.f32.mrf.mxu0
        %1361 = vmatprep.mubr.bf16.mxu0 0
        %1362 = vmatmul.mubr.bf16.gmra.mxu0 %v1109
        %v1363 = vpop.f32.mrf.mxu0
        %v1364 = vadd.f32 %v799, %v1363
        %v1365 = vpop.f32.mrf.mxu0
        %v1366 = vpop.f32.mrf.mxu0
        %v1367 = vadd.f32 %v804, %v1366
        %v1368 = vpop.f32.mrf.mxu0
        %1369 = vmatprep.mubr.bf16.mxu0 0
        %1370 = vmatmul.mubr.bf16.gmra.mxu0 %v1112
        %v1371 = vpop.f32.mrf.mxu0
        %v1372 = vadd.f32 %v809, %v1371
        %v1373 = vpop.f32.mrf.mxu0
        %v1374 = vpop.f32.mrf.mxu0
        %v1375 = vadd.f32 %v814, %v1374
        %v1376 = vpop.f32.mrf.mxu0
        %1377 = vmatprep.mubr.bf16.mxu0 0
        %1378 = vmatmul.mubr.bf16.gmra.mxu0 %v1115
        %v1379 = vpop.f32.mrf.mxu0
        %v1380 = vadd.f32 %v819, %v1379
        %v1381 = vpop.f32.mrf.mxu0
        %v1382 = vpop.f32.mrf.mxu0
        %v1383 = vadd.f32 %v824, %v1382
        %v1384 = vpop.f32.mrf.mxu0
        %1385 = vmatprep.mubr.bf16.mxu0 0
        %1386 = vmatmul.mubr.bf16.gmra.mxu0 %v1118
        %v1387 = vpop.f32.mrf.mxu0
        %v1388 = vadd.f32 %v829, %v1387
        %v1389 = vpop.f32.mrf.mxu0
        %v1390 = vpop.f32.mrf.mxu0
        %v1391 = vadd.f32 %v834, %v1390
        %v1392 = vpop.f32.mrf.mxu0
        %1393 = vmatprep.mubr.bf16.mxu0 0
        %1394 = vmatmul.mubr.bf16.gmra.mxu0 %v1121
        %v1395 = vpop.f32.mrf.mxu0
        %v1396 = vadd.f32 %v839, %v1395
        %v1397 = vpop.f32.mrf.mxu0
        %v1398 = vpop.f32.mrf.mxu0
        %v1399 = vadd.f32 %v844, %v1398
        %v1400 = vpop.f32.mrf.mxu0
        %1401 = vmatprep.mubr.bf16.mxu0 0
        %1402 = vmatmul.mubr.bf16.gmra.mxu0 %v1124
        %v1403 = vpop.f32.mrf.mxu0
        %v1404 = vadd.f32 %v849, %v1403
        %v1405 = vpop.f32.mrf.mxu0
        %v1406 = vpop.f32.mrf.mxu0
        %v1407 = vadd.f32 %v854, %v1406
        %v1408 = vpop.f32.mrf.mxu0
        %1409 = vmatprep.mubr.bf16.mxu0 0
        %1410 = vmatmul.mubr.bf16.gmra.mxu0 %v1127
        %v1411 = vpop.f32.mrf.mxu0
        %v1412 = vadd.f32 %v859, %v1411
        %v1413 = vpop.f32.mrf.mxu0
        %v1414 = vpop.f32.mrf.mxu0
        %v1415 = vadd.f32 %v864, %v1414
        %v1416 = vpop.f32.mrf.mxu0
        %1417 = vdwg.mxu0
        %v1418 = vmax.f32 %v1164, 0.0
        %v1419 = vmax.f32 %v1167, 0.0
        %v1420 = vmax.f32 %v1172, 0.0
        %v1421 = vmax.f32 %v1175, 0.0
        %v1422 = vmax.f32 %v1180, 0.0
        %v1423 = vmax.f32 %v1183, 0.0
        %v1424 = vmax.f32 %v1188, 0.0
        %v1425 = vmax.f32 %v1191, 0.0
        %v1426 = vmax.f32 %v1196, 0.0
        %v1427 = vmax.f32 %v1199, 0.0
        %v1428 = vmax.f32 %v1204, 0.0
        %v1429 = vmax.f32 %v1207, 0.0
        %v1430 = vmax.f32 %v1212, 0.0
        %v1431 = vmax.f32 %v1215, 0.0
        %v1432 = vmax.f32 %v1220, 0.0
        %v1433 = vmax.f32 %v1223, 0.0
        %v1434 = vmax.f32 %v1228, 0.0
        %v1435 = vmax.f32 %v1231, 0.0
        %v1436 = vmax.f32 %v1236, 0.0
        %v1437 = vmax.f32 %v1239, 0.0
        %v1438 = vmax.f32 %v1244, 0.0
        %v1439 = vmax.f32 %v1247, 0.0
        %v1440 = vmax.f32 %v1252, 0.0
        %v1441 = vmax.f32 %v1255, 0.0
        %v1442 = vmax.f32 %v1260, 0.0
        %v1443 = vmax.f32 %v1263, 0.0
        %v1444 = vmax.f32 %v1268, 0.0
        %v1445 = vmax.f32 %v1271, 0.0
        %v1446 = vmax.f32 %v1276, 0.0
        %v1447 = vmax.f32 %v1279, 0.0
        %v1448 = vmax.f32 %v1284, 0.0
        %v1449 = vmax.f32 %v1287, 0.0
        %v1450 = vmax.f32 %v1292, 0.0
        %v1451 = vmax.f32 %v1295, 0.0
        %v1452 = vmax.f32 %v1300, 0.0
        %v1453 = vmax.f32 %v1303, 0.0
        %v1454 = vmax.f32 %v1308, 0.0
        %v1455 = vmax.f32 %v1311, 0.0
        %v1456 = vmax.f32 %v1316, 0.0
        %v1457 = vmax.f32 %v1319, 0.0
        %v1458 = vmax.f32 %v1324, 0.0
        %v1459 = vmax.f32 %v1327, 0.0
        %v1460 = vmax.f32 %v1332, 0.0
        %v1461 = vmax.f32 %v1335, 0.0
        %v1462 = vmax.f32 %v1340, 0.0
        %v1463 = vmax.f32 %v1343, 0.0
        %v1464 = vmax.f32 %v1348, 0.0
        %v1465 = vmax.f32 %v1351, 0.0
        %v1466 = vmax.f32 %v1356, 0.0
        %v1467 = vmax.f32 %v1359, 0.0
        %v1468 = vmax.f32 %v1364, 0.0
        %v1469 = vmax.f32 %v1367, 0.0
        %v1470 = vmax.f32 %v1372, 0.0
        %v1471 = vmax.f32 %v1375, 0.0
        %v1472 = vmax.f32 %v1380, 0.0
        %v1473 = vmax.f32 %v1383, 0.0
        %v1474 = vmax.f32 %v1388, 0.0
        %v1475 = vmax.f32 %v1391, 0.0
        %v1476 = vmax.f32 %v1396, 0.0
        %v1477 = vmax.f32 %v1399, 0.0
        %v1478 = vmax.f32 %v1404, 0.0
        %v1479 = vmax.f32 %v1407, 0.0
        %v1480 = vmax.f32 %v1412, 0.0
        %v1481 = vmax.f32 %v1415, 0.0
        %v1482 = vld [vmem:[%s3] sm:$0xff]
        %v1483 = vld [vmem:[%s3 + $0x8] sm:$0xff]
        %v1484 = vld [vmem:[%s3 + $0x10] sm:$0xff]
        %v1485 = vld [vmem:[%s3 + $0x18] sm:$0xff]
        %v1486 = vld [vmem:[%s3 + $0x20] sm:$0xff]
        %v1487 = vld [vmem:[%s3 + $0x28] sm:$0xff]
        %v1488 = vld [vmem:[%s3 + $0x30] sm:$0xff]
        %v1489 = vld [vmem:[%s3 + $0x38] sm:$0xff]
        %v1490 = vld [vmem:[%s3 + $0x40] sm:$0xff]
        %v1491 = vld [vmem:[%s3 + $0x48] sm:$0xff]
        %v1492 = vld [vmem:[%s3 + $0x50] sm:$0xff]
        %v1493 = vld [vmem:[%s3 + $0x58] sm:$0xff]
        %v1494 = vld [vmem:[%s3 + $0x60] sm:$0xff]
        %v1495 = vld [vmem:[%s3 + $0x68] sm:$0xff]
        %v1496 = vld [vmem:[%s3 + $0x70] sm:$0xff]
        %v1497 = vld [vmem:[%s3 + $0x78] sm:$0xff]
        %v1498 = vld [vmem:[%s3 + $0x80] sm:$0xff]
        %v1499 = vld [vmem:[%s3 + $0x88] sm:$0xff]
        %v1500 = vld [vmem:[%s3 + $0x90] sm:$0xff]
        %v1501 = vld [vmem:[%s3 + $0x98] sm:$0xff]
        %v1502 = vld [vmem:[%s3 + $0xa0] sm:$0xff]
        %v1503 = vld [vmem:[%s3 + $0xa8] sm:$0xff]
        %v1504 = vld [vmem:[%s3 + $0xb0] sm:$0xff]
        %v1505 = vld [vmem:[%s3 + $0xb8] sm:$0xff]
        %v1506 = vld [vmem:[%s3 + $0xc0] sm:$0xff]
        %v1507 = vld [vmem:[%s3 + $0xc8] sm:$0xff]
        %v1508 = vld [vmem:[%s3 + $0xd0] sm:$0xff]
        %v1509 = vld [vmem:[%s3 + $0xd8] sm:$0xff]
        %v1510 = vld [vmem:[%s3 + $0xe0] sm:$0xff]
        %v1511 = vld [vmem:[%s3 + $0xe8] sm:$0xff]
        %v1512 = vld [vmem:[%s3 + $0xf0] sm:$0xff]
        %v1513 = vld [vmem:[%s3 + $0xf8] sm:$0xff]
        %v1514 = vld [vmem:[%s3 + $0x100] sm:$0xff]
        %v1515 = vld [vmem:[%s3 + $0x108] sm:$0xff]
        %v1516 = vld [vmem:[%s3 + $0x110] sm:$0xff]
        %v1517 = vld [vmem:[%s3 + $0x118] sm:$0xff]
        %v1518 = vld [vmem:[%s3 + $0x120] sm:$0xff]
        %v1519 = vld [vmem:[%s3 + $0x128] sm:$0xff]
        %v1520 = vld [vmem:[%s3 + $0x130] sm:$0xff]
        %v1521 = vld [vmem:[%s3 + $0x138] sm:$0xff]
        %v1522 = vld [vmem:[%s3 + $0x140] sm:$0xff]
        %v1523 = vld [vmem:[%s3 + $0x148] sm:$0xff]
        %v1524 = vld [vmem:[%s3 + $0x150] sm:$0xff]
        %v1525 = vld [vmem:[%s3 + $0x158] sm:$0xff]
        %v1526 = vld [vmem:[%s3 + $0x160] sm:$0xff]
        %v1527 = vld [vmem:[%s3 + $0x168] sm:$0xff]
        %v1528 = vld [vmem:[%s3 + $0x170] sm:$0xff]
        %v1529 = vld [vmem:[%s3 + $0x178] sm:$0xff]
        %v1530 = vld [vmem:[%s3 + $0x180] sm:$0xff]
        %v1531 = vld [vmem:[%s3 + $0x188] sm:$0xff]
        %v1532 = vld [vmem:[%s3 + $0x190] sm:$0xff]
        %v1533 = vld [vmem:[%s3 + $0x198] sm:$0xff]
        %v1534 = vld [vmem:[%s3 + $0x1a0] sm:$0xff]
        %v1535 = vld [vmem:[%s3 + $0x1a8] sm:$0xff]
        %v1536 = vld [vmem:[%s3 + $0x1b0] sm:$0xff]
        %v1537 = vld [vmem:[%s3 + $0x1b8] sm:$0xff]
        %v1538 = vld [vmem:[%s3 + $0x1c0] sm:$0xff]
        %v1539 = vld [vmem:[%s3 + $0x1c8] sm:$0xff]
        %v1540 = vld [vmem:[%s3 + $0x1d0] sm:$0xff]
        %v1541 = vld [vmem:[%s3 + $0x1d8] sm:$0xff]
        %v1542 = vld [vmem:[%s3 + $0x1e0] sm:$0xff]
        %v1543 = vld [vmem:[%s3 + $0x1e8] sm:$0xff]
        %v1544 = vld [vmem:[%s3 + $0x1f0] sm:$0xff]
        %v1545 = vld [vmem:[%s3 + $0x1f8] sm:$0xff]
        %v1546 = vpack.c.bf16 %v1419, %v1418
        %v1547 = vpack.c.bf16 %v1421, %v1420
        %v1548 = vpack.c.bf16 %v1423, %v1422
        %v1549 = vpack.c.bf16 %v1425, %v1424
        %v1550 = vpack.c.bf16 %v1427, %v1426
        %v1551 = vpack.c.bf16 %v1429, %v1428
        %v1552 = vpack.c.bf16 %v1431, %v1430
        %v1553 = vpack.c.bf16 %v1433, %v1432
        %v1554 = vpack.c.bf16 %v1435, %v1434
        %v1555 = vpack.c.bf16 %v1437, %v1436
        %v1556 = vpack.c.bf16 %v1439, %v1438
        %v1557 = vpack.c.bf16 %v1441, %v1440
        %v1558 = vpack.c.bf16 %v1443, %v1442
        %v1559 = vpack.c.bf16 %v1445, %v1444
        %v1560 = vpack.c.bf16 %v1447, %v1446
        %v1561 = vpack.c.bf16 %v1449, %v1448
        %v1562 = vpack.c.bf16 %v1451, %v1450
        %v1563 = vpack.c.bf16 %v1453, %v1452
        %v1564 = vpack.c.bf16 %v1455, %v1454
        %v1565 = vpack.c.bf16 %v1457, %v1456
        %v1566 = vpack.c.bf16 %v1459, %v1458
        %v1567 = vpack.c.bf16 %v1461, %v1460
        %v1568 = vpack.c.bf16 %v1463, %v1462
        %v1569 = vpack.c.bf16 %v1465, %v1464
        %v1570 = vpack.c.bf16 %v1467, %v1466
        %v1571 = vpack.c.bf16 %v1469, %v1468
        %v1572 = vpack.c.bf16 %v1471, %v1470
        %v1573 = vpack.c.bf16 %v1473, %v1472
        %v1574 = vpack.c.bf16 %v1475, %v1474
        %v1575 = vpack.c.bf16 %v1477, %v1476
        %v1576 = vpack.c.bf16 %v1479, %v1478
        %v1577 = vpack.c.bf16 %v1481, %v1480
        %v1642 = vunpack.c.l.b16 %v1482
        %v1643 = vunpack.c.h.b16 %v1482
        %v1644 = vunpack.c.l.b16 %v1483
        %v1645 = vunpack.c.h.b16 %v1483
        %v1646 = vunpack.c.l.b16 %v1484
        %v1647 = vunpack.c.h.b16 %v1484
        %v1648 = vunpack.c.l.b16 %v1485
        %v1649 = vunpack.c.h.b16 %v1485
        %v1650 = vunpack.c.l.b16 %v1486
        %v1651 = vunpack.c.h.b16 %v1486
        %v1652 = vunpack.c.l.b16 %v1487
        %v1653 = vunpack.c.h.b16 %v1487
        %v1654 = vunpack.c.l.b16 %v1488
        %v1655 = vunpack.c.h.b16 %v1488
        %v1656 = vunpack.c.l.b16 %v1489
        %v1657 = vunpack.c.h.b16 %v1489
        %v1658 = vunpack.c.l.b16 %v1490
        %v1659 = vunpack.c.h.b16 %v1490
        %v1660 = vunpack.c.l.b16 %v1491
        %v1661 = vunpack.c.h.b16 %v1491
        %v1662 = vunpack.c.l.b16 %v1492
        %v1663 = vunpack.c.h.b16 %v1492
        %v1664 = vunpack.c.l.b16 %v1493
        %v1665 = vunpack.c.h.b16 %v1493
        %v1666 = vunpack.c.l.b16 %v1494
        %v1667 = vunpack.c.h.b16 %v1494
        %v1668 = vunpack.c.l.b16 %v1495
        %v1669 = vunpack.c.h.b16 %v1495
        %v1670 = vunpack.c.l.b16 %v1496
        %v1671 = vunpack.c.h.b16 %v1496
        %v1672 = vunpack.c.l.b16 %v1497
        %v1673 = vunpack.c.h.b16 %v1497
        %v1674 = vunpack.c.l.b16 %v1498
        %v1675 = vunpack.c.h.b16 %v1498
        %v1676 = vunpack.c.l.b16 %v1499
        %v1677 = vunpack.c.h.b16 %v1499
        %v1678 = vunpack.c.l.b16 %v1500
        %v1679 = vunpack.c.h.b16 %v1500
        %v1680 = vunpack.c.l.b16 %v1501
        %v1681 = vunpack.c.h.b16 %v1501
        %v1682 = vunpack.c.l.b16 %v1502
        %v1683 = vunpack.c.h.b16 %v1502
        %v1684 = vunpack.c.l.b16 %v1503
        %v1685 = vunpack.c.h.b16 %v1503
        %v1686 = vunpack.c.l.b16 %v1504
        %v1687 = vunpack.c.h.b16 %v1504
        %v1688 = vunpack.c.l.b16 %v1505
        %v1689 = vunpack.c.h.b16 %v1505
        %v1690 = vunpack.c.l.b16 %v1506
        %v1691 = vunpack.c.h.b16 %v1506
        %v1692 = vunpack.c.l.b16 %v1507
        %v1693 = vunpack.c.h.b16 %v1507
        %v1694 = vunpack.c.l.b16 %v1508
        %v1695 = vunpack.c.h.b16 %v1508
        %v1696 = vunpack.c.l.b16 %v1509
        %v1697 = vunpack.c.h.b16 %v1509
        %v1698 = vunpack.c.l.b16 %v1510
        %v1699 = vunpack.c.h.b16 %v1510
        %v1700 = vunpack.c.l.b16 %v1511
        %v1701 = vunpack.c.h.b16 %v1511
        %v1702 = vunpack.c.l.b16 %v1512
        %v1703 = vunpack.c.h.b16 %v1512
        %v1704 = vunpack.c.l.b16 %v1513
        %v1705 = vunpack.c.h.b16 %v1513
        %v1706 = vunpack.c.l.b16 %v1514
        %v1707 = vunpack.c.h.b16 %v1514
        %v1708 = vunpack.c.l.b16 %v1515
        %v1709 = vunpack.c.h.b16 %v1515
        %v1710 = vunpack.c.l.b16 %v1516
        %v1711 = vunpack.c.h.b16 %v1516
        %v1712 = vunpack.c.l.b16 %v1517
        %v1713 = vunpack.c.h.b16 %v1517
        %v1714 = vunpack.c.l.b16 %v1518
        %v1715 = vunpack.c.h.b16 %v1518
        %v1716 = vunpack.c.l.b16 %v1519
        %v1717 = vunpack.c.h.b16 %v1519
        %v1718 = vunpack.c.l.b16 %v1520
        %v1719 = vunpack.c.h.b16 %v1520
        %v1720 = vunpack.c.l.b16 %v1521
        %v1721 = vunpack.c.h.b16 %v1521
        %v1722 = vunpack.c.l.b16 %v1522
        %v1723 = vunpack.c.h.b16 %v1522
        %v1724 = vunpack.c.l.b16 %v1523
        %v1725 = vunpack.c.h.b16 %v1523
        %v1726 = vunpack.c.l.b16 %v1524
        %v1727 = vunpack.c.h.b16 %v1524
        %v1728 = vunpack.c.l.b16 %v1525
        %v1729 = vunpack.c.h.b16 %v1525
        %v1730 = vunpack.c.l.b16 %v1526
        %v1731 = vunpack.c.h.b16 %v1526
        %v1732 = vunpack.c.l.b16 %v1527
        %v1733 = vunpack.c.h.b16 %v1527
        %v1734 = vunpack.c.l.b16 %v1528
        %v1735 = vunpack.c.h.b16 %v1528
        %v1736 = vunpack.c.l.b16 %v1529
        %v1737 = vunpack.c.h.b16 %v1529
        %v1738 = vunpack.c.l.b16 %v1530
        %v1739 = vunpack.c.h.b16 %v1530
        %v1740 = vunpack.c.l.b16 %v1531
        %v1741 = vunpack.c.h.b16 %v1531
        %v1742 = vunpack.c.l.b16 %v1532
        %v1743 = vunpack.c.h.b16 %v1532
        %v1744 = vunpack.c.l.b16 %v1533
        %v1745 = vunpack.c.h.b16 %v1533
        %v1746 = vunpack.c.l.b16 %v1534
        %v1747 = vunpack.c.h.b16 %v1534
        %v1748 = vunpack.c.l.b16 %v1535
        %v1749 = vunpack.c.h.b16 %v1535
        %v1750 = vunpack.c.l.b16 %v1536
        %v1751 = vunpack.c.h.b16 %v1536
        %v1752 = vunpack.c.l.b16 %v1537
        %v1753 = vunpack.c.h.b16 %v1537
        %v1754 = vunpack.c.l.b16 %v1538
        %v1755 = vunpack.c.h.b16 %v1538
        %v1756 = vunpack.c.l.b16 %v1539
        %v1757 = vunpack.c.h.b16 %v1539
        %v1758 = vunpack.c.l.b16 %v1540
        %v1759 = vunpack.c.h.b16 %v1540
        %v1760 = vunpack.c.l.b16 %v1541
        %v1761 = vunpack.c.h.b16 %v1541
        %v1762 = vunpack.c.l.b16 %v1542
        %v1763 = vunpack.c.h.b16 %v1542
        %v1764 = vunpack.c.l.b16 %v1543
        %v1765 = vunpack.c.h.b16 %v1543
        %v1766 = vunpack.c.l.b16 %v1544
        %v1767 = vunpack.c.h.b16 %v1544
        %v1768 = vunpack.c.l.b16 %v1545
        %v1769 = vunpack.c.h.b16 %v1545
        %v1770 = vpack.c.b16 %v1646, %v1642
        %v1771 = vpack.c.b16 %v1647, %v1643
        %v1772 = vpack.c.b16 %v1648, %v1644
        %v1773 = vpack.c.b16 %v1649, %v1645
        %v1774 = vpack.c.b16 %v1654, %v1650
        %v1775 = vpack.c.b16 %v1655, %v1651
        %v1776 = vpack.c.b16 %v1656, %v1652
        %v1777 = vpack.c.b16 %v1657, %v1653
        %v1778 = vpack.c.b16 %v1662, %v1658
        %v1779 = vpack.c.b16 %v1663, %v1659
        %v1780 = vpack.c.b16 %v1664, %v1660
        %v1781 = vpack.c.b16 %v1665, %v1661
        %v1782 = vpack.c.b16 %v1670, %v1666
        %v1783 = vpack.c.b16 %v1671, %v1667
        %v1784 = vpack.c.b16 %v1672, %v1668
        %v1785 = vpack.c.b16 %v1673, %v1669
        %v1786 = vpack.c.b16 %v1678, %v1674
        %v1787 = vpack.c.b16 %v1679, %v1675
        %v1788 = vpack.c.b16 %v1680, %v1676
        %v1789 = vpack.c.b16 %v1681, %v1677
        %v1790 = vpack.c.b16 %v1686, %v1682
        %v1791 = vpack.c.b16 %v1687, %v1683
        %v1792 = vpack.c.b16 %v1688, %v1684
        %v1793 = vpack.c.b16 %v1689, %v1685
        %v1794 = vpack.c.b16 %v1694, %v1690
        %v1795 = vpack.c.b16 %v1695, %v1691
        %v1796 = vpack.c.b16 %v1696, %v1692
        %v1797 = vpack.c.b16 %v1697, %v1693
        %v1798 = vpack.c.b16 %v1702, %v1698
        %v1799 = vpack.c.b16 %v1703, %v1699
        %v1800 = vpack.c.b16 %v1704, %v1700
        %v1801 = vpack.c.b16 %v1705, %v1701
        %v1802 = vpack.c.b16 %v1710, %v1706
        %v1803 = vpack.c.b16 %v1711, %v1707
        %v1804 = vpack.c.b16 %v1712, %v1708
        %v1805 = vpack.c.b16 %v1713, %v1709
        %v1806 = vpack.c.b16 %v1718, %v1714
        %v1807 = vpack.c.b16 %v1719, %v1715
        %v1808 = vpack.c.b16 %v1720, %v1716
        %v1809 = vpack.c.b16 %v1721, %v1717
        %v1810 = vpack.c.b16 %v1726, %v1722
        %v1811 = vpack.c.b16 %v1727, %v1723
        %v1812 = vpack.c.b16 %v1728, %v1724
        %v1813 = vpack.c.b16 %v1729, %v1725
        %v1814 = vpack.c.b16 %v1734, %v1730
        %v1815 = vpack.c.b16 %v1735, %v1731
        %v1816 = vpack.c.b16 %v1736, %v1732
        %v1817 = vpack.c.b16 %v1737, %v1733
        %v1818 = vpack.c.b16 %v1742, %v1738
        %v1819 = vpack.c.b16 %v1743, %v1739
        %v1820 = vpack.c.b16 %v1744, %v1740
        %v1821 = vpack.c.b16 %v1745, %v1741
        %v1822 = vpack.c.b16 %v1750, %v1746
        %v1823 = vpack.c.b16 %v1751, %v1747
        %v1824 = vpack.c.b16 %v1752, %v1748
        %v1825 = vpack.c.b16 %v1753, %v1749
        %v1826 = vpack.c.b16 %v1758, %v1754
        %v1827 = vpack.c.b16 %v1759, %v1755
        %v1828 = vpack.c.b16 %v1760, %v1756
        %v1829 = vpack.c.b16 %v1761, %v1757
        %v1830 = vpack.c.b16 %v1766, %v1762
        %v1831 = vpack.c.b16 %v1767, %v1763
        %v1832 = vpack.c.b16 %v1768, %v1764
        %v1833 = vpack.c.b16 %v1769, %v1765
        %1898 = vmatprep.subr.bf16.mxu0 0
        %1899 = vmatpush1.bf16.msra.mxu0 %v1553
        %1900 = vmatprep.subr.bf16.mxu0 0
        %1901 = vmatpush1.bf16.msra.mxu0 %v1552
        %1902 = vmatprep.subr.bf16.mxu0 0
        %1903 = vmatpush1.bf16.msra.mxu0 %v1551
        %1904 = vmatprep.subr.bf16.mxu0 0
        %1905 = vmatpush1.bf16.msra.mxu0 %v1550
        %1906 = vmatprep.subr.bf16.mxu0 0
        %1907 = vmatpush1.bf16.msra.mxu0 %v1549
        %1908 = vmatprep.subr.bf16.mxu0 0
        %1909 = vmatpush1.bf16.msra.mxu0 %v1548
        %1910 = vmatprep.subr.bf16.mxu0 0
        %1911 = vmatpush1.bf16.msra.mxu0 %v1547
        %1912 = vmatprep.subr.bf16.mxu0 0
        %1913 = vmatpush1.bf16.msra.mxu0 %v1546
        %1914 = vmatprep.subr.bf16.mxu0 0
        %1915 = vmatpush2.bf16.msra.mxu0 %v1561
        %1916 = vmatprep.subr.bf16.mxu0 0
        %1917 = vmatpush2.bf16.msra.mxu0 %v1560
        %1918 = vmatprep.subr.bf16.mxu0 0
        %1919 = vmatpush2.bf16.msra.mxu0 %v1559
        %1920 = vmatprep.subr.bf16.mxu0 0
        %1921 = vmatpush2.bf16.msra.mxu0 %v1558
        %1922 = vmatprep.subr.bf16.mxu0 0
        %1923 = vmatpush2.bf16.msra.mxu0 %v1557
        %1924 = vmatprep.subr.bf16.mxu0 0
        %1925 = vmatpush2.bf16.msra.mxu0 %v1556
        %1926 = vmatprep.subr.bf16.mxu0 0
        %1927 = vmatpush2.bf16.msra.mxu0 %v1555
        %1928 = vmatprep.subr.bf16.mxu0 0
        %1929 = vmatpush2.bf16.msra.mxu0 %v1554
        %1930 = vmatprep.mubr.bf16.mxu0 %v1771
        %1931 = vmatmul.mubr.bf16.gmra.mxu0 %v1770
        %v1932 = vpop.f32.mrf.mxu0
        %v1933 = vadd.f32 0.0, %v1932
        %v1934 = vpop.f32.mrf.mxu0
        %v1935 = vpop.f32.mrf.mxu0
        %v1936 = vadd.f32 0.0, %v1935
        %v1937 = vpop.f32.mrf.mxu0
        %1938 = vmatprep.mubr.bf16.mxu0 %v1775
        %1939 = vmatmul.mubr.bf16.gmra.mxu0 %v1774
        %v1940 = vpop.f32.mrf.mxu0
        %v1941 = vadd.f32 0.0, %v1940
        %v1942 = vpop.f32.mrf.mxu0
        %v1943 = vpop.f32.mrf.mxu0
        %v1944 = vadd.f32 0.0, %v1943
        %v1945 = vpop.f32.mrf.mxu0
        %1946 = vmatprep.mubr.bf16.mxu0 %v1779
        %1947 = vmatmul.mubr.bf16.gmra.mxu0 %v1778
        %v1948 = vpop.f32.mrf.mxu0
        %v1949 = vadd.f32 0.0, %v1948
        %v1950 = vpop.f32.mrf.mxu0
        %v1951 = vpop.f32.mrf.mxu0
        %v1952 = vadd.f32 0.0, %v1951
        %v1953 = vpop.f32.mrf.mxu0
        %1954 = vmatprep.mubr.bf16.mxu0 %v1783
        %1955 = vmatmul.mubr.bf16.gmra.mxu0 %v1782
        %v1956 = vpop.f32.mrf.mxu0
        %v1957 = vadd.f32 0.0, %v1956
        %v1958 = vpop.f32.mrf.mxu0
        %v1959 = vpop.f32.mrf.mxu0
        %v1960 = vadd.f32 0.0, %v1959
        %v1961 = vpop.f32.mrf.mxu0
        %1962 = vmatprep.mubr.bf16.mxu0 %v1787
        %1963 = vmatmul.mubr.bf16.gmra.mxu0 %v1786
        %v1964 = vpop.f32.mrf.mxu0
        %v1965 = vadd.f32 0.0, %v1964
        %v1966 = vpop.f32.mrf.mxu0
        %v1967 = vpop.f32.mrf.mxu0
        %v1968 = vadd.f32 0.0, %v1967
        %v1969 = vpop.f32.mrf.mxu0
        %1970 = vmatprep.mubr.bf16.mxu0 %v1791
        %1971 = vmatmul.mubr.bf16.gmra.mxu0 %v1790
        %v1972 = vpop.f32.mrf.mxu0
        %v1973 = vadd.f32 0.0, %v1972
        %v1974 = vpop.f32.mrf.mxu0
        %v1975 = vpop.f32.mrf.mxu0
        %v1976 = vadd.f32 0.0, %v1975
        %v1977 = vpop.f32.mrf.mxu0
        %1978 = vmatprep.mubr.bf16.mxu0 %v1795
        %1979 = vmatmul.mubr.bf16.gmra.mxu0 %v1794
        %v1980 = vpop.f32.mrf.mxu0
        %v1981 = vadd.f32 0.0, %v1980
        %v1982 = vpop.f32.mrf.mxu0
        %v1983 = vpop.f32.mrf.mxu0
        %v1984 = vadd.f32 0.0, %v1983
        %v1985 = vpop.f32.mrf.mxu0
        %1986 = vmatprep.mubr.bf16.mxu0 %v1799
        %1987 = vmatmul.mubr.bf16.gmra.mxu0 %v1798
        %v1988 = vpop.f32.mrf.mxu0
        %v1989 = vadd.f32 0.0, %v1988
        %v1990 = vpop.f32.mrf.mxu0
        %v1991 = vpop.f32.mrf.mxu0
        %v1992 = vadd.f32 0.0, %v1991
        %v1993 = vpop.f32.mrf.mxu0
        %1994 = vmatprep.mubr.bf16.mxu0 %v1803
        %1995 = vmatmul.mubr.bf16.gmra.mxu0 %v1802
        %v1996 = vpop.f32.mrf.mxu0
        %v1997 = vadd.f32 0.0, %v1996
        %v1998 = vpop.f32.mrf.mxu0
        %v1999 = vpop.f32.mrf.mxu0
        %v2000 = vadd.f32 0.0, %v1999
        %v2001 = vpop.f32.mrf.mxu0
        %2002 = vmatprep.mubr.bf16.mxu0 %v1807
        %2003 = vmatmul.mubr.bf16.gmra.mxu0 %v1806
        %v2004 = vpop.f32.mrf.mxu0
        %v2005 = vadd.f32 0.0, %v2004
        %v2006 = vpop.f32.mrf.mxu0
        %v2007 = vpop.f32.mrf.mxu0
        %v2008 = vadd.f32 0.0, %v2007
        %v2009 = vpop.f32.mrf.mxu0
        %2010 = vmatprep.mubr.bf16.mxu0 %v1811
        %2011 = vmatmul.mubr.bf16.gmra.mxu0 %v1810
        %v2012 = vpop.f32.mrf.mxu0
        %v2013 = vadd.f32 0.0, %v2012
        %v2014 = vpop.f32.mrf.mxu0
        %v2015 = vpop.f32.mrf.mxu0
        %v2016 = vadd.f32 0.0, %v2015
        %v2017 = vpop.f32.mrf.mxu0
        %2018 = vmatprep.mubr.bf16.mxu0 %v1815
        %2019 = vmatmul.mubr.bf16.gmra.mxu0 %v1814
        %v2020 = vpop.f32.mrf.mxu0
        %v2021 = vadd.f32 0.0, %v2020
        %v2022 = vpop.f32.mrf.mxu0
        %v2023 = vpop.f32.mrf.mxu0
        %v2024 = vadd.f32 0.0, %v2023
        %v2025 = vpop.f32.mrf.mxu0
        %2026 = vmatprep.mubr.bf16.mxu0 %v1819
        %2027 = vmatmul.mubr.bf16.gmra.mxu0 %v1818
        %v2028 = vpop.f32.mrf.mxu0
        %v2029 = vadd.f32 0.0, %v2028
        %v2030 = vpop.f32.mrf.mxu0
        %v2031 = vpop.f32.mrf.mxu0
        %v2032 = vadd.f32 0.0, %v2031
        %v2033 = vpop.f32.mrf.mxu0
        %2034 = vmatprep.mubr.bf16.mxu0 %v1823
        %2035 = vmatmul.mubr.bf16.gmra.mxu0 %v1822
        %v2036 = vpop.f32.mrf.mxu0
        %v2037 = vadd.f32 0.0, %v2036
        %v2038 = vpop.f32.mrf.mxu0
        %v2039 = vpop.f32.mrf.mxu0
        %v2040 = vadd.f32 0.0, %v2039
        %v2041 = vpop.f32.mrf.mxu0
        %2042 = vmatprep.mubr.bf16.mxu0 %v1827
        %2043 = vmatmul.mubr.bf16.gmra.mxu0 %v1826
        %v2044 = vpop.f32.mrf.mxu0
        %v2045 = vadd.f32 0.0, %v2044
        %v2046 = vpop.f32.mrf.mxu0
        %v2047 = vpop.f32.mrf.mxu0
        %v2048 = vadd.f32 0.0, %v2047
        %v2049 = vpop.f32.mrf.mxu0
        %2050 = vmatprep.mubr.bf16.mxu0 %v1831
        %2051 = vmatmul.mubr.bf16.gmra.mxu0 %v1830
        %v2052 = vpop.f32.mrf.mxu0
        %v2053 = vadd.f32 0.0, %v2052
        %v2054 = vpop.f32.mrf.mxu0
        %v2055 = vpop.f32.mrf.mxu0
        %v2056 = vadd.f32 0.0, %v2055
        %v2057 = vpop.f32.mrf.mxu0
        %2058 = vdwg.mxu0
        %2059 = vmatprep.subr.bf16.mxu0 0
        %2060 = vmatpush1.bf16.msra.mxu0 %v1569
        %2061 = vmatprep.subr.bf16.mxu0 0
        %2062 = vmatpush1.bf16.msra.mxu0 %v1568
        %2063 = vmatprep.subr.bf16.mxu0 0
        %2064 = vmatpush1.bf16.msra.mxu0 %v1567
        %2065 = vmatprep.subr.bf16.mxu0 0
        %2066 = vmatpush1.bf16.msra.mxu0 %v1566
        %2067 = vmatprep.subr.bf16.mxu0 0
        %2068 = vmatpush1.bf16.msra.mxu0 %v1565
        %2069 = vmatprep.subr.bf16.mxu0 0
        %2070 = vmatpush1.bf16.msra.mxu0 %v1564
        %2071 = vmatprep.subr.bf16.mxu0 0
        %2072 = vmatpush1.bf16.msra.mxu0 %v1563
        %2073 = vmatprep.subr.bf16.mxu0 0
        %2074 = vmatpush1.bf16.msra.mxu0 %v1562
        %2075 = vmatprep.subr.bf16.mxu0 0
        %2076 = vmatpush2.bf16.msra.mxu0 %v1577
        %2077 = vmatprep.subr.bf16.mxu0 0
        %2078 = vmatpush2.bf16.msra.mxu0 %v1576
        %2079 = vmatprep.subr.bf16.mxu0 0
        %2080 = vmatpush2.bf16.msra.mxu0 %v1575
        %2081 = vmatprep.subr.bf16.mxu0 0
        %2082 = vmatpush2.bf16.msra.mxu0 %v1574
        %2083 = vmatprep.subr.bf16.mxu0 0
        %2084 = vmatpush2.bf16.msra.mxu0 %v1573
        %2085 = vmatprep.subr.bf16.mxu0 0
        %2086 = vmatpush2.bf16.msra.mxu0 %v1572
        %2087 = vmatprep.subr.bf16.mxu0 0
        %2088 = vmatpush2.bf16.msra.mxu0 %v1571
        %2089 = vmatprep.subr.bf16.mxu0 0
        %2090 = vmatpush2.bf16.msra.mxu0 %v1570
        %2091 = vmatprep.mubr.bf16.mxu0 %v1773
        %2092 = vmatmul.mubr.bf16.gmra.mxu0 %v1772
        %v2093 = vpop.f32.mrf.mxu0
        %v2094 = vadd.f32 %v1933, %v2093
        %v2095 = vpop.f32.mrf.mxu0
        %v2096 = vpop.f32.mrf.mxu0
        %v2097 = vadd.f32 %v1936, %v2096
        %v2098 = vpop.f32.mrf.mxu0
        %2099 = vmatprep.mubr.bf16.mxu0 %v1777
        %2100 = vmatmul.mubr.bf16.gmra.mxu0 %v1776
        %v2101 = vpop.f32.mrf.mxu0
        %v2102 = vadd.f32 %v1941, %v2101
        %v2103 = vpop.f32.mrf.mxu0
        %v2104 = vpop.f32.mrf.mxu0
        %v2105 = vadd.f32 %v1944, %v2104
        %v2106 = vpop.f32.mrf.mxu0
        %2107 = vmatprep.mubr.bf16.mxu0 %v1781
        %2108 = vmatmul.mubr.bf16.gmra.mxu0 %v1780
        %v2109 = vpop.f32.mrf.mxu0
        %v2110 = vadd.f32 %v1949, %v2109
        %v2111 = vpop.f32.mrf.mxu0
        %v2112 = vpop.f32.mrf.mxu0
        %v2113 = vadd.f32 %v1952, %v2112
        %v2114 = vpop.f32.mrf.mxu0
        %2115 = vmatprep.mubr.bf16.mxu0 %v1785
        %2116 = vmatmul.mubr.bf16.gmra.mxu0 %v1784
        %v2117 = vpop.f32.mrf.mxu0
        %v2118 = vadd.f32 %v1957, %v2117
        %v2119 = vpop.f32.mrf.mxu0
        %v2120 = vpop.f32.mrf.mxu0
        %v2121 = vadd.f32 %v1960, %v2120
        %v2122 = vpop.f32.mrf.mxu0
        %2123 = vmatprep.mubr.bf16.mxu0 %v1789
        %2124 = vmatmul.mubr.bf16.gmra.mxu0 %v1788
        %v2125 = vpop.f32.mrf.mxu0
        %v2126 = vadd.f32 %v1965, %v2125
        %v2127 = vpop.f32.mrf.mxu0
        %v2128 = vpop.f32.mrf.mxu0
        %v2129 = vadd.f32 %v1968, %v2128
        %v2130 = vpop.f32.mrf.mxu0
        %2131 = vmatprep.mubr.bf16.mxu0 %v1793
        %2132 = vmatmul.mubr.bf16.gmra.mxu0 %v1792
        %v2133 = vpop.f32.mrf.mxu0
        %v2134 = vadd.f32 %v1973, %v2133
        %v2135 = vpop.f32.mrf.mxu0
        %v2136 = vpop.f32.mrf.mxu0
        %v2137 = vadd.f32 %v1976, %v2136
        %v2138 = vpop.f32.mrf.mxu0
        %2139 = vmatprep.mubr.bf16.mxu0 %v1797
        %2140 = vmatmul.mubr.bf16.gmra.mxu0 %v1796
        %v2141 = vpop.f32.mrf.mxu0
        %v2142 = vadd.f32 %v1981, %v2141
        %v2143 = vpop.f32.mrf.mxu0
        %v2144 = vpop.f32.mrf.mxu0
        %v2145 = vadd.f32 %v1984, %v2144
        %v2146 = vpop.f32.mrf.mxu0
        %2147 = vmatprep.mubr.bf16.mxu0 %v1801
        %2148 = vmatmul.mubr.bf16.gmra.mxu0 %v1800
        %v2149 = vpop.f32.mrf.mxu0
        %v2150 = vadd.f32 %v1989, %v2149
        %v2151 = vpop.f32.mrf.mxu0
        %v2152 = vpop.f32.mrf.mxu0
        %v2153 = vadd.f32 %v1992, %v2152
        %v2154 = vpop.f32.mrf.mxu0
        %2155 = vmatprep.mubr.bf16.mxu0 %v1805
        %2156 = vmatmul.mubr.bf16.gmra.mxu0 %v1804
        %v2157 = vpop.f32.mrf.mxu0
        %v2158 = vadd.f32 %v1997, %v2157
        %v2159 = vpop.f32.mrf.mxu0
        %v2160 = vpop.f32.mrf.mxu0
        %v2161 = vadd.f32 %v2000, %v2160
        %v2162 = vpop.f32.mrf.mxu0
        %2163 = vmatprep.mubr.bf16.mxu0 %v1809
        %2164 = vmatmul.mubr.bf16.gmra.mxu0 %v1808
        %v2165 = vpop.f32.mrf.mxu0
        %v2166 = vadd.f32 %v2005, %v2165
        %v2167 = vpop.f32.mrf.mxu0
        %v2168 = vpop.f32.mrf.mxu0
        %v2169 = vadd.f32 %v2008, %v2168
        %v2170 = vpop.f32.mrf.mxu0
        %2171 = vmatprep.mubr.bf16.mxu0 %v1813
        %2172 = vmatmul.mubr.bf16.gmra.mxu0 %v1812
        %v2173 = vpop.f32.mrf.mxu0
        %v2174 = vadd.f32 %v2013, %v2173
        %v2175 = vpop.f32.mrf.mxu0
        %v2176 = vpop.f32.mrf.mxu0
        %v2177 = vadd.f32 %v2016, %v2176
        %v2178 = vpop.f32.mrf.mxu0
        %2179 = vmatprep.mubr.bf16.mxu0 %v1817
        %2180 = vmatmul.mubr.bf16.gmra.mxu0 %v1816
        %v2181 = vpop.f32.mrf.mxu0
        %v2182 = vadd.f32 %v2021, %v2181
        %v2183 = vpop.f32.mrf.mxu0
        %v2184 = vpop.f32.mrf.mxu0
        %v2185 = vadd.f32 %v2024, %v2184
        %v2186 = vpop.f32.mrf.mxu0
        %2187 = vmatprep.mubr.bf16.mxu0 %v1821
        %2188 = vmatmul.mubr.bf16.gmra.mxu0 %v1820
        %v2189 = vpop.f32.mrf.mxu0
        %v2190 = vadd.f32 %v2029, %v2189
        %v2191 = vpop.f32.mrf.mxu0
        %v2192 = vpop.f32.mrf.mxu0
        %v2193 = vadd.f32 %v2032, %v2192
        %v2194 = vpop.f32.mrf.mxu0
        %2195 = vmatprep.mubr.bf16.mxu0 %v1825
        %2196 = vmatmul.mubr.bf16.gmra.mxu0 %v1824
        %v2197 = vpop.f32.mrf.mxu0
        %v2198 = vadd.f32 %v2037, %v2197
        %v2199 = vpop.f32.mrf.mxu0
        %v2200 = vpop.f32.mrf.mxu0
        %v2201 = vadd.f32 %v2040, %v2200
        %v2202 = vpop.f32.mrf.mxu0
        %2203 = vmatprep.mubr.bf16.mxu0 %v1829
        %2204 = vmatmul.mubr.bf16.gmra.mxu0 %v1828
        %v2205 = vpop.f32.mrf.mxu0
        %v2206 = vadd.f32 %v2045, %v2205
        %v2207 = vpop.f32.mrf.mxu0
        %v2208 = vpop.f32.mrf.mxu0
        %v2209 = vadd.f32 %v2048, %v2208
        %v2210 = vpop.f32.mrf.mxu0
        %2211 = vmatprep.mubr.bf16.mxu0 %v1833
        %2212 = vmatmul.mubr.bf16.gmra.mxu0 %v1832
        %v2213 = vpop.f32.mrf.mxu0
        %v2214 = vadd.f32 %v2053, %v2213
        %v2215 = vpop.f32.mrf.mxu0
        %v2216 = vpop.f32.mrf.mxu0
        %v2217 = vadd.f32 %v2056, %v2216
        %v2218 = vpop.f32.mrf.mxu0
        %2219 = vdwg.mxu0
        %v2220 = vpack.c.bf16 %v2097, %v2094
        %v2221 = vpack.c.bf16 %v2105, %v2102
        %v2222 = vpack.c.bf16 %v2113, %v2110
        %v2223 = vpack.c.bf16 %v2121, %v2118
        %v2224 = vpack.c.bf16 %v2129, %v2126
        %v2225 = vpack.c.bf16 %v2137, %v2134
        %v2226 = vpack.c.bf16 %v2145, %v2142
        %v2227 = vpack.c.bf16 %v2153, %v2150
        %v2228 = vpack.c.bf16 %v2161, %v2158
        %v2229 = vpack.c.bf16 %v2169, %v2166
        %v2230 = vpack.c.bf16 %v2177, %v2174
        %v2231 = vpack.c.bf16 %v2185, %v2182
        %v2232 = vpack.c.bf16 %v2193, %v2190
        %v2233 = vpack.c.bf16 %v2201, %v2198
        %v2234 = vpack.c.bf16 %v2209, %v2206
        %v2235 = vpack.c.bf16 %v2217, %v2214
        %v2252 = vunpack.c.l.b16 %v2220
        %v2253 = vunpack.c.h.b16 %v2220
        %v2254 = vunpack.c.l.b16 %v2221
        %v2255 = vunpack.c.h.b16 %v2221
        %v2256 = vunpack.c.l.b16 %v2222
        %v2257 = vunpack.c.h.b16 %v2222
        %v2258 = vunpack.c.l.b16 %v2223
        %v2259 = vunpack.c.h.b16 %v2223
        %v2260 = vunpack.c.l.b16 %v2224
        %v2261 = vunpack.c.h.b16 %v2224
        %v2262 = vunpack.c.l.b16 %v2225
        %v2263 = vunpack.c.h.b16 %v2225
        %v2264 = vunpack.c.l.b16 %v2226
        %v2265 = vunpack.c.h.b16 %v2226
        %v2266 = vunpack.c.l.b16 %v2227
        %v2267 = vunpack.c.h.b16 %v2227
        %v2268 = vunpack.c.l.b16 %v2228
        %v2269 = vunpack.c.h.b16 %v2228
        %v2270 = vunpack.c.l.b16 %v2229
        %v2271 = vunpack.c.h.b16 %v2229
        %v2272 = vunpack.c.l.b16 %v2230
        %v2273 = vunpack.c.h.b16 %v2230
        %v2274 = vunpack.c.l.b16 %v2231
        %v2275 = vunpack.c.h.b16 %v2231
        %v2276 = vunpack.c.l.b16 %v2232
        %v2277 = vunpack.c.h.b16 %v2232
        %v2278 = vunpack.c.l.b16 %v2233
        %v2279 = vunpack.c.h.b16 %v2233
        %v2280 = vunpack.c.l.b16 %v2234
        %v2281 = vunpack.c.h.b16 %v2234
        %v2282 = vunpack.c.l.b16 %v2235
        %v2283 = vunpack.c.h.b16 %v2235
        %v2284 = vpack.c.b16 %v2252, %v2252
        %v2285 = vpack.c.b16 %v2253, %v2253
        %v2286 = vpack.c.b16 %v2254, %v2254
        %v2287 = vpack.c.b16 %v2255, %v2255
        %v2288 = vpack.c.b16 %v2256, %v2256
        %v2289 = vpack.c.b16 %v2257, %v2257
        %v2290 = vpack.c.b16 %v2258, %v2258
        %v2291 = vpack.c.b16 %v2259, %v2259
        %v2292 = vpack.c.b16 %v2260, %v2260
        %v2293 = vpack.c.b16 %v2261, %v2261
        %v2294 = vpack.c.b16 %v2262, %v2262
        %v2295 = vpack.c.b16 %v2263, %v2263
        %v2296 = vpack.c.b16 %v2264, %v2264
        %v2297 = vpack.c.b16 %v2265, %v2265
        %v2298 = vpack.c.b16 %v2266, %v2266
        %v2299 = vpack.c.b16 %v2267, %v2267
        %v2300 = vpack.c.b16 %v2268, %v2268
        %v2301 = vpack.c.b16 %v2269, %v2269
        %v2302 = vpack.c.b16 %v2270, %v2270
        %v2303 = vpack.c.b16 %v2271, %v2271
        %v2304 = vpack.c.b16 %v2272, %v2272
        %v2305 = vpack.c.b16 %v2273, %v2273
        %v2306 = vpack.c.b16 %v2274, %v2274
        %v2307 = vpack.c.b16 %v2275, %v2275
        %v2308 = vpack.c.b16 %v2276, %v2276
        %v2309 = vpack.c.b16 %v2277, %v2277
        %v2310 = vpack.c.b16 %v2278, %v2278
        %v2311 = vpack.c.b16 %v2279, %v2279
        %v2312 = vpack.c.b16 %v2280, %v2280
        %v2313 = vpack.c.b16 %v2281, %v2281
        %v2314 = vpack.c.b16 %v2282, %v2282
        %v2315 = vpack.c.b16 %v2283, %v2283
        %2348 = vst [vmem:[%s315] sm:$0xf] %v2284
        %2349 = vst [vmem:[%s315 + $0x4] sm:$0xf] %v2285
        %2350 = vst [vmem:[%s315 + $0x8] sm:$0xf] %v2286
        %2351 = vst [vmem:[%s315 + $0xc] sm:$0xf] %v2287
        %2352 = vst [vmem:[%s315 + $0x10] sm:$0xf] %v2288
        %2353 = vst [vmem:[%s315 + $0x14] sm:$0xf] %v2289
        %2354 = vst [vmem:[%s315 + $0x18] sm:$0xf] %v2290
        %2355 = vst [vmem:[%s315 + $0x1c] sm:$0xf] %v2291
        %2356 = vst [vmem:[%s315 + $0x20] sm:$0xf] %v2292
        %2357 = vst [vmem:[%s315 + $0x24] sm:$0xf] %v2293
        %2358 = vst [vmem:[%s315 + $0x28] sm:$0xf] %v2294
        %2359 = vst [vmem:[%s315 + $0x2c] sm:$0xf] %v2295
        %2360 = vst [vmem:[%s315 + $0x30] sm:$0xf] %v2296
        %2361 = vst [vmem:[%s315 + $0x34] sm:$0xf] %v2297
        %2362 = vst [vmem:[%s315 + $0x38] sm:$0xf] %v2298
        %2363 = vst [vmem:[%s315 + $0x3c] sm:$0xf] %v2299
        %2364 = vst [vmem:[%s315 + $0x40] sm:$0xf] %v2300
        %2365 = vst [vmem:[%s315 + $0x44] sm:$0xf] %v2301
        %2366 = vst [vmem:[%s315 + $0x48] sm:$0xf] %v2302
        %2367 = vst [vmem:[%s315 + $0x4c] sm:$0xf] %v2303
        %2368 = vst [vmem:[%s315 + $0x50] sm:$0xf] %v2304
        %2369 = vst [vmem:[%s315 + $0x54] sm:$0xf] %v2305
        %2370 = vst [vmem:[%s315 + $0x58] sm:$0xf] %v2306
        %2371 = vst [vmem:[%s315 + $0x5c] sm:$0xf] %v2307
        %2372 = vst [vmem:[%s315 + $0x60] sm:$0xf] %v2308
        %2373 = vst [vmem:[%s315 + $0x64] sm:$0xf] %v2309
        %2374 = vst [vmem:[%s315 + $0x68] sm:$0xf] %v2310
        %2375 = vst [vmem:[%s315 + $0x6c] sm:$0xf] %v2311
        %2376 = vst [vmem:[%s315 + $0x70] sm:$0xf] %v2312
        %2377 = vst [vmem:[%s315 + $0x74] sm:$0xf] %v2313
        %2378 = vst [vmem:[%s315 + $0x78] sm:$0xf] %v2314
        %2379 = vst [vmem:[%s315 + $0x7c] sm:$0xf] %v2315
        %v2380 = vld [vmem:[%s338] sm:$0xff]
        %v2381 = vld [vmem:[%s338 + $0x8] sm:$0xff]
        %v2382 = vld [vmem:[%s338 + $0x10] sm:$0xff]
        %v2383 = vld [vmem:[%s338 + $0x18] sm:$0xff]
        %v2384 = vld [vmem:[%s338 + $0x20] sm:$0xff]
        %v2385 = vld [vmem:[%s338 + $0x28] sm:$0xff]
        %v2386 = vld [vmem:[%s338 + $0x30] sm:$0xff]
        %v2387 = vld [vmem:[%s338 + $0x38] sm:$0xff]
        %v2388 = vld [vmem:[%s338 + $0x40] sm:$0xff]
        %v2389 = vld [vmem:[%s338 + $0x48] sm:$0xff]
        %v2390 = vld [vmem:[%s338 + $0x50] sm:$0xff]
        %v2391 = vld [vmem:[%s338 + $0x58] sm:$0xff]
        %v2392 = vld [vmem:[%s338 + $0x60] sm:$0xff]
        %v2393 = vld [vmem:[%s338 + $0x68] sm:$0xff]
        %v2394 = vld [vmem:[%s338 + $0x70] sm:$0xff]
        %v2395 = vld [vmem:[%s338 + $0x78] sm:$0xff]
        %v2396 = vld [vmem:[%s338 + $0x80] sm:$0xff]
        %v2397 = vld [vmem:[%s338 + $0x88] sm:$0xff]
        %v2398 = vld [vmem:[%s338 + $0x90] sm:$0xff]
        %v2399 = vld [vmem:[%s338 + $0x98] sm:$0xff]
        %v2400 = vld [vmem:[%s338 + $0xa0] sm:$0xff]
        %v2401 = vld [vmem:[%s338 + $0xa8] sm:$0xff]
        %v2402 = vld [vmem:[%s338 + $0xb0] sm:$0xff]
        %v2403 = vld [vmem:[%s338 + $0xb8] sm:$0xff]
        %v2404 = vld [vmem:[%s338 + $0xc0] sm:$0xff]
        %v2405 = vld [vmem:[%s338 + $0xc8] sm:$0xff]
        %v2406 = vld [vmem:[%s338 + $0xd0] sm:$0xff]
        %v2407 = vld [vmem:[%s338 + $0xd8] sm:$0xff]
        %v2408 = vld [vmem:[%s338 + $0xe0] sm:$0xff]
        %v2409 = vld [vmem:[%s338 + $0xe8] sm:$0xff]
        %v2410 = vld [vmem:[%s338 + $0xf0] sm:$0xff]
        %v2411 = vld [vmem:[%s338 + $0xf8] sm:$0xff]
        %2412 = vadd.xlane.f32.xlu0 %v2094
        %v2413 = vpop.xlane.xlu0 %2412
        %2414 = vadd.xlane.f32.xlu0 %v2097
        %v2415 = vpop.xlane.xlu0 %2414
        %2416 = vadd.xlane.f32.xlu0 %v2102
        %v2417 = vpop.xlane.xlu0 %2416
        %2418 = vadd.xlane.f32.xlu0 %v2105
        %v2419 = vpop.xlane.xlu0 %2418
        %2420 = vadd.xlane.f32.xlu0 %v2110
        %v2421 = vpop.xlane.xlu0 %2420
        %2422 = vadd.xlane.f32.xlu0 %v2113
        %v2423 = vpop.xlane.xlu0 %2422
        %2424 = vadd.xlane.f32.xlu0 %v2118
        %v2425 = vpop.xlane.xlu0 %2424
        %2426 = vadd.xlane.f32.xlu0 %v2121
        %v2427 = vpop.xlane.xlu0 %2426
        %2428 = vadd.xlane.f32.xlu0 %v2126
        %v2429 = vpop.xlane.xlu0 %2428
        %2430 = vadd.xlane.f32.xlu0 %v2129
        %v2431 = vpop.xlane.xlu0 %2430
        %2432 = vadd.xlane.f32.xlu0 %v2134
        %v2433 = vpop.xlane.xlu0 %2432
        %2434 = vadd.xlane.f32.xlu0 %v2137
        %v2435 = vpop.xlane.xlu0 %2434
        %2436 = vadd.xlane.f32.xlu0 %v2142
        %v2437 = vpop.xlane.xlu0 %2436
        %2438 = vadd.xlane.f32.xlu0 %v2145
        %v2439 = vpop.xlane.xlu0 %2438
        %2440 = vadd.xlane.f32.xlu0 %v2150
        %v2441 = vpop.xlane.xlu0 %2440
        %2442 = vadd.xlane.f32.xlu0 %v2153
        %v2443 = vpop.xlane.xlu0 %2442
        %2444 = vadd.xlane.f32.xlu0 %v2158
        %v2445 = vpop.xlane.xlu0 %2444
        %2446 = vadd.xlane.f32.xlu0 %v2161
        %v2447 = vpop.xlane.xlu0 %2446
        %2448 = vadd.xlane.f32.xlu0 %v2166
        %v2449 = vpop.xlane.xlu0 %2448
        %2450 = vadd.xlane.f32.xlu0 %v2169
        %v2451 = vpop.xlane.xlu0 %2450
        %2452 = vadd.xlane.f32.xlu0 %v2174
        %v2453 = vpop.xlane.xlu0 %2452
        %2454 = vadd.xlane.f32.xlu0 %v2177
        %v2455 = vpop.xlane.xlu0 %2454
        %2456 = vadd.xlane.f32.xlu0 %v2182
        %v2457 = vpop.xlane.xlu0 %2456
        %2458 = vadd.xlane.f32.xlu0 %v2185
        %v2459 = vpop.xlane.xlu0 %2458
        %2460 = vadd.xlane.f32.xlu0 %v2190
        %v2461 = vpop.xlane.xlu0 %2460
        %2462 = vadd.xlane.f32.xlu0 %v2193
        %v2463 = vpop.xlane.xlu0 %2462
        %2464 = vadd.xlane.f32.xlu0 %v2198
        %v2465 = vpop.xlane.xlu0 %2464
        %2466 = vadd.xlane.f32.xlu0 %v2201
        %v2467 = vpop.xlane.xlu0 %2466
        %2468 = vadd.xlane.f32.xlu0 %v2206
        %v2469 = vpop.xlane.xlu0 %2468
        %2470 = vadd.xlane.f32.xlu0 %v2209
        %v2471 = vpop.xlane.xlu0 %2470
        %2472 = vadd.xlane.f32.xlu0 %v2214
        %v2473 = vpop.xlane.xlu0 %2472
        %2474 = vadd.xlane.f32.xlu0 %v2217
        %v2475 = vpop.xlane.xlu0 %2474
        %v2476 = vadd.f32 %v2380, %v2413
        %v2477 = vadd.f32 %v2381, %v2415
        %v2478 = vadd.f32 %v2382, %v2417
        %v2479 = vadd.f32 %v2383, %v2419
        %v2480 = vadd.f32 %v2384, %v2421
        %v2481 = vadd.f32 %v2385, %v2423
        %v2482 = vadd.f32 %v2386, %v2425
        %v2483 = vadd.f32 %v2387, %v2427
        %v2484 = vadd.f32 %v2388, %v2429
        %v2485 = vadd.f32 %v2389, %v2431
        %v2486 = vadd.f32 %v2390, %v2433
        %v2487 = vadd.f32 %v2391, %v2435
        %v2488 = vadd.f32 %v2392, %v2437
        %v2489 = vadd.f32 %v2393, %v2439
        %v2490 = vadd.f32 %v2394, %v2441
        %v2491 = vadd.f32 %v2395, %v2443
        %v2492 = vadd.f32 %v2396, %v2445
        %v2493 = vadd.f32 %v2397, %v2447
        %v2494 = vadd.f32 %v2398, %v2449
        %v2495 = vadd.f32 %v2399, %v2451
        %v2496 = vadd.f32 %v2400, %v2453
        %v2497 = vadd.f32 %v2401, %v2455
        %v2498 = vadd.f32 %v2402, %v2457
        %v2499 = vadd.f32 %v2403, %v2459
        %v2500 = vadd.f32 %v2404, %v2461
        %v2501 = vadd.f32 %v2405, %v2463
        %v2502 = vadd.f32 %v2406, %v2465
        %v2503 = vadd.f32 %v2407, %v2467
        %v2504 = vadd.f32 %v2408, %v2469
        %v2505 = vadd.f32 %v2409, %v2471
        %v2506 = vadd.f32 %v2410, %v2473
        %v2507 = vadd.f32 %v2411, %v2475
        %vm2508 = vcmask 7168
        %2509 = vst.msk [vmem:[%s338] sm:$0xff] %vm2508, %v2476
        %2510 = vst.msk [vmem:[%s338 + $0x8] sm:$0xff] %vm2508, %v2477
        %2511 = vst.msk [vmem:[%s338 + $0x10] sm:$0xff] %vm2508, %v2478
        %2512 = vst.msk [vmem:[%s338 + $0x18] sm:$0xff] %vm2508, %v2479
        %2513 = vst.msk [vmem:[%s338 + $0x20] sm:$0xff] %vm2508, %v2480
        %2514 = vst.msk [vmem:[%s338 + $0x28] sm:$0xff] %vm2508, %v2481
        %2515 = vst.msk [vmem:[%s338 + $0x30] sm:$0xff] %vm2508, %v2482
        %2516 = vst.msk [vmem:[%s338 + $0x38] sm:$0xff] %vm2508, %v2483
        %2517 = vst.msk [vmem:[%s338 + $0x40] sm:$0xff] %vm2508, %v2484
        %2518 = vst.msk [vmem:[%s338 + $0x48] sm:$0xff] %vm2508, %v2485
        %2519 = vst.msk [vmem:[%s338 + $0x50] sm:$0xff] %vm2508, %v2486
        %2520 = vst.msk [vmem:[%s338 + $0x58] sm:$0xff] %vm2508, %v2487
        %2521 = vst.msk [vmem:[%s338 + $0x60] sm:$0xff] %vm2508, %v2488
        %2522 = vst.msk [vmem:[%s338 + $0x68] sm:$0xff] %vm2508, %v2489
        %2523 = vst.msk [vmem:[%s338 + $0x70] sm:$0xff] %vm2508, %v2490
        %2524 = vst.msk [vmem:[%s338 + $0x78] sm:$0xff] %vm2508, %v2491
        %2525 = vst.msk [vmem:[%s338 + $0x80] sm:$0xff] %vm2508, %v2492
        %2526 = vst.msk [vmem:[%s338 + $0x88] sm:$0xff] %vm2508, %v2493
        %2527 = vst.msk [vmem:[%s338 + $0x90] sm:$0xff] %vm2508, %v2494
        %2528 = vst.msk [vmem:[%s338 + $0x98] sm:$0xff] %vm2508, %v2495
        %2529 = vst.msk [vmem:[%s338 + $0xa0] sm:$0xff] %vm2508, %v2496
        %2530 = vst.msk [vmem:[%s338 + $0xa8] sm:$0xff] %vm2508, %v2497
        %2531 = vst.msk [vmem:[%s338 + $0xb0] sm:$0xff] %vm2508, %v2498
        %2532 = vst.msk [vmem:[%s338 + $0xb8] sm:$0xff] %vm2508, %v2499
        %2533 = vst.msk [vmem:[%s338 + $0xc0] sm:$0xff] %vm2508, %v2500
        %2534 = vst.msk [vmem:[%s338 + $0xc8] sm:$0xff] %vm2508, %v2501
        %2535 = vst.msk [vmem:[%s338 + $0xd0] sm:$0xff] %vm2508, %v2502
        %2536 = vst.msk [vmem:[%s338 + $0xd8] sm:$0xff] %vm2508, %v2503
        %2537 = vst.msk [vmem:[%s338 + $0xe0] sm:$0xff] %vm2508, %v2504
        %2538 = vst.msk [vmem:[%s338 + $0xe8] sm:$0xff] %vm2508, %v2505
        %2539 = vst.msk [vmem:[%s338 + $0xf0] sm:$0xff] %vm2508, %v2506
        %2540 = vst.msk [vmem:[%s338 + $0xf8] sm:$0xff] %vm2508, %v2507
        %v2541 = vld [vmem:[%s344] sm:$0xff]
        %v2542 = vld [vmem:[%s344 + $0x8] sm:$0xff]
        %v2543 = vld [vmem:[%s344 + $0x10] sm:$0xff]
        %v2544 = vld [vmem:[%s344 + $0x18] sm:$0xff]
        %v2545 = vld [vmem:[%s344 + $0x20] sm:$0xff]
        %v2546 = vld [vmem:[%s344 + $0x28] sm:$0xff]
        %v2547 = vld [vmem:[%s344 + $0x30] sm:$0xff]
        %v2548 = vld [vmem:[%s344 + $0x38] sm:$0xff]
        %v2549 = vld [vmem:[%s344 + $0x40] sm:$0xff]
        %v2550 = vld [vmem:[%s344 + $0x48] sm:$0xff]
        %v2551 = vld [vmem:[%s344 + $0x50] sm:$0xff]
        %v2552 = vld [vmem:[%s344 + $0x58] sm:$0xff]
        %v2553 = vld [vmem:[%s344 + $0x60] sm:$0xff]
        %v2554 = vld [vmem:[%s344 + $0x68] sm:$0xff]
        %v2555 = vld [vmem:[%s344 + $0x70] sm:$0xff]
        %v2556 = vld [vmem:[%s344 + $0x78] sm:$0xff]
        %v2557 = vld [vmem:[%s344 + $0x80] sm:$0xff]
        %v2558 = vld [vmem:[%s344 + $0x88] sm:$0xff]
        %v2559 = vld [vmem:[%s344 + $0x90] sm:$0xff]
        %v2560 = vld [vmem:[%s344 + $0x98] sm:$0xff]
        %v2561 = vld [vmem:[%s344 + $0xa0] sm:$0xff]
        %v2562 = vld [vmem:[%s344 + $0xa8] sm:$0xff]
        %v2563 = vld [vmem:[%s344 + $0xb0] sm:$0xff]
        %v2564 = vld [vmem:[%s344 + $0xb8] sm:$0xff]
        %v2565 = vld [vmem:[%s344 + $0xc0] sm:$0xff]
        %v2566 = vld [vmem:[%s344 + $0xc8] sm:$0xff]
        %v2567 = vld [vmem:[%s344 + $0xd0] sm:$0xff]
        %v2568 = vld [vmem:[%s344 + $0xd8] sm:$0xff]
        %v2569 = vld [vmem:[%s344 + $0xe0] sm:$0xff]
        %v2570 = vld [vmem:[%s344 + $0xe8] sm:$0xff]
        %v2571 = vld [vmem:[%s344 + $0xf0] sm:$0xff]
        %v2572 = vld [vmem:[%s344 + $0xf8] sm:$0xff]
        %v2573 = vmul.f32 %v2094, %v2094
        %v2574 = vmul.f32 %v2097, %v2097
        %v2575 = vmul.f32 %v2102, %v2102
        %v2576 = vmul.f32 %v2105, %v2105
        %v2577 = vmul.f32 %v2110, %v2110
        %v2578 = vmul.f32 %v2113, %v2113
        %v2579 = vmul.f32 %v2118, %v2118
        %v2580 = vmul.f32 %v2121, %v2121
        %v2581 = vmul.f32 %v2126, %v2126
        %v2582 = vmul.f32 %v2129, %v2129
        %v2583 = vmul.f32 %v2134, %v2134
        %v2584 = vmul.f32 %v2137, %v2137
        %v2585 = vmul.f32 %v2142, %v2142
        %v2586 = vmul.f32 %v2145, %v2145
        %v2587 = vmul.f32 %v2150, %v2150
        %v2588 = vmul.f32 %v2153, %v2153
        %v2589 = vmul.f32 %v2158, %v2158
        %v2590 = vmul.f32 %v2161, %v2161
        %v2591 = vmul.f32 %v2166, %v2166
        %v2592 = vmul.f32 %v2169, %v2169
        %v2593 = vmul.f32 %v2174, %v2174
        %v2594 = vmul.f32 %v2177, %v2177
        %v2595 = vmul.f32 %v2182, %v2182
        %v2596 = vmul.f32 %v2185, %v2185
        %v2597 = vmul.f32 %v2190, %v2190
        %v2598 = vmul.f32 %v2193, %v2193
        %v2599 = vmul.f32 %v2198, %v2198
        %v2600 = vmul.f32 %v2201, %v2201
        %v2601 = vmul.f32 %v2206, %v2206
        %v2602 = vmul.f32 %v2209, %v2209
        %v2603 = vmul.f32 %v2214, %v2214
        %v2604 = vmul.f32 %v2217, %v2217
        %2605 = vadd.xlane.f32.xlu0 %v2573
        %v2606 = vpop.xlane.xlu0 %2605
        %2607 = vadd.xlane.f32.xlu0 %v2574
        %v2608 = vpop.xlane.xlu0 %2607
        %2609 = vadd.xlane.f32.xlu0 %v2575
        %v2610 = vpop.xlane.xlu0 %2609
        %2611 = vadd.xlane.f32.xlu0 %v2576
        %v2612 = vpop.xlane.xlu0 %2611
        %2613 = vadd.xlane.f32.xlu0 %v2577
        %v2614 = vpop.xlane.xlu0 %2613
        %2615 = vadd.xlane.f32.xlu0 %v2578
        %v2616 = vpop.xlane.xlu0 %2615
        %2617 = vadd.xlane.f32.xlu0 %v2579
        %v2618 = vpop.xlane.xlu0 %2617
        %2619 = vadd.xlane.f32.xlu0 %v2580
        %v2620 = vpop.xlane.xlu0 %2619
        %2621 = vadd.xlane.f32.xlu0 %v2581
        %v2622 = vpop.xlane.xlu0 %2621
        %2623 = vadd.xlane.f32.xlu0 %v2582
        %v2624 = vpop.xlane.xlu0 %2623
        %2625 = vadd.xlane.f32.xlu0 %v2583
        %v2626 = vpop.xlane.xlu0 %2625
        %2627 = vadd.xlane.f32.xlu0 %v2584
        %v2628 = vpop.xlane.xlu0 %2627
        %2629 = vadd.xlane.f32.xlu0 %v2585
        %v2630 = vpop.xlane.xlu0 %2629
        %2631 = vadd.xlane.f32.xlu0 %v2586
        %v2632 = vpop.xlane.xlu0 %2631
        %2633 = vadd.xlane.f32.xlu0 %v2587
        %v2634 = vpop.xlane.xlu0 %2633
        %2635 = vadd.xlane.f32.xlu0 %v2588
        %v2636 = vpop.xlane.xlu0 %2635
        %2637 = vadd.xlane.f32.xlu0 %v2589
        %v2638 = vpop.xlane.xlu0 %2637
        %2639 = vadd.xlane.f32.xlu0 %v2590
        %v2640 = vpop.xlane.xlu0 %2639
        %2641 = vadd.xlane.f32.xlu0 %v2591
        %v2642 = vpop.xlane.xlu0 %2641
        %2643 = vadd.xlane.f32.xlu0 %v2592
        %v2644 = vpop.xlane.xlu0 %2643
        %2645 = vadd.xlane.f32.xlu0 %v2593
        %v2646 = vpop.xlane.xlu0 %2645
        %2647 = vadd.xlane.f32.xlu0 %v2594
        %v2648 = vpop.xlane.xlu0 %2647
        %2649 = vadd.xlane.f32.xlu0 %v2595
        %v2650 = vpop.xlane.xlu0 %2649
        %2651 = vadd.xlane.f32.xlu0 %v2596
        %v2652 = vpop.xlane.xlu0 %2651
        %2653 = vadd.xlane.f32.xlu0 %v2597
        %v2654 = vpop.xlane.xlu0 %2653
        %2655 = vadd.xlane.f32.xlu0 %v2598
        %v2656 = vpop.xlane.xlu0 %2655
        %2657 = vadd.xlane.f32.xlu0 %v2599
        %v2658 = vpop.xlane.xlu0 %2657
        %2659 = vadd.xlane.f32.xlu0 %v2600
        %v2660 = vpop.xlane.xlu0 %2659
        %2661 = vadd.xlane.f32.xlu0 %v2601
        %v2662 = vpop.xlane.xlu0 %2661
        %2663 = vadd.xlane.f32.xlu0 %v2602
        %v2664 = vpop.xlane.xlu0 %2663
        %2665 = vadd.xlane.f32.xlu0 %v2603
        %v2666 = vpop.xlane.xlu0 %2665
        %2667 = vadd.xlane.f32.xlu0 %v2604
        %v2668 = vpop.xlane.xlu0 %2667
        %v2669 = vadd.f32 %v2541, %v2606
        %v2670 = vadd.f32 %v2542, %v2608
        %v2671 = vadd.f32 %v2543, %v2610
        %v2672 = vadd.f32 %v2544, %v2612
        %v2673 = vadd.f32 %v2545, %v2614
        %v2674 = vadd.f32 %v2546, %v2616
        %v2675 = vadd.f32 %v2547, %v2618
        %v2676 = vadd.f32 %v2548, %v2620
        %v2677 = vadd.f32 %v2549, %v2622
        %v2678 = vadd.f32 %v2550, %v2624
        %v2679 = vadd.f32 %v2551, %v2626
        %v2680 = vadd.f32 %v2552, %v2628
        %v2681 = vadd.f32 %v2553, %v2630
        %v2682 = vadd.f32 %v2554, %v2632
        %v2683 = vadd.f32 %v2555, %v2634
        %v2684 = vadd.f32 %v2556, %v2636
        %v2685 = vadd.f32 %v2557, %v2638
        %v2686 = vadd.f32 %v2558, %v2640
        %v2687 = vadd.f32 %v2559, %v2642
        %v2688 = vadd.f32 %v2560, %v2644
        %v2689 = vadd.f32 %v2561, %v2646
        %v2690 = vadd.f32 %v2562, %v2648
        %v2691 = vadd.f32 %v2563, %v2650
        %v2692 = vadd.f32 %v2564, %v2652
        %v2693 = vadd.f32 %v2565, %v2654
        %v2694 = vadd.f32 %v2566, %v2656
        %v2695 = vadd.f32 %v2567, %v2658
        %v2696 = vadd.f32 %v2568, %v2660
        %v2697 = vadd.f32 %v2569, %v2662
        %v2698 = vadd.f32 %v2570, %v2664
        %v2699 = vadd.f32 %v2571, %v2666
        %v2700 = vadd.f32 %v2572, %v2668
        %2701 = vst.msk [vmem:[%s344] sm:$0xff] %vm2508, %v2669
        %2702 = vst.msk [vmem:[%s344 + $0x8] sm:$0xff] %vm2508, %v2670
        %2703 = vst.msk [vmem:[%s344 + $0x10] sm:$0xff] %vm2508, %v2671
        %2704 = vst.msk [vmem:[%s344 + $0x18] sm:$0xff] %vm2508, %v2672
        %2705 = vst.msk [vmem:[%s344 + $0x20] sm:$0xff] %vm2508, %v2673
        %2706 = vst.msk [vmem:[%s344 + $0x28] sm:$0xff] %vm2508, %v2674
        %2707 = vst.msk [vmem:[%s344 + $0x30] sm:$0xff] %vm2508, %v2675
        %2708 = vst.msk [vmem:[%s344 + $0x38] sm:$0xff] %vm2508, %v2676
        %2709 = vst.msk [vmem:[%s344 + $0x40] sm:$0xff] %vm2508, %v2677
        %2710 = vst.msk [vmem:[%s344 + $0x48] sm:$0xff] %vm2508, %v2678
        %2711 = vst.msk [vmem:[%s344 + $0x50] sm:$0xff] %vm2508, %v2679
        %2712 = vst.msk [vmem:[%s344 + $0x58] sm:$0xff] %vm2508, %v2680
        %2713 = vst.msk [vmem:[%s344 + $0x60] sm:$0xff] %vm2508, %v2681
        %2714 = vst.msk [vmem:[%s344 + $0x68] sm:$0xff] %vm2508, %v2682
        %2715 = vst.msk [vmem:[%s344 + $0x70] sm:$0xff] %vm2508, %v2683
        %2716 = vst.msk [vmem:[%s344 + $0x78] sm:$0xff] %vm2508, %v2684
        %2717 = vst.msk [vmem:[%s344 + $0x80] sm:$0xff] %vm2508, %v2685
        %2718 = vst.msk [vmem:[%s344 + $0x88] sm:$0xff] %vm2508, %v2686
        %2719 = vst.msk [vmem:[%s344 + $0x90] sm:$0xff] %vm2508, %v2687
        %2720 = vst.msk [vmem:[%s344 + $0x98] sm:$0xff] %vm2508, %v2688
        %2721 = vst.msk [vmem:[%s344 + $0xa0] sm:$0xff] %vm2508, %v2689
        %2722 = vst.msk [vmem:[%s344 + $0xa8] sm:$0xff] %vm2508, %v2690
        %2723 = vst.msk [vmem:[%s344 + $0xb0] sm:$0xff] %vm2508, %v2691
        %2724 = vst.msk [vmem:[%s344 + $0xb8] sm:$0xff] %vm2508, %v2692
        %2725 = vst.msk [vmem:[%s344 + $0xc0] sm:$0xff] %vm2508, %v2693
        %2726 = vst.msk [vmem:[%s344 + $0xc8] sm:$0xff] %vm2508, %v2694
        %2727 = vst.msk [vmem:[%s344 + $0xd0] sm:$0xff] %vm2508, %v2695
        %2728 = vst.msk [vmem:[%s344 + $0xd8] sm:$0xff] %vm2508, %v2696
        %2729 = vst.msk [vmem:[%s344 + $0xe0] sm:$0xff] %vm2508, %v2697
        %2730 = vst.msk [vmem:[%s344 + $0xe8] sm:$0xff] %vm2508, %v2698
        %2731 = vst.msk [vmem:[%s344 + $0xf0] sm:$0xff] %vm2508, %v2699
        %2732 = vst.msk [vmem:[%s344 + $0xf8] sm:$0xff] %vm2508, %v2700
        %s2733 = sand.u32 %s135, 1
        %s2734 = sand.u32 %s135, 1
        %s2735 = smul.addr %s2734, 128
        %s2736 = scalar_lea.vmem [#allocation3], %s2735
        %s2737 = smul.u32 32, %s22
        %p2738 = scmp.lt.s32.totalorder %s2737, 63
        %s2739 = scalar_select %p2738, %s2737, 63
        %s2740 = smul.addr %s2739, 8
        %s2741 = scalar_lea.vmem %s5, %s2740
        %s2742 = smul.u32 32, %s22
        %p2743 = scmp.lt.s32.totalorder %s2742, 63
        %s2744 = scalar_select %p2743, %s2742, 63
        %s2745 = smul.addr %s2744, 8
        %s2746 = scalar_lea.vmem %s6, %s2745
        // Predicated region
        $region82: #{sdf_decoder_forward.2} parent=72 // pred_check
          %p2747 = pneg %p145
        $region83: #{sdf_decoder_forward.2} parent=72 // pred_check_branch
          %2749 = sbr.rel (%p2747) target = $region85
        $region84: #{sdf_decoder_forward.2} parent=72 // pred_region
          %s2750 = smul.u32 %s22, 2
          %s2751 = sadd.s32 %s2750, %s23
          %s2752 = smul.addr %s2751, 4
          %s2753 = scalar_lea.vmem %s4, %s2752
          // Predicated region
          $region86: #{sdf_decoder_forward.2} parent=84 // pred_check
            _
          $region87: #{sdf_decoder_forward.2} parent=84 // pred_check_branch
            %2755 = sbr.rel (0) target = $region89
          $region88: #{sdf_decoder_forward.2} parent=84 // pred_region
            // Predicated region
            $region90: #{sdf_decoder_forward.2} parent=88 // pred_check
              _
            $region91: #{sdf_decoder_forward.2} parent=88 // pred_check_branch
              %2757 = sbr.rel target = $region93
            $region92: #{sdf_decoder_forward.2} parent=88 // pred_region
              // Predicated region
              $region105: #{sdf_decoder_forward.2} parent=92 // pred_check
                _
              $region106: #{sdf_decoder_forward.2} parent=92 // pred_check_branch
                %2835 = sbr.rel (0) target = $region108
              $region107: #{sdf_decoder_forward.2} parent=92 // pred_region
                loop: start=0, step=1, limit=1
                $region109: #{sdf_decoder_forward.2} parent=107 // loop_pre_header
                  _
                $region110: #{sdf_decoder_forward.2} parent=107 // loop_header
                  %s2837 = sphi 0, %s2841
                  %p2838 = scmp.ge.s32.totalorder %s2837, 1
                  %s2842 = sphi %s2736, %s2736
                  %s2843 = sphi %s2753, %s2753
                $region111: #{sdf_decoder_forward.2} parent=107 // loop_header_branch
                  %2840 = sbr.rel (%p2838) target = $region115
                $region112: #{sdf_decoder_forward.2} parent=107 // loop_body
                  _
                $region113: #{sdf_decoder_forward.2} parent=107 // loop_footer
                  %s2841 = sadd.s32 1, %s2837
                $region114: #{sdf_decoder_forward.2} parent=107 // loop_footer_branch
                  %2836 = sbr.rel target = $region110
                $region115: #{sdf_decoder_forward.2} parent=107 // loop_exit
                  _
                %s2845 = ssub.s32 16, 1
                loop: start=0, step=1, limit=1
                $region116: #{sdf_decoder_forward.2} parent=107 // loop_pre_header
                  _
                $region117: #{sdf_decoder_forward.2} parent=107 // loop_header
                  %s2847 = sphi 0, %s2851
                  %p2848 = scmp.ge.s32.totalorder %s2847, 1
                  %s2852 = sphi %s2736, %s2736
                  %s2853 = sphi %s2753, %s2753
                $region118: #{sdf_decoder_forward.2} parent=107 // loop_header_branch
                  %2850 = sbr.rel (%p2848) target = $region122
                $region119: #{sdf_decoder_forward.2} parent=107 // loop_body
                  %v2854 = vld [vmem:[%s2852] sm:%s2845]
                  %2855 = vst [vmem:[%s2853] sm:%s2845] %v2854
                  %v2856 = vld [vmem:[%s2852 + $0x4] sm:%s2845]
                  %2857 = vst [vmem:[%s2853 + $0x10] sm:%s2845] %v2856
                  %v2858 = vld [vmem:[%s2852 + $0x8] sm:%s2845]
                  %2859 = vst [vmem:[%s2853 + $0x20] sm:%s2845] %v2858
                  %v2860 = vld [vmem:[%s2852 + $0xc] sm:%s2845]
                  %2861 = vst [vmem:[%s2853 + $0x30] sm:%s2845] %v2860
                  %v2862 = vld [vmem:[%s2852 + $0x10] sm:%s2845]
                  %2863 = vst [vmem:[%s2853 + $0x40] sm:%s2845] %v2862
                  %v2864 = vld [vmem:[%s2852 + $0x14] sm:%s2845]
                  %2865 = vst [vmem:[%s2853 + $0x50] sm:%s2845] %v2864
                  %v2866 = vld [vmem:[%s2852 + $0x18] sm:%s2845]
                  %2867 = vst [vmem:[%s2853 + $0x60] sm:%s2845] %v2866
                  %v2868 = vld [vmem:[%s2852 + $0x1c] sm:%s2845]
                  %2869 = vst [vmem:[%s2853 + $0x70] sm:%s2845] %v2868
                  %v2870 = vld [vmem:[%s2852 + $0x20] sm:%s2845]
                  %2871 = vst [vmem:[%s2853 + $0x80] sm:%s2845] %v2870
                  %v2872 = vld [vmem:[%s2852 + $0x24] sm:%s2845]
                  %2873 = vst [vmem:[%s2853 + $0x90] sm:%s2845] %v2872
                  %v2874 = vld [vmem:[%s2852 + $0x28] sm:%s2845]
                  %2875 = vst [vmem:[%s2853 + $0xa0] sm:%s2845] %v2874
                  %v2876 = vld [vmem:[%s2852 + $0x2c] sm:%s2845]
                  %2877 = vst [vmem:[%s2853 + $0xb0] sm:%s2845] %v2876
                  %v2878 = vld [vmem:[%s2852 + $0x30] sm:%s2845]
                  %2879 = vst [vmem:[%s2853 + $0xc0] sm:%s2845] %v2878
                  %v2880 = vld [vmem:[%s2852 + $0x34] sm:%s2845]
                  %2881 = vst [vmem:[%s2853 + $0xd0] sm:%s2845] %v2880
                  %v2882 = vld [vmem:[%s2852 + $0x38] sm:%s2845]
                  %2883 = vst [vmem:[%s2853 + $0xe0] sm:%s2845] %v2882
                  %v2884 = vld [vmem:[%s2852 + $0x3c] sm:%s2845]
                  %2885 = vst [vmem:[%s2853 + $0xf0] sm:%s2845] %v2884
                  %v2886 = vld [vmem:[%s2852 + $0x40] sm:%s2845]
                  %2887 = vst [vmem:[%s2853 + $0x100] sm:%s2845] %v2886
                  %v2888 = vld [vmem:[%s2852 + $0x44] sm:%s2845]
                  %2889 = vst [vmem:[%s2853 + $0x110] sm:%s2845] %v2888
                  %v2890 = vld [vmem:[%s2852 + $0x48] sm:%s2845]
                  %2891 = vst [vmem:[%s2853 + $0x120] sm:%s2845] %v2890
                  %v2892 = vld [vmem:[%s2852 + $0x4c] sm:%s2845]
                  %2893 = vst [vmem:[%s2853 + $0x130] sm:%s2845] %v2892
                  %v2894 = vld [vmem:[%s2852 + $0x50] sm:%s2845]
                  %2895 = vst [vmem:[%s2853 + $0x140] sm:%s2845] %v2894
                  %v2896 = vld [vmem:[%s2852 + $0x54] sm:%s2845]
                  %2897 = vst [vmem:[%s2853 + $0x150] sm:%s2845] %v2896
                  %v2898 = vld [vmem:[%s2852 + $0x58] sm:%s2845]
                  %2899 = vst [vmem:[%s2853 + $0x160] sm:%s2845] %v2898
                  %v2900 = vld [vmem:[%s2852 + $0x5c] sm:%s2845]
                  %2901 = vst [vmem:[%s2853 + $0x170] sm:%s2845] %v2900
                  %v2902 = vld [vmem:[%s2852 + $0x60] sm:%s2845]
                  %2903 = vst [vmem:[%s2853 + $0x180] sm:%s2845] %v2902
                  %v2904 = vld [vmem:[%s2852 + $0x64] sm:%s2845]
                  %2905 = vst [vmem:[%s2853 + $0x190] sm:%s2845] %v2904
                  %v2906 = vld [vmem:[%s2852 + $0x68] sm:%s2845]
                  %2907 = vst [vmem:[%s2853 + $0x1a0] sm:%s2845] %v2906
                  %v2908 = vld [vmem:[%s2852 + $0x6c] sm:%s2845]
                  %2909 = vst [vmem:[%s2853 + $0x1b0] sm:%s2845] %v2908
                  %v2910 = vld [vmem:[%s2852 + $0x70] sm:%s2845]
                  %2911 = vst [vmem:[%s2853 + $0x1c0] sm:%s2845] %v2910
                  %v2912 = vld [vmem:[%s2852 + $0x74] sm:%s2845]
                  %2913 = vst [vmem:[%s2853 + $0x1d0] sm:%s2845] %v2912
                  %v2914 = vld [vmem:[%s2852 + $0x78] sm:%s2845]
                  %2915 = vst [vmem:[%s2853 + $0x1e0] sm:%s2845] %v2914
                  %v2916 = vld [vmem:[%s2852 + $0x7c] sm:%s2845]
                  %2917 = vst [vmem:[%s2853 + $0x1f0] sm:%s2845] %v2916
                $region120: #{sdf_decoder_forward.2} parent=107 // loop_footer
                  %s2851 = sadd.s32 1, %s2847
                $region121: #{sdf_decoder_forward.2} parent=107 // loop_footer_branch
                  %2846 = sbr.rel target = $region117
                $region122: #{sdf_decoder_forward.2} parent=107 // loop_exit
                  _
              $region108: #{sdf_decoder_forward.2} parent=92 // pred_fallthru
                _
            $region93: #{sdf_decoder_forward.2} parent=88 // pred_fallthru
              _
            // Predicated region
            $region94: #{sdf_decoder_forward.2} parent=88 // pred_check
              _
            $region95: #{sdf_decoder_forward.2} parent=88 // pred_check_branch
              %2759 = sbr.rel (0) target = $region97
            $region96: #{sdf_decoder_forward.2} parent=88 // pred_region
              %s2761 = ssub.s32 16, 1
              loop: start=0, step=1, limit=1
              $region98: #{sdf_decoder_forward.2} parent=96 // loop_pre_header
                _
              $region99: #{sdf_decoder_forward.2} parent=96 // loop_header
                %s2763 = sphi 0, %s2767
                %p2764 = scmp.ge.s32.totalorder %s2763, 1
                %s2768 = sphi %s2736, %s2736
                %s2769 = sphi %s2753, %s2753
              $region100: #{sdf_decoder_forward.2} parent=96 // loop_header_branch
                %2766 = sbr.rel (%p2764) target = $region104
              $region101: #{sdf_decoder_forward.2} parent=96 // loop_body
                %v2770 = vld [vmem:[%s2768] sm:%s2761]
                %2771 = vst [vmem:[%s2769] sm:%s2761] %v2770
                %v2772 = vld [vmem:[%s2768 + $0x4] sm:%s2761]
                %2773 = vst [vmem:[%s2769 + $0x10] sm:%s2761] %v2772
                %v2774 = vld [vmem:[%s2768 + $0x8] sm:%s2761]
                %2775 = vst [vmem:[%s2769 + $0x20] sm:%s2761] %v2774
                %v2776 = vld [vmem:[%s2768 + $0xc] sm:%s2761]
                %2777 = vst [vmem:[%s2769 + $0x30] sm:%s2761] %v2776
                %v2778 = vld [vmem:[%s2768 + $0x10] sm:%s2761]
                %2779 = vst [vmem:[%s2769 + $0x40] sm:%s2761] %v2778
                %v2780 = vld [vmem:[%s2768 + $0x14] sm:%s2761]
                %2781 = vst [vmem:[%s2769 + $0x50] sm:%s2761] %v2780
                %v2782 = vld [vmem:[%s2768 + $0x18] sm:%s2761]
                %2783 = vst [vmem:[%s2769 + $0x60] sm:%s2761] %v2782
                %v2784 = vld [vmem:[%s2768 + $0x1c] sm:%s2761]
                %2785 = vst [vmem:[%s2769 + $0x70] sm:%s2761] %v2784
                %v2786 = vld [vmem:[%s2768 + $0x20] sm:%s2761]
                %2787 = vst [vmem:[%s2769 + $0x80] sm:%s2761] %v2786
                %v2788 = vld [vmem:[%s2768 + $0x24] sm:%s2761]
                %2789 = vst [vmem:[%s2769 + $0x90] sm:%s2761] %v2788
                %v2790 = vld [vmem:[%s2768 + $0x28] sm:%s2761]
                %2791 = vst [vmem:[%s2769 + $0xa0] sm:%s2761] %v2790
                %v2792 = vld [vmem:[%s2768 + $0x2c] sm:%s2761]
                %2793 = vst [vmem:[%s2769 + $0xb0] sm:%s2761] %v2792
                %v2794 = vld [vmem:[%s2768 + $0x30] sm:%s2761]
                %2795 = vst [vmem:[%s2769 + $0xc0] sm:%s2761] %v2794
                %v2796 = vld [vmem:[%s2768 + $0x34] sm:%s2761]
                %2797 = vst [vmem:[%s2769 + $0xd0] sm:%s2761] %v2796
                %v2798 = vld [vmem:[%s2768 + $0x38] sm:%s2761]
                %2799 = vst [vmem:[%s2769 + $0xe0] sm:%s2761] %v2798
                %v2800 = vld [vmem:[%s2768 + $0x3c] sm:%s2761]
                %2801 = vst [vmem:[%s2769 + $0xf0] sm:%s2761] %v2800
                %v2802 = vld [vmem:[%s2768 + $0x40] sm:%s2761]
                %2803 = vst [vmem:[%s2769 + $0x100] sm:%s2761] %v2802
                %v2804 = vld [vmem:[%s2768 + $0x44] sm:%s2761]
                %2805 = vst [vmem:[%s2769 + $0x110] sm:%s2761] %v2804
                %v2806 = vld [vmem:[%s2768 + $0x48] sm:%s2761]
                %2807 = vst [vmem:[%s2769 + $0x120] sm:%s2761] %v2806
                %v2808 = vld [vmem:[%s2768 + $0x4c] sm:%s2761]
                %2809 = vst [vmem:[%s2769 + $0x130] sm:%s2761] %v2808
                %v2810 = vld [vmem:[%s2768 + $0x50] sm:%s2761]
                %2811 = vst [vmem:[%s2769 + $0x140] sm:%s2761] %v2810
                %v2812 = vld [vmem:[%s2768 + $0x54] sm:%s2761]
                %2813 = vst [vmem:[%s2769 + $0x150] sm:%s2761] %v2812
                %v2814 = vld [vmem:[%s2768 + $0x58] sm:%s2761]
                %2815 = vst [vmem:[%s2769 + $0x160] sm:%s2761] %v2814
                %v2816 = vld [vmem:[%s2768 + $0x5c] sm:%s2761]
                %2817 = vst [vmem:[%s2769 + $0x170] sm:%s2761] %v2816
                %v2818 = vld [vmem:[%s2768 + $0x60] sm:%s2761]
                %2819 = vst [vmem:[%s2769 + $0x180] sm:%s2761] %v2818
                %v2820 = vld [vmem:[%s2768 + $0x64] sm:%s2761]
                %2821 = vst [vmem:[%s2769 + $0x190] sm:%s2761] %v2820
                %v2822 = vld [vmem:[%s2768 + $0x68] sm:%s2761]
                %2823 = vst [vmem:[%s2769 + $0x1a0] sm:%s2761] %v2822
                %v2824 = vld [vmem:[%s2768 + $0x6c] sm:%s2761]
                %2825 = vst [vmem:[%s2769 + $0x1b0] sm:%s2761] %v2824
                %v2826 = vld [vmem:[%s2768 + $0x70] sm:%s2761]
                %2827 = vst [vmem:[%s2769 + $0x1c0] sm:%s2761] %v2826
                %v2828 = vld [vmem:[%s2768 + $0x74] sm:%s2761]
                %2829 = vst [vmem:[%s2769 + $0x1d0] sm:%s2761] %v2828
                %v2830 = vld [vmem:[%s2768 + $0x78] sm:%s2761]
                %2831 = vst [vmem:[%s2769 + $0x1e0] sm:%s2761] %v2830
                %v2832 = vld [vmem:[%s2768 + $0x7c] sm:%s2761]
                %2833 = vst [vmem:[%s2769 + $0x1f0] sm:%s2761] %v2832
              $region102: #{sdf_decoder_forward.2} parent=96 // loop_footer
                %s2767 = sadd.s32 1, %s2763
              $region103: #{sdf_decoder_forward.2} parent=96 // loop_footer_branch
                %2762 = sbr.rel target = $region99
              $region104: #{sdf_decoder_forward.2} parent=96 // loop_exit
                _
            $region97: #{sdf_decoder_forward.2} parent=88 // pred_fallthru
              _
          $region89: #{sdf_decoder_forward.2} parent=84 // pred_fallthru
            _
          %2918 = vnop
        $region85: #{sdf_decoder_forward.2} parent=72 // pred_fallthru
          _
        // Predicated region
        $region123: #{sdf_decoder_forward.2} parent=72 // pred_check
          %p2919 = pneg %p171
        $region124: #{sdf_decoder_forward.2} parent=72 // pred_check_branch
          %2921 = sbr.rel (%p2919) target = $region126
        $region125: #{sdf_decoder_forward.2} parent=72 // pred_region
          %s2922 = smul.u32 32, %s22
        $region126: #{sdf_decoder_forward.2} parent=72 // pred_fallthru
          _
        // Predicated region
        $region127: #{sdf_decoder_forward.2} parent=72 // pred_check
          %p2923 = pneg %p197
        $region128: #{sdf_decoder_forward.2} parent=72 // pred_check_branch
          %2925 = sbr.rel (%p2923) target = $region130
        $region129: #{sdf_decoder_forward.2} parent=72 // pred_region
          %s2926 = smul.u32 32, %s22
        $region130: #{sdf_decoder_forward.2} parent=72 // pred_fallthru
          _
      $region73: #{sdf_decoder_forward.2} parent=5 // pred_fallthru
        _
      %p2927 = scmp.le.s32.totalorder 2, %s13
      // Predicated region
      $region131: #{sdf_decoder_forward.2} parent=5 // pred_check
        %p2928 = pneg %p2927
      $region132: #{sdf_decoder_forward.2} parent=5 // pred_check_branch
        %2930 = sbr.rel (%p2928) target = $region134
      $region133: #{sdf_decoder_forward.2} parent=5 // pred_region
        %s2931 = ssub.s32 %s13, 2
        // Predicated region
        $region135: #{sdf_decoder_forward.2} parent=133 // pred_check
          %p2932 = pneg %p151
        $region136: #{sdf_decoder_forward.2} parent=133 // pred_check_branch
          %2934 = sbr.rel (%p2932) target = $region138
        $region137: #{sdf_decoder_forward.2} parent=133 // pred_region
          %s2935 = sand.u32 %s136, 1
          %s2936 = sand.u32 %s136, 1
          %s2937 = smul.addr %s2936, 128
          %s2938 = scalar_lea.vmem [#allocation3], %s2937
        $region138: #{sdf_decoder_forward.2} parent=133 // pred_fallthru
          _
        // Predicated region
        $region139: #{sdf_decoder_forward.2} parent=133 // pred_check
          %p2939 = pneg %p177
        $region140: #{sdf_decoder_forward.2} parent=133 // pred_check_branch
          %2941 = sbr.rel (%p2939) target = $region142
        $region141: #{sdf_decoder_forward.2} parent=133 // pred_region
          %s2942 = smul.u32 32, %s24
          %p2943 = scmp.lt.s32.totalorder %s2942, 63
          %s2944 = scalar_select %p2943, %s2942, 63
          %s2945 = smul.addr %s2944, 8
          %s2946 = scalar_lea.vmem %s5, %s2945
        $region142: #{sdf_decoder_forward.2} parent=133 // pred_fallthru
          _
        // Predicated region
        $region143: #{sdf_decoder_forward.2} parent=133 // pred_check
          %p2947 = pneg %p203
        $region144: #{sdf_decoder_forward.2} parent=133 // pred_check_branch
          %2949 = sbr.rel (%p2947) target = $region146
        $region145: #{sdf_decoder_forward.2} parent=133 // pred_region
          %s2950 = smul.u32 32, %s24
          %p2951 = scmp.lt.s32.totalorder %s2950, 63
          %s2952 = scalar_select %p2951, %s2950, 63
          %s2953 = smul.addr %s2952, 8
          %s2954 = scalar_lea.vmem %s6, %s2953
        $region146: #{sdf_decoder_forward.2} parent=133 // pred_fallthru
          _
      $region134: #{sdf_decoder_forward.2} parent=5 // pred_fallthru
        _
    $region6: #{sdf_decoder_forward.2} parent=1 // loop_footer
      %s17 = sadd.s32 1, %s13
    $region7: #{sdf_decoder_forward.2} parent=1 // loop_footer_branch
      %12 = sbr.rel target = $region3
    $region8: #{sdf_decoder_forward.2} parent=1 // loop_exit
      _

</llo_original>
